<compile_context>
chip_gen: v7x
topology: tpu7x:2x2x1
jax: 0.10.0
libtpu: 0.0.40
codegen_flags: <defaults>
</compile_context>

<pallas_src>
import jax
import jax.numpy as jnp
from jax.experimental import pallas as pl
from jax.experimental.pallas import tpu as pltpu


def _patch_embed_kernel(x_ref, w_ref, b_ref, o_ref):
    # x_ref: (1, C, tile_t) f32    w_ref: (C, tile_e) bf16
    # b_ref: (1, tile_e)    f32    o_ref: (1, tile_t, tile_e) out_dtype
    x = x_ref[0].astype(w_ref.dtype)          # in-kernel f32 -> bf16 cast (VPU, hidden)
    # Contract over C (dim 0 of both): the MXU consumes the transposed LHS and
    # the result lands as (tile_t, tile_e) -- already in the final (T, E) layout.
    acc = jax.lax.dot_general(
        x, w_ref[...],
        dimension_numbers=(((0,), (0,)), ((), ())),
        preferred_element_type=jnp.float32,
    )
    o_ref[0] = (acc + b_ref[...]).astype(o_ref.dtype)


def _vmem_capacity_bytes():
    """Generation-aware VMEM capacity (falls back to the v7x per-TC minimum)."""
    try:
        info = pltpu.get_tpu_info()
        cap = getattr(info, "vmem_capacity_bytes", None)
        if cap:
            return int(cap)
    except Exception:
        pass
    return 64 << 20


def _choose_tiles(C, T, E, x_itemsize, w_itemsize, out_itemsize, vmem_budget,
                  tile_t_target, tile_e_target, max_weight_panel_bytes,
                  force_tile_t=None, force_tile_e=None):
    def working_set(tt, te):
        # Double-buffered (BlockSpec pipelining) VMEM footprint of one step.
        return 2 * (C * tt * x_itemsize          # x block (f32)
                    + C * te * w_itemsize        # weight panel (bf16)
                    + te * 4                     # bias block (f32)
                    + tt * te * out_itemsize)    # output block

    # E tile: keep the whole weight panel resident whenever it is small.
    if force_tile_e is not None:
        tile_e = force_tile_e
    elif E <= 128 or C * E * w_itemsize <= max_weight_panel_bytes:
        tile_e = E
    else:
        tile_e = max(128, (min(tile_e_target, E) // 128) * 128)

    # T tile: prefer the full sequence per step; otherwise the biggest
    # 128-multiple that fits, with cdiv edge blocks handled by Pallas.
    if force_tile_t is not None:
        tile_t = force_tile_t
    elif working_set(T, tile_e) <= vmem_budget:
        tile_t = T
    else:
        tt = max(128, (min(tile_t_target, T) // 128) * 128)
        while tt > 128 and working_set(tt, tile_e) > vmem_budget:
            tt -= 128
        tile_t = tt
    return tile_t, tile_e


def patch_embed(x_nct, weight_ec1, bias_e, *, out_dtype=None,
                compute_dtype=jnp.bfloat16,
                tile_t_target=1024, tile_e_target=1024,
                max_weight_panel_bytes=8 << 20,
                force_tile_t=None, force_tile_e=None):
    """Equivalent of PatchEmbed.forward (norm_layer=None -> Identity).

    x_nct:      (B, C, T) float32   -- PyTorch NCT input (NOT pre-transposed)
    weight_ec1: (E, C, 1) float32   -- nn.Conv1d(kernel_size=1) weight
    bias_e:     (E,)      float32   -- nn.Conv1d bias
    returns:    (B, T, E) out_dtype (default: x dtype, i.e. f32 like the module)
    """
    B, C, T = x_nct.shape
    E = weight_ec1.shape[0]
    out_dtype = x_nct.dtype if out_dtype is None else out_dtype

    # One-time parameter prep: (E, C, 1) -> (C, E) bf16 panel, bias as (1, E)
    # f32.  In a real model this is hoisted to parameter init (or constant-
    # folded under jit); it only touches C*E elements, never the activations.
    w_ce = jnp.transpose(weight_ec1[:, :, 0], (1, 0)).astype(compute_dtype)
    b_1e = bias_e.reshape(1, E).astype(jnp.float32)

    x_itemsize = jnp.dtype(x_nct.dtype).itemsize
    w_itemsize = jnp.dtype(compute_dtype).itemsize
    out_itemsize = jnp.dtype(out_dtype).itemsize

    vmem_cap = _vmem_capacity_bytes()
    # ~48 MB budget on v7x (64 MiB physical), ~96 MB on v5e/v6e (128 MiB).
    vmem_budget = min((vmem_cap * 3) // 4, 100 << 20)

    tile_t, tile_e = _choose_tiles(
        C, T, E, x_itemsize, w_itemsize, out_itemsize, vmem_budget,
        tile_t_target, tile_e_target, max_weight_panel_bytes,
        force_tile_t=force_tile_t, force_tile_e=force_tile_e)
    n_t = pl.cdiv(T, tile_t)
    n_e = pl.cdiv(E, tile_e)

    vmem_need = 2 * (C * tile_t * x_itemsize + C * tile_e * w_itemsize
                     + tile_e * 4 + tile_t * tile_e * out_itemsize)
    vmem_limit = int(min(max(vmem_need + (4 << 20), 32 << 20), vmem_budget))

    cost = pl.CostEstimate(
        flops=2 * B * T * C * E,
        transcendentals=0,
        bytes_accessed=(B * C * T * x_itemsize * n_e   # x re-read once per E tile
                        + C * E * w_itemsize + E * 4
                        + B * T * E * out_itemsize),
    )

    out = pl.pallas_call(
        _patch_embed_kernel,
        out_shape=jax.ShapeDtypeStruct((B, T, E), out_dtype),
        grid_spec=pltpu.PrefetchScalarGridSpec(
            num_scalar_prefetch=0,
            # E-tiles outermost (weight/bias block index constant across B and
            # T -> panel DMA'd only n_e times), B next (parallel, extent >= 2
            # for v7x megacore sharding), T-tiles innermost.
            grid=(n_e, B, n_t),
            in_specs=[
                pl.BlockSpec((1, C, tile_t), lambda j, b, i: (b, 0, i)),  # x (NCT, f32)
                pl.BlockSpec((C, tile_e), lambda j, b, i: (0, j)),        # weight panel
                pl.BlockSpec((1, tile_e), lambda j, b, i: (0, j)),        # bias
            ],
            out_specs=pl.BlockSpec((1, tile_t, tile_e), lambda j, b, i: (b, i, j)),
        ),
        compiler_params=pltpu.CompilerParams(
            dimension_semantics=("parallel", "parallel", "parallel"),
            vmem_limit_bytes=vmem_limit,
        ),
        cost_estimate=cost,
    )(x_nct, w_ce, b_1e)
    return out


def reference_patch_embed_bf16(x_nct, weight_ec1, bias_e):
    # Same numerics as the kernel: bf16 matmul inputs, f32 accumulation + bias.
    w_ec = weight_ec1[:, :, 0]
    y = jnp.einsum("bct,ec->bte",
                   x_nct.astype(jnp.bfloat16), w_ec.astype(jnp.bfloat16),
                   preferred_element_type=jnp.float32)
    return (y + bias_e[None, None, :].astype(jnp.float32)).astype(x_nct.dtype)


def reference_patch_embed_f32(x_nct, weight_ec1, bias_e):
    # Full-precision reference of the PyTorch forward (conv1d k=1 == matmul).
    w_ec = weight_ec1[:, :, 0]
    y = jnp.einsum("bct,ec->bet", x_nct, w_ec) + bias_e[None, :, None]
    return jnp.transpose(y, (0, 2, 1))


if __name__ == "__main__":
    # Shapes consistent with the module (t_length=T, patch_size=1, in_chans=C,
    # embed_dim=E), kept small.
    B, C, T, E = 2, 256, 640, 1024

    key = jax.random.PRNGKey(0)
    kx, kw, kb = jax.random.split(key, 3)
    x = jax.random.normal(kx, (B, C, T), dtype=jnp.float32)
    weight = jax.random.normal(kw, (E, C, 1), dtype=jnp.float32) * (1.0 / C) ** 0.5
    bias = jax.random.normal(kb, (E,), dtype=jnp.float32) * 0.01

    # Fast path: full-T / full-E panels -> grid (1, B, 1), x streamed once.
    out = jax.block_until_ready(patch_embed(x, weight, bias))
    assert out.shape == (B, T, E), out.shape
    assert out.dtype == x.dtype, out.dtype
    ref_bf16 = reference_patch_embed_bf16(x, weight, bias)
    ref_f32 = reference_patch_embed_f32(x, weight, bias)
    assert jnp.allclose(out, ref_bf16, atol=2e-2, rtol=2e-2), "mismatch vs bf16 reference"
    assert jnp.allclose(out, ref_f32, atol=1e-1, rtol=1e-1), "mismatch vs f32 reference"

    # Tiled path: forces E tiling (n_e=2) and a non-dividing T with a masked
    # edge block (T=600, tile_t=256 -> cdiv grid of 3 T-steps).
    T2 = 600
    x2 = jax.random.normal(jax.random.fold_in(key, 1), (B, C, T2), dtype=jnp.float32)
    out2 = jax.block_until_ready(
        patch_embed(x2, weight, bias, force_tile_t=256, force_tile_e=512))
    assert out2.shape == (B, T2, E), out2.shape
    ref2_bf16 = reference_patch_embed_bf16(x2, weight, bias)
    ref2_f32 = reference_patch_embed_f32(x2, weight, bias)
    assert jnp.allclose(out2, ref2_bf16, atol=2e-2, rtol=2e-2), "tiled mismatch vs bf16 reference"
    assert jnp.allclose(out2, ref2_f32, atol=1e-1, rtol=1e-1), "tiled mismatch vs f32 reference"

    print("KERNEL_OK")
</pallas_src>

<mosaic_0001>
module attributes {stable_mosaic.version = 11 : i64} {
  func.func @_patch_embed_kernel(%arg0: i32, %arg1: i32, %arg2: i32, %arg3: memref<1x256x640xf32, #tpu.memory_space<vmem>>, %arg4: memref<256x1024xbf16, #tpu.memory_space<vmem>>, %arg5: memref<1x1024xf32, #tpu.memory_space<vmem>>, %arg6: memref<1x640x1024xf32, #tpu.memory_space<vmem>>) attributes {dimension_semantics = [#tpu.dimension_semantics<parallel>, #tpu.dimension_semantics<parallel>, #tpu.dimension_semantics<parallel>], iteration_bounds = array<i64: 1, 2, 1>, scalar_prefetch = 0 : i64, scratch_operands = 0 : i64, tpu.core_type = #tpu.core_type<tc>, window_params = [{transform_indices = @transform_0, window_bounds = array<i64: 1, 256, 640>}, {transform_indices = @transform_1, window_bounds = array<i64: 256, 1024>}, {transform_indices = @transform_2, window_bounds = array<i64: 1, 1024>}, {transform_indices = @transform_3, window_bounds = array<i64: 1, 640, 1024>}]} {
    %c0 = arith.constant 0 : index
    %c0_0 = arith.constant 0 : index
    %c0_1 = arith.constant 0 : index
    %0 = vector.load %arg3[%c0, %c0_0, %c0_1] : memref<1x256x640xf32, #tpu.memory_space<vmem>>, vector<1x256x640xf32>
    %1 = vector.shape_cast %0 : vector<1x256x640xf32> to vector<256x640xf32>
    %2 = arith.truncf %1 : vector<256x640xf32> to vector<256x640xbf16>
    %c0_2 = arith.constant 0 : index
    %c0_3 = arith.constant 0 : index
    %3 = vector.load %arg4[%c0_2, %c0_3] : memref<256x1024xbf16, #tpu.memory_space<vmem>>, vector<256x1024xbf16>
    %cst = arith.constant dense<0.000000e+00> : vector<640x1024xf32>
    %4 = tpu.matmul %2, %3, %cst {dimension_numbers = #tpu.dot_dimension_numbers<[0], [0], [1], [1], [0, 1, 1, 1], [], []>} : vector<256x640xbf16>, vector<256x1024xbf16>, vector<640x1024xf32> -> vector<640x1024xf32>
    %c0_4 = arith.constant 0 : index
    %c0_5 = arith.constant 0 : index
    %5 = vector.load %arg5[%c0_4, %c0_5] : memref<1x1024xf32, #tpu.memory_space<vmem>>, vector<1x1024xf32>
    %6 = vector.broadcast %5 : vector<1x1024xf32> to vector<640x1024xf32>
    %7 = arith.addf %4, %6 : vector<640x1024xf32>
    %c0_6 = arith.constant 0 : index
    %c0_7 = arith.constant 0 : index
    %c0_8 = arith.constant 0 : index
    %8 = vector.load %arg6[%c0_6, %c0_7, %c0_8] : memref<1x640x1024xf32, #tpu.memory_space<vmem>>, vector<1x640x1024xf32>
    %9 = vector.shape_cast %8 : vector<1x640x1024xf32> to vector<640x1024xf32>
    %10 = vector.shape_cast %7 : vector<640x1024xf32> to vector<1x640x1024xf32>
    tpu.vector_store %arg6[%c0_6, %c0_7, %c0_8], %10 {strides = array<i32>} : memref<1x640x1024xf32, #tpu.memory_space<vmem>>, vector<1x640x1024xf32>,
    return
  }
  func.func @transform_0(%arg0: i32, %arg1: i32, %arg2: i32) -> (i32, i32, i32) {
    %c0_i32 = arith.constant 0 : i32
    %c0_i32_0 = arith.constant 0 : i32
    return %arg1, %c0_i32, %arg2 : i32, i32, i32
  }
  func.func @transform_1(%arg0: i32, %arg1: i32, %arg2: i32) -> (i32, i32) {
    %c0_i32 = arith.constant 0 : i32
    %c0_i32_0 = arith.constant 0 : i32
    return %c0_i32, %arg0 : i32, i32
  }
  func.func @transform_2(%arg0: i32, %arg1: i32, %arg2: i32) -> (i32, i32) {
    %c0_i32 = arith.constant 0 : i32
    %c0_i32_0 = arith.constant 0 : i32
    return %c0_i32, %arg0 : i32, i32
  }
  func.func @transform_3(%arg0: i32, %arg1: i32, %arg2: i32) -> (i32, i32, i32) {
    %c0_i32 = arith.constant 0 : i32
    return %arg1, %arg2, %arg0 : i32, i32, i32
  }
}

</mosaic_0001>

<llo_original>
// kernel: tpu_custom_call.1
$region0: #{tpu_custom_call.1}
  #allocation0 [shape = 'u32[]', space=smem, size = 0x4, offset = 0x4, fixed_abs, tag = 'smem constant byte address 0x4 - core index']
  #allocation1 [shape = 'u32[144,128]{1,0:T(1,128)}', space=vmem, size = 0x12000, scoped, tag = 'internal scratch']
  %s0 = inlined_call_operand.hbm [shape: f32[2,256,640], index: 0, kind: input, shape index: {}]
  %s1 = inlined_call_operand.hbm [shape: bf16[256,1024], index: 1, kind: input, shape index: {}]
  %s2 = inlined_call_operand.hbm [shape: f32[1,1024], index: 2, kind: input, shape index: {}]
  %s3 = inlined_call_operand.hbm [shape: f32[2,640,1024], index: 3, kind: output, shape index: {}]
  %s4 = sld [smem:[#allocation0]]
  $region57: #{tpu_custom_call.1} parent=0
    _
  %s6 = ssub.s32 1, %s4
  %s7 = scalar_select 0, %s6, %s4
  $region1: #{tpu_custom_call.1} parent=0
    #allocation2 [shape = 'u8[1310720]{0}', space=vmem, size = 0x140000, scoped, tag = 'input window, operand 0']
    #allocation3 [shape = 's32[2]{0}', space=sflag, size = 0x8, scoped, tag = 'scoped memory for tpu_custom_call.1']
    #allocation4 [shape = 's32[2]{0}', space=sflag, size = 0x8, scoped, tag = 'scoped memory for tpu_custom_call.1']
    #allocation5 [shape = 'u8[524288]{0}', space=vmem, size = 0x80000, scoped, tag = 'input window, operand 1, single buffered']
    #allocation6 [shape = 's32[1]{0}', space=sflag, size = 0x4, scoped, tag = 'scoped memory for tpu_custom_call.1']
    #allocation7 [shape = 'u8[4096]{0}', space=vmem, size = 0x1000, scoped, tag = 'input window, operand 2, single buffered']
    #allocation8 [shape = 'u8[5242880]{0}', space=vmem, size = 0x500000, scoped, tag = 'output window, operand 0']
    %8 = vsyncpa [#allocation3], 0
    %s9 = scalar_lea.sflag [#allocation3], 1
    %10 = vsyncpa %s9, 0
    %11 = vsyncpa [#allocation6], 0
    %12 = vsyncpa [#allocation4], 0
    %s13 = scalar_lea.sflag [#allocation4], 1
    %14 = vsyncpa %s13, 0
    loop: start=0, step=1, limit=4
    $region2: #{tpu_custom_call.1} parent=1 // loop_pre_header
      _
    $region3: #{tpu_custom_call.1} parent=1 // loop_header
      %s16 = sphi 0, %s20
      %p17 = scmp.ge.s32.totalorder %s16, 4
      %s23 = sphi 0, %s42
      %s24 = sphi 0, %s38
      %s25 = sphi 0, %s34
      %s26 = sphi 0, %s23
      %s27 = sphi 0, %s24
      %s28 = sphi 0, %s25
      %s29 = sphi 0, %s26
      %s30 = sphi 0, %s27
      %s31 = sphi 0, %s28
      %s47 = sphi 0, %s49
      %s50 = sphi 0, %s47
      %s51 = sphi 0, %s50
      %s67 = sphi 0, %s51
      %s73 = sphi 0, %s75
      %s76 = sphi 0, %s73
      %s77 = sphi 0, %s76
      %s93 = sphi 0, %s77
      %s99 = sphi 0, %s101
      %s102 = sphi 0, %s99
      %s103 = sphi 0, %s102
      %s119 = sphi 0, %s103
      %s129 = sphi 0, %s131
      %s132 = sphi 0, %s129
      %s133 = sphi 0, %s132
      %s149 = sphi 0, %s133
    $region4: #{tpu_custom_call.1} parent=1 // loop_header_branch
      %19 = sbr.rel (%p17) target = $region8
    $region5: #{tpu_custom_call.1} parent=1 // loop_body
      %s21 = ssub.s32 %s16, 1
      %s22 = ssub.s32 %s16, 2
      %s32 = sadd.s32 1, %s25
      %p33 = scmp.ge.s32.totalorder %s32, 1
      %s34 = scalar_select %p33, 0, %s32
      %s35 = sadd.s32 1, %s24
      %s36 = scalar_select %p33, %s35, %s24
      %p37 = scmp.ge.s32.totalorder %s36, 2
      %s38 = scalar_select %p37, 0, %s36
      %s39 = sadd.s32 1, %s23
      %s40 = scalar_select %p37, %s39, %s23
      %p41 = scmp.ge.s32.totalorder %s40, 1
      %s42 = scalar_select %p41, 0, %s40
      %s43 = ssub.s32 %s24, %s38
      %s44 = ssub.s32 %s25, %s34
      %s45 = sor.u32 %s43, %s44
      %p46 = scmp.eq.s32.totalorder %s45, 0
      %s48 = sadd.s32 %s47, 1
      %s49 = scalar_select %p46, %s47, %s48
      %p52 = pneg %p46
      %p53 = scmp.eq.s32.totalorder %s16, 1
      %p54 = por %p52, %p53
      %p55 = scmp.ne.s32.totalorder %s47, %s50
      %p56 = scmp.eq.s32.totalorder %s16, 0
      %p57 = por %p55, %p56
      %p58 = scmp.ne.s32.totalorder %s47, %s50
      %p59 = scmp.eq.s32.totalorder %s21, 1
      %p60 = por %p58, %p59
      %p61 = scmp.ne.s32.totalorder %s50, %s51
      %p62 = scmp.eq.s32.totalorder %s21, 0
      %p63 = por %p61, %p62
      %p64 = scmp.ne.s32.totalorder %s50, %s51
      %p65 = scmp.eq.s32.totalorder %s22, 1
      %p66 = por %p64, %p65
      %p68 = scmp.ne.s32.totalorder %s51, %s67
      %p69 = scmp.eq.s32.totalorder %s22, 0
      %p70 = por %p68, %p69
      %s71 = ssub.s32 %s23, %s42
      %p72 = scmp.eq.s32.totalorder %s71, 0
      %s74 = sadd.s32 %s73, 1
      %s75 = scalar_select %p72, %s73, %s74
      %p78 = pneg %p72
      %p79 = scmp.eq.s32.totalorder %s16, 1
      %p80 = por %p78, %p79
      %p81 = scmp.ne.s32.totalorder %s73, %s76
      %p82 = scmp.eq.s32.totalorder %s16, 0
      %p83 = por %p81, %p82
      %p84 = scmp.ne.s32.totalorder %s73, %s76
      %p85 = scmp.eq.s32.totalorder %s21, 1
      %p86 = por %p84, %p85
      %p87 = scmp.ne.s32.totalorder %s76, %s77
      %p88 = scmp.eq.s32.totalorder %s21, 0
      %p89 = por %p87, %p88
      %p90 = scmp.ne.s32.totalorder %s76, %s77
      %p91 = scmp.eq.s32.totalorder %s22, 1
      %p92 = por %p90, %p91
      %p94 = scmp.ne.s32.totalorder %s77, %s93
      %p95 = scmp.eq.s32.totalorder %s22, 0
      %p96 = por %p94, %p95
      %s97 = ssub.s32 %s23, %s42
      %p98 = scmp.eq.s32.totalorder %s97, 0
      %s100 = sadd.s32 %s99, 1
      %s101 = scalar_select %p98, %s99, %s100
      %p104 = pneg %p98
      %p105 = scmp.eq.s32.totalorder %s16, 1
      %p106 = por %p104, %p105
      %p107 = scmp.ne.s32.totalorder %s99, %s102
      %p108 = scmp.eq.s32.totalorder %s16, 0
      %p109 = por %p107, %p108
      %p110 = scmp.ne.s32.totalorder %s99, %s102
      %p111 = scmp.eq.s32.totalorder %s21, 1
      %p112 = por %p110, %p111
      %p113 = scmp.ne.s32.totalorder %s102, %s103
      %p114 = scmp.eq.s32.totalorder %s21, 0
      %p115 = por %p113, %p114
      %p116 = scmp.ne.s32.totalorder %s102, %s103
      %p117 = scmp.eq.s32.totalorder %s22, 1
      %p118 = por %p116, %p117
      %p120 = scmp.ne.s32.totalorder %s103, %s119
      %p121 = scmp.eq.s32.totalorder %s22, 0
      %p122 = por %p120, %p121
      %s123 = ssub.s32 %s24, %s38
      %s124 = ssub.s32 %s25, %s34
      %s125 = sor.u32 %s123, %s124
      %s126 = ssub.s32 %s23, %s42
      %s127 = sor.u32 %s125, %s126
      %p128 = scmp.eq.s32.totalorder %s127, 0
      %s130 = sadd.s32 %s129, 1
      %s131 = scalar_select %p128, %s129, %s130
      %p134 = pneg %p128
      %p135 = scmp.eq.s32.totalorder %s16, 1
      %p136 = por %p134, %p135
      %p137 = scmp.ne.s32.totalorder %s129, %s132
      %p138 = scmp.eq.s32.totalorder %s16, 0
      %p139 = por %p137, %p138
      %p140 = scmp.ne.s32.totalorder %s129, %s132
      %p141 = scmp.eq.s32.totalorder %s21, 1
      %p142 = por %p140, %p141
      %p143 = scmp.ne.s32.totalorder %s132, %s133
      %p144 = scmp.eq.s32.totalorder %s21, 0
      %p145 = por %p143, %p144
      %p146 = scmp.ne.s32.totalorder %s132, %s133
      %p147 = scmp.eq.s32.totalorder %s22, 1
      %p148 = por %p146, %p147
      %p150 = scmp.ne.s32.totalorder %s133, %s149
      %p151 = scmp.eq.s32.totalorder %s22, 0
      %p152 = por %p150, %p151
      %p153 = scmp.le.s32.totalorder 1, %s16
      %p154 = scmp.lt.s32.totalorder %s16, 3
      %p155 = pnand %p153, %p154
      %p156 = pneg %p155
      // Predicated region
      $region9: #{tpu_custom_call.1} parent=5 // pred_check
        _
      $region10: #{tpu_custom_call.1} parent=5 // pred_check_branch
        %158 = sbr.rel (%p155) target = $region12
      $region11: #{tpu_custom_call.1} parent=5 // pred_region
        %s159 = ssub.s32 %s16, 1
        // Predicated region
        $region13: #{tpu_custom_call.1} parent=11 // pred_check
          %p160 = pneg %p89
        $region14: #{tpu_custom_call.1} parent=11 // pred_check_branch
          %162 = sbr.rel (%p160) target = $region16
        $region15: #{tpu_custom_call.1} parent=11 // pred_region
          %s163 = smul.u32 8, %s26
          %s165 = ssub.s32 16384, 16384
          %166 = vsyncadd [#allocation6], %s165
          %s167 = smul.addr %s163, 64
          %s168 = scalar_lea.hbm %s1, %s167
          %s169 = sshll.u32 [#allocation5], 4
          %s170 = int_to_ptr.vmem [resolvable:$true] %s169
          %175 = dma.hbm_to_vmem [thread:$0]  %s168, 16384, %s170, [#allocation6], 512, 512, 32
        $region16: #{tpu_custom_call.1} parent=11 // pred_fallthru
          _
        // Predicated region
        $region17: #{tpu_custom_call.1} parent=11 // pred_check
          %p176 = pneg %p115
        $region18: #{tpu_custom_call.1} parent=11 // pred_check_branch
          %178 = sbr.rel (%p176) target = $region20
        $region19: #{tpu_custom_call.1} parent=11 // pred_region
          %s179 = smul.u32 8, %s26
          %s181 = ssub.s32 128, 128
          %182 = vsyncadd [#allocation6], %s181
          %s183 = smul.addr %s179, 16
          %s184 = scalar_lea.hbm %s2, %s183
          %s186 = sshll.u32 [#allocation7], 4
          %s187 = int_to_ptr.vmem [resolvable:$true] %s186
          %189 = dma.hbm_to_vmem [thread:$0]  %s184, 128, %s187, [#allocation6]
        $region20: #{tpu_custom_call.1} parent=11 // pred_fallthru
          _
      $region12: #{tpu_custom_call.1} parent=5 // pred_fallthru
        _
      %p190 = scmp.lt.s32.totalorder %s16, 2
      // Predicated region
      $region21: #{tpu_custom_call.1} parent=5 // pred_check
        %p191 = pneg %p190
      $region22: #{tpu_custom_call.1} parent=5 // pred_check_branch
        %193 = sbr.rel (%p191) target = $region24
      $region23: #{tpu_custom_call.1} parent=5 // pred_region
        // Predicated region
        $region25: #{tpu_custom_call.1} parent=23 // pred_check
          %p194 = pneg %p57
        $region26: #{tpu_custom_call.1} parent=23 // pred_check_branch
          %196 = sbr.rel (%p194) target = $region28
        $region27: #{tpu_custom_call.1} parent=23 // pred_region
          %s197 = sand.u32 %s47, 1
          %s198 = scalar_lea.sflag [#allocation3], %s197
          %s199 = sand.u32 %s47, 1
          %s200 = smul.addr %s199, 1280
          %s201 = scalar_lea.vmem [#allocation2], %s200
          %s202 = smul.u32 5, %s25
          %s204 = ssub.s32 20480, 20480
          %205 = vsyncadd %s198, %s204
          %s206 = smul.addr %s24, 160
          %s207 = sadd.s32 %s202, %s206
          %s208 = smul.addr %s207, 128
          %s209 = scalar_lea.hbm %s0, %s208
          %s210 = sshll.u32 %s201, 4
          %s211 = int_to_ptr.vmem [resolvable:$true] %s210
          %216 = dma.hbm_to_vmem [thread:$0]  %s209, 20480, %s211, %s198, 640, 640, 40
        $region28: #{tpu_custom_call.1} parent=23 // pred_fallthru
          _
      $region24: #{tpu_custom_call.1} parent=5 // pred_fallthru
        _
      %p217 = scmp.le.s32.totalorder 1, %s16
      %p218 = scmp.lt.s32.totalorder %s16, 3
      %p219 = pnand %p217, %p218
      %p220 = pneg %p219
      // Predicated region
      $region29: #{tpu_custom_call.1} parent=5 // pred_check
        _
      $region30: #{tpu_custom_call.1} parent=5 // pred_check_branch
        %222 = sbr.rel (%p219) target = $region32
      $region31: #{tpu_custom_call.1} parent=5 // pred_region
        %s223 = ssub.s32 %s16, 1
        %s224 = sand.u32 %s50, 1
        %s225 = scalar_lea.sflag [#allocation3], %s224
        %s226 = sand.u32 %s50, 1
        %s227 = smul.addr %s226, 1280
        %s228 = scalar_lea.vmem [#allocation2], %s227
        // Predicated region
        $region33: #{tpu_custom_call.1} parent=31 // pred_check
          %p229 = pneg %p63
        $region34: #{tpu_custom_call.1} parent=31 // pred_check_branch
          %231 = sbr.rel (%p229) target = $region36
        $region35: #{tpu_custom_call.1} parent=31 // pred_region
          %232 = dma.done %s225, 20480
        $region36: #{tpu_custom_call.1} parent=31 // pred_fallthru
          _
        // Predicated region
        $region37: #{tpu_custom_call.1} parent=31 // pred_check
          %p233 = pneg %p89
        $region38: #{tpu_custom_call.1} parent=31 // pred_check_branch
          %235 = sbr.rel (%p233) target = $region40
        $region39: #{tpu_custom_call.1} parent=31 // pred_region
          %236 = dma.done [#allocation6], 16384
        $region40: #{tpu_custom_call.1} parent=31 // pred_fallthru
          _
        // Predicated region
        $region41: #{tpu_custom_call.1} parent=31 // pred_check
          %p237 = pneg %p115
        $region42: #{tpu_custom_call.1} parent=31 // pred_check_branch
          %239 = sbr.rel (%p237) target = $region44
        $region43: #{tpu_custom_call.1} parent=31 // pred_region
          %240 = dma.done [#allocation6], 128
        $region44: #{tpu_custom_call.1} parent=31 // pred_fallthru
          _
        %s241 = sand.u32 %s50, 1
        %s242 = scalar_lea.sflag [#allocation3], %s241
        %s243 = sand.u32 %s50, 1
        %s244 = smul.addr %s243, 1280
        %s245 = scalar_lea.vmem [#allocation2], %s244
        %p246 = pneg %p63
        %p247 = pneg %p60
        %p248 = pneg %p89
        %p249 = pneg %p86
        %p250 = pneg %p115
        %p251 = pneg %p112
        %p252 = pneg %p145
        %p253 = pneg %p142
        %s254 = sand.u32 %s132, 1
        %s255 = scalar_lea.sflag [#allocation4], %s254
        %s256 = sand.u32 %s132, 1
        %s257 = smul.addr %s256, 5120
        %s258 = scalar_lea.vmem [#allocation8], %s257
        %s259 = smul.u32 5, %s28
        %s260 = smul.u32 8, %s26
        %s261 = smul.u32 8, %s26
        %s262 = smul.u32 80, %s28
        %s263 = smul.u32 8, %s26
        %v264 = vld [vmem:[%s228] sm:$0xff]
        %v265 = vld [vmem:[%s228 + $0x8] sm:$0xff]
        %v266 = vld [vmem:[%s228 + $0x10] sm:$0xff]
        %v267 = vld [vmem:[%s228 + $0x18] sm:$0xff]
        %v268 = vld [vmem:[%s228 + $0x20] sm:$0xff]
        %v269 = vld [vmem:[%s228 + $0x28] sm:$0xff]
        %v270 = vld [vmem:[%s228 + $0x30] sm:$0xff]
        %v271 = vld [vmem:[%s228 + $0x38] sm:$0xff]
        %v272 = vld [vmem:[%s228 + $0x40] sm:$0xff]
        %v273 = vld [vmem:[%s228 + $0x48] sm:$0xff]
        %v274 = vld [vmem:[%s228 + $0x50] sm:$0xff]
        %v275 = vld [vmem:[%s228 + $0x58] sm:$0xff]
        %v276 = vld [vmem:[%s228 + $0x60] sm:$0xff]
        %v277 = vld [vmem:[%s228 + $0x68] sm:$0xff]
        %v278 = vld [vmem:[%s228 + $0x70] sm:$0xff]
        %v279 = vld [vmem:[%s228 + $0x78] sm:$0xff]
        %v280 = vld [vmem:[%s228 + $0x80] sm:$0xff]
        %v281 = vld [vmem:[%s228 + $0x88] sm:$0xff]
        %v282 = vld [vmem:[%s228 + $0x90] sm:$0xff]
        %v283 = vld [vmem:[%s228 + $0x98] sm:$0xff]
        %v284 = vld [vmem:[%s228 + $0xa0] sm:$0xff]
        %v285 = vld [vmem:[%s228 + $0xa8] sm:$0xff]
        %v286 = vld [vmem:[%s228 + $0xb0] sm:$0xff]
        %v287 = vld [vmem:[%s228 + $0xb8] sm:$0xff]
        %v288 = vld [vmem:[%s228 + $0xc0] sm:$0xff]
        %v289 = vld [vmem:[%s228 + $0xc8] sm:$0xff]
        %v290 = vld [vmem:[%s228 + $0xd0] sm:$0xff]
        %v291 = vld [vmem:[%s228 + $0xd8] sm:$0xff]
        %v292 = vld [vmem:[%s228 + $0xe0] sm:$0xff]
        %v293 = vld [vmem:[%s228 + $0xe8] sm:$0xff]
        %v294 = vld [vmem:[%s228 + $0xf0] sm:$0xff]
        %v295 = vld [vmem:[%s228 + $0xf8] sm:$0xff]
        %v296 = vld [vmem:[%s228 + $0x100] sm:$0xff]
        %v297 = vld [vmem:[%s228 + $0x108] sm:$0xff]
        %v298 = vld [vmem:[%s228 + $0x110] sm:$0xff]
        %v299 = vld [vmem:[%s228 + $0x118] sm:$0xff]
        %v300 = vld [vmem:[%s228 + $0x120] sm:$0xff]
        %v301 = vld [vmem:[%s228 + $0x128] sm:$0xff]
        %v302 = vld [vmem:[%s228 + $0x130] sm:$0xff]
        %v303 = vld [vmem:[%s228 + $0x138] sm:$0xff]
        %v304 = vld [vmem:[%s228 + $0x140] sm:$0xff]
        %v305 = vld [vmem:[%s228 + $0x148] sm:$0xff]
        %v306 = vld [vmem:[%s228 + $0x150] sm:$0xff]
        %v307 = vld [vmem:[%s228 + $0x158] sm:$0xff]
        %v308 = vld [vmem:[%s228 + $0x160] sm:$0xff]
        %v309 = vld [vmem:[%s228 + $0x168] sm:$0xff]
        %v310 = vld [vmem:[%s228 + $0x170] sm:$0xff]
        %v311 = vld [vmem:[%s228 + $0x178] sm:$0xff]
        %v312 = vld [vmem:[%s228 + $0x180] sm:$0xff]
        %v313 = vld [vmem:[%s228 + $0x188] sm:$0xff]
        %v314 = vld [vmem:[%s228 + $0x190] sm:$0xff]
        %v315 = vld [vmem:[%s228 + $0x198] sm:$0xff]
        %v316 = vld [vmem:[%s228 + $0x1a0] sm:$0xff]
        %v317 = vld [vmem:[%s228 + $0x1a8] sm:$0xff]
        %v318 = vld [vmem:[%s228 + $0x1b0] sm:$0xff]
        %v319 = vld [vmem:[%s228 + $0x1b8] sm:$0xff]
        %v320 = vld [vmem:[%s228 + $0x1c0] sm:$0xff]
        %v321 = vld [vmem:[%s228 + $0x1c8] sm:$0xff]
        %v322 = vld [vmem:[%s228 + $0x1d0] sm:$0xff]
        %v323 = vld [vmem:[%s228 + $0x1d8] sm:$0xff]
        %v324 = vld [vmem:[%s228 + $0x1e0] sm:$0xff]
        %v325 = vld [vmem:[%s228 + $0x1e8] sm:$0xff]
        %v326 = vld [vmem:[%s228 + $0x1f0] sm:$0xff]
        %v327 = vld [vmem:[%s228 + $0x1f8] sm:$0xff]
        %v328 = vld [vmem:[%s228 + $0x200] sm:$0xff]
        %v329 = vld [vmem:[%s228 + $0x208] sm:$0xff]
        %v330 = vld [vmem:[%s228 + $0x210] sm:$0xff]
        %v331 = vld [vmem:[%s228 + $0x218] sm:$0xff]
        %v332 = vld [vmem:[%s228 + $0x220] sm:$0xff]
        %v333 = vld [vmem:[%s228 + $0x228] sm:$0xff]
        %v334 = vld [vmem:[%s228 + $0x230] sm:$0xff]
        %v335 = vld [vmem:[%s228 + $0x238] sm:$0xff]
        %v336 = vld [vmem:[%s228 + $0x240] sm:$0xff]
        %v337 = vld [vmem:[%s228 + $0x248] sm:$0xff]
        %v338 = vld [vmem:[%s228 + $0x250] sm:$0xff]
        %v339 = vld [vmem:[%s228 + $0x258] sm:$0xff]
        %v340 = vld [vmem:[%s228 + $0x260] sm:$0xff]
        %v341 = vld [vmem:[%s228 + $0x268] sm:$0xff]
        %v342 = vld [vmem:[%s228 + $0x270] sm:$0xff]
        %v343 = vld [vmem:[%s228 + $0x278] sm:$0xff]
        %v344 = vld [vmem:[%s228 + $0x280] sm:$0xff]
        %v345 = vld [vmem:[%s228 + $0x288] sm:$0xff]
        %v346 = vld [vmem:[%s228 + $0x290] sm:$0xff]
        %v347 = vld [vmem:[%s228 + $0x298] sm:$0xff]
        %v348 = vld [vmem:[%s228 + $0x2a0] sm:$0xff]
        %v349 = vld [vmem:[%s228 + $0x2a8] sm:$0xff]
        %v350 = vld [vmem:[%s228 + $0x2b0] sm:$0xff]
        %v351 = vld [vmem:[%s228 + $0x2b8] sm:$0xff]
        %v352 = vld [vmem:[%s228 + $0x2c0] sm:$0xff]
        %v353 = vld [vmem:[%s228 + $0x2c8] sm:$0xff]
        %v354 = vld [vmem:[%s228 + $0x2d0] sm:$0xff]
        %v355 = vld [vmem:[%s228 + $0x2d8] sm:$0xff]
        %v356 = vld [vmem:[%s228 + $0x2e0] sm:$0xff]
        %v357 = vld [vmem:[%s228 + $0x2e8] sm:$0xff]
        %v358 = vld [vmem:[%s228 + $0x2f0] sm:$0xff]
        %v359 = vld [vmem:[%s228 + $0x2f8] sm:$0xff]
        %v360 = vld [vmem:[%s228 + $0x300] sm:$0xff]
        %v361 = vld [vmem:[%s228 + $0x308] sm:$0xff]
        %v362 = vld [vmem:[%s228 + $0x310] sm:$0xff]
        %v363 = vld [vmem:[%s228 + $0x318] sm:$0xff]
        %v364 = vld [vmem:[%s228 + $0x320] sm:$0xff]
        %v365 = vld [vmem:[%s228 + $0x328] sm:$0xff]
        %v366 = vld [vmem:[%s228 + $0x330] sm:$0xff]
        %v367 = vld [vmem:[%s228 + $0x338] sm:$0xff]
        %v368 = vld [vmem:[%s228 + $0x340] sm:$0xff]
        %v369 = vld [vmem:[%s228 + $0x348] sm:$0xff]
        %v370 = vld [vmem:[%s228 + $0x350] sm:$0xff]
        %v371 = vld [vmem:[%s228 + $0x358] sm:$0xff]
        %v372 = vld [vmem:[%s228 + $0x360] sm:$0xff]
        %v373 = vld [vmem:[%s228 + $0x368] sm:$0xff]
        %v374 = vld [vmem:[%s228 + $0x370] sm:$0xff]
        %v375 = vld [vmem:[%s228 + $0x378] sm:$0xff]
        %v376 = vld [vmem:[%s228 + $0x380] sm:$0xff]
        %v377 = vld [vmem:[%s228 + $0x388] sm:$0xff]
        %v378 = vld [vmem:[%s228 + $0x390] sm:$0xff]
        %v379 = vld [vmem:[%s228 + $0x398] sm:$0xff]
        %v380 = vld [vmem:[%s228 + $0x3a0] sm:$0xff]
        %v381 = vld [vmem:[%s228 + $0x3a8] sm:$0xff]
        %v382 = vld [vmem:[%s228 + $0x3b0] sm:$0xff]
        %v383 = vld [vmem:[%s228 + $0x3b8] sm:$0xff]
        %v384 = vld [vmem:[%s228 + $0x3c0] sm:$0xff]
        %v385 = vld [vmem:[%s228 + $0x3c8] sm:$0xff]
        %v386 = vld [vmem:[%s228 + $0x3d0] sm:$0xff]
        %v387 = vld [vmem:[%s228 + $0x3d8] sm:$0xff]
        %v388 = vld [vmem:[%s228 + $0x3e0] sm:$0xff]
        %v389 = vld [vmem:[%s228 + $0x3e8] sm:$0xff]
        %v390 = vld [vmem:[%s228 + $0x3f0] sm:$0xff]
        %v391 = vld [vmem:[%s228 + $0x3f8] sm:$0xff]
        %v392 = vld [vmem:[%s228 + $0x400] sm:$0xff]
        %v393 = vld [vmem:[%s228 + $0x408] sm:$0xff]
        %v394 = vld [vmem:[%s228 + $0x410] sm:$0xff]
        %v395 = vld [vmem:[%s228 + $0x418] sm:$0xff]
        %v396 = vld [vmem:[%s228 + $0x420] sm:$0xff]
        %v397 = vld [vmem:[%s228 + $0x428] sm:$0xff]
        %v398 = vld [vmem:[%s228 + $0x430] sm:$0xff]
        %v399 = vld [vmem:[%s228 + $0x438] sm:$0xff]
        %v400 = vld [vmem:[%s228 + $0x440] sm:$0xff]
        %v401 = vld [vmem:[%s228 + $0x448] sm:$0xff]
        %v402 = vld [vmem:[%s228 + $0x450] sm:$0xff]
        %v403 = vld [vmem:[%s228 + $0x458] sm:$0xff]
        %v404 = vld [vmem:[%s228 + $0x460] sm:$0xff]
        %v405 = vld [vmem:[%s228 + $0x468] sm:$0xff]
        %v406 = vld [vmem:[%s228 + $0x470] sm:$0xff]
        %v407 = vld [vmem:[%s228 + $0x478] sm:$0xff]
        %v408 = vld [vmem:[%s228 + $0x480] sm:$0xff]
        %v409 = vld [vmem:[%s228 + $0x488] sm:$0xff]
        %v410 = vld [vmem:[%s228 + $0x490] sm:$0xff]
        %v411 = vld [vmem:[%s228 + $0x498] sm:$0xff]
        %v412 = vld [vmem:[%s228 + $0x4a0] sm:$0xff]
        %v413 = vld [vmem:[%s228 + $0x4a8] sm:$0xff]
        %v414 = vld [vmem:[%s228 + $0x4b0] sm:$0xff]
        %v415 = vld [vmem:[%s228 + $0x4b8] sm:$0xff]
        %v416 = vld [vmem:[%s228 + $0x4c0] sm:$0xff]
        %v417 = vld [vmem:[%s228 + $0x4c8] sm:$0xff]
        %v418 = vld [vmem:[%s228 + $0x4d0] sm:$0xff]
        %v419 = vld [vmem:[%s228 + $0x4d8] sm:$0xff]
        %v420 = vld [vmem:[%s228 + $0x4e0] sm:$0xff]
        %v421 = vld [vmem:[%s228 + $0x4e8] sm:$0xff]
        %v422 = vld [vmem:[%s228 + $0x4f0] sm:$0xff]
        %v423 = vld [vmem:[%s228 + $0x4f8] sm:$0xff]
        %v424 = vpack.c.bf16 %v269, %v264
        %v425 = vpack.c.bf16 %v270, %v265
        %v426 = vpack.c.bf16 %v271, %v266
        %v427 = vpack.c.bf16 %v272, %v267
        %v428 = vpack.c.bf16 %v273, %v268
        %v429 = vpack.c.bf16 %v279, %v274
        %v430 = vpack.c.bf16 %v280, %v275
        %v431 = vpack.c.bf16 %v281, %v276
        %v432 = vpack.c.bf16 %v282, %v277
        %v433 = vpack.c.bf16 %v283, %v278
        %v434 = vpack.c.bf16 %v289, %v284
        %v435 = vpack.c.bf16 %v290, %v285
        %v436 = vpack.c.bf16 %v291, %v286
        %v437 = vpack.c.bf16 %v292, %v287
        %v438 = vpack.c.bf16 %v293, %v288
        %v439 = vpack.c.bf16 %v299, %v294
        %v440 = vpack.c.bf16 %v300, %v295
        %v441 = vpack.c.bf16 %v301, %v296
        %v442 = vpack.c.bf16 %v302, %v297
        %v443 = vpack.c.bf16 %v303, %v298
        %v444 = vpack.c.bf16 %v309, %v304
        %v445 = vpack.c.bf16 %v310, %v305
        %v446 = vpack.c.bf16 %v311, %v306
        %v447 = vpack.c.bf16 %v312, %v307
        %v448 = vpack.c.bf16 %v313, %v308
        %v449 = vpack.c.bf16 %v319, %v314
        %v450 = vpack.c.bf16 %v320, %v315
        %v451 = vpack.c.bf16 %v321, %v316
        %v452 = vpack.c.bf16 %v322, %v317
        %v453 = vpack.c.bf16 %v323, %v318
        %v454 = vpack.c.bf16 %v329, %v324
        %v455 = vpack.c.bf16 %v330, %v325
        %v456 = vpack.c.bf16 %v331, %v326
        %v457 = vpack.c.bf16 %v332, %v327
        %v458 = vpack.c.bf16 %v333, %v328
        %v459 = vpack.c.bf16 %v339, %v334
        %v460 = vpack.c.bf16 %v340, %v335
        %v461 = vpack.c.bf16 %v341, %v336
        %v462 = vpack.c.bf16 %v342, %v337
        %v463 = vpack.c.bf16 %v343, %v338
        %v464 = vpack.c.bf16 %v349, %v344
        %v465 = vpack.c.bf16 %v350, %v345
        %v466 = vpack.c.bf16 %v351, %v346
        %v467 = vpack.c.bf16 %v352, %v347
        %v468 = vpack.c.bf16 %v353, %v348
        %v469 = vpack.c.bf16 %v359, %v354
        %v470 = vpack.c.bf16 %v360, %v355
        %v471 = vpack.c.bf16 %v361, %v356
        %v472 = vpack.c.bf16 %v362, %v357
        %v473 = vpack.c.bf16 %v363, %v358
        %v474 = vpack.c.bf16 %v369, %v364
        %v475 = vpack.c.bf16 %v370, %v365
        %v476 = vpack.c.bf16 %v371, %v366
        %v477 = vpack.c.bf16 %v372, %v367
        %v478 = vpack.c.bf16 %v373, %v368
        %v479 = vpack.c.bf16 %v379, %v374
        %v480 = vpack.c.bf16 %v380, %v375
        %v481 = vpack.c.bf16 %v381, %v376
        %v482 = vpack.c.bf16 %v382, %v377
        %v483 = vpack.c.bf16 %v383, %v378
        %v484 = vpack.c.bf16 %v389, %v384
        %v485 = vpack.c.bf16 %v390, %v385
        %v486 = vpack.c.bf16 %v391, %v386
        %v487 = vpack.c.bf16 %v392, %v387
        %v488 = vpack.c.bf16 %v393, %v388
        %v489 = vpack.c.bf16 %v399, %v394
        %v490 = vpack.c.bf16 %v400, %v395
        %v491 = vpack.c.bf16 %v401, %v396
        %v492 = vpack.c.bf16 %v402, %v397
        %v493 = vpack.c.bf16 %v403, %v398
        %v494 = vpack.c.bf16 %v409, %v404
        %v495 = vpack.c.bf16 %v410, %v405
        %v496 = vpack.c.bf16 %v411, %v406
        %v497 = vpack.c.bf16 %v412, %v407
        %v498 = vpack.c.bf16 %v413, %v408
        %v499 = vpack.c.bf16 %v419, %v414
        %v500 = vpack.c.bf16 %v420, %v415
        %v501 = vpack.c.bf16 %v421, %v416
        %v502 = vpack.c.bf16 %v422, %v417
        %v503 = vpack.c.bf16 %v423, %v418
        %v504 = vld [vmem:[#allocation5] sm:$0xff]
        %v505 = vld [vmem:[#allocation5 + $0x8] sm:$0xff]
        %v506 = vld [vmem:[#allocation5 + $0x10] sm:$0xff]
        %v507 = vld [vmem:[#allocation5 + $0x18] sm:$0xff]
        %v508 = vld [vmem:[#allocation5 + $0x20] sm:$0xff]
        %v509 = vld [vmem:[#allocation5 + $0x28] sm:$0xff]
        %v510 = vld [vmem:[#allocation5 + $0x30] sm:$0xff]
        %v511 = vld [vmem:[#allocation5 + $0x38] sm:$0xff]
        %v512 = vld [vmem:[#allocation5 + $0x40] sm:$0xff]
        %v513 = vld [vmem:[#allocation5 + $0x48] sm:$0xff]
        %v514 = vld [vmem:[#allocation5 + $0x50] sm:$0xff]
        %v515 = vld [vmem:[#allocation5 + $0x58] sm:$0xff]
        %v516 = vld [vmem:[#allocation5 + $0x60] sm:$0xff]
        %v517 = vld [vmem:[#allocation5 + $0x68] sm:$0xff]
        %v518 = vld [vmem:[#allocation5 + $0x70] sm:$0xff]
        %v519 = vld [vmem:[#allocation5 + $0x78] sm:$0xff]
        %v520 = vld [vmem:[#allocation5 + $0x80] sm:$0xff]
        %v521 = vld [vmem:[#allocation5 + $0x88] sm:$0xff]
        %v522 = vld [vmem:[#allocation5 + $0x90] sm:$0xff]
        %v523 = vld [vmem:[#allocation5 + $0x98] sm:$0xff]
        %v524 = vld [vmem:[#allocation5 + $0xa0] sm:$0xff]
        %v525 = vld [vmem:[#allocation5 + $0xa8] sm:$0xff]
        %v526 = vld [vmem:[#allocation5 + $0xb0] sm:$0xff]
        %v527 = vld [vmem:[#allocation5 + $0xb8] sm:$0xff]
        %v528 = vld [vmem:[#allocation5 + $0xc0] sm:$0xff]
        %v529 = vld [vmem:[#allocation5 + $0xc8] sm:$0xff]
        %v530 = vld [vmem:[#allocation5 + $0xd0] sm:$0xff]
        %v531 = vld [vmem:[#allocation5 + $0xd8] sm:$0xff]
        %v532 = vld [vmem:[#allocation5 + $0xe0] sm:$0xff]
        %v533 = vld [vmem:[#allocation5 + $0xe8] sm:$0xff]
        %v534 = vld [vmem:[#allocation5 + $0xf0] sm:$0xff]
        %v535 = vld [vmem:[#allocation5 + $0xf8] sm:$0xff]
        %v536 = vld [vmem:[#allocation5 + $0x100] sm:$0xff]
        %v537 = vld [vmem:[#allocation5 + $0x108] sm:$0xff]
        %v538 = vld [vmem:[#allocation5 + $0x110] sm:$0xff]
        %v539 = vld [vmem:[#allocation5 + $0x118] sm:$0xff]
        %v540 = vld [vmem:[#allocation5 + $0x120] sm:$0xff]
        %v541 = vld [vmem:[#allocation5 + $0x128] sm:$0xff]
        %v542 = vld [vmem:[#allocation5 + $0x130] sm:$0xff]
        %v543 = vld [vmem:[#allocation5 + $0x138] sm:$0xff]
        %v544 = vld [vmem:[#allocation5 + $0x140] sm:$0xff]
        %v545 = vld [vmem:[#allocation5 + $0x148] sm:$0xff]
        %v546 = vld [vmem:[#allocation5 + $0x150] sm:$0xff]
        %v547 = vld [vmem:[#allocation5 + $0x158] sm:$0xff]
        %v548 = vld [vmem:[#allocation5 + $0x160] sm:$0xff]
        %v549 = vld [vmem:[#allocation5 + $0x168] sm:$0xff]
        %v550 = vld [vmem:[#allocation5 + $0x170] sm:$0xff]
        %v551 = vld [vmem:[#allocation5 + $0x178] sm:$0xff]
        %v552 = vld [vmem:[#allocation5 + $0x180] sm:$0xff]
        %v553 = vld [vmem:[#allocation5 + $0x188] sm:$0xff]
        %v554 = vld [vmem:[#allocation5 + $0x190] sm:$0xff]
        %v555 = vld [vmem:[#allocation5 + $0x198] sm:$0xff]
        %v556 = vld [vmem:[#allocation5 + $0x1a0] sm:$0xff]
        %v557 = vld [vmem:[#allocation5 + $0x1a8] sm:$0xff]
        %v558 = vld [vmem:[#allocation5 + $0x1b0] sm:$0xff]
        %v559 = vld [vmem:[#allocation5 + $0x1b8] sm:$0xff]
        %v560 = vld [vmem:[#allocation5 + $0x1c0] sm:$0xff]
        %v561 = vld [vmem:[#allocation5 + $0x1c8] sm:$0xff]
        %v562 = vld [vmem:[#allocation5 + $0x1d0] sm:$0xff]
        %v563 = vld [vmem:[#allocation5 + $0x1d8] sm:$0xff]
        %v564 = vld [vmem:[#allocation5 + $0x1e0] sm:$0xff]
        %v565 = vld [vmem:[#allocation5 + $0x1e8] sm:$0xff]
        %v566 = vld [vmem:[#allocation5 + $0x1f0] sm:$0xff]
        %v567 = vld [vmem:[#allocation5 + $0x1f8] sm:$0xff]
        %v568 = vld [vmem:[#allocation5 + $0x200] sm:$0xff]
        %v569 = vld [vmem:[#allocation5 + $0x208] sm:$0xff]
        %v570 = vld [vmem:[#allocation5 + $0x210] sm:$0xff]
        %v571 = vld [vmem:[#allocation5 + $0x218] sm:$0xff]
        %v572 = vld [vmem:[#allocation5 + $0x220] sm:$0xff]
        %v573 = vld [vmem:[#allocation5 + $0x228] sm:$0xff]
        %v574 = vld [vmem:[#allocation5 + $0x230] sm:$0xff]
        %v575 = vld [vmem:[#allocation5 + $0x238] sm:$0xff]
        %v576 = vld [vmem:[#allocation5 + $0x240] sm:$0xff]
        %v577 = vld [vmem:[#allocation5 + $0x248] sm:$0xff]
        %v578 = vld [vmem:[#allocation5 + $0x250] sm:$0xff]
        %v579 = vld [vmem:[#allocation5 + $0x258] sm:$0xff]
        %v580 = vld [vmem:[#allocation5 + $0x260] sm:$0xff]
        %v581 = vld [vmem:[#allocation5 + $0x268] sm:$0xff]
        %v582 = vld [vmem:[#allocation5 + $0x270] sm:$0xff]
        %v583 = vld [vmem:[#allocation5 + $0x278] sm:$0xff]
        %v584 = vld [vmem:[#allocation5 + $0x280] sm:$0xff]
        %v585 = vld [vmem:[#allocation5 + $0x288] sm:$0xff]
        %v586 = vld [vmem:[#allocation5 + $0x290] sm:$0xff]
        %v587 = vld [vmem:[#allocation5 + $0x298] sm:$0xff]
        %v588 = vld [vmem:[#allocation5 + $0x2a0] sm:$0xff]
        %v589 = vld [vmem:[#allocation5 + $0x2a8] sm:$0xff]
        %v590 = vld [vmem:[#allocation5 + $0x2b0] sm:$0xff]
        %v591 = vld [vmem:[#allocation5 + $0x2b8] sm:$0xff]
        %v592 = vld [vmem:[#allocation5 + $0x2c0] sm:$0xff]
        %v593 = vld [vmem:[#allocation5 + $0x2c8] sm:$0xff]
        %v594 = vld [vmem:[#allocation5 + $0x2d0] sm:$0xff]
        %v595 = vld [vmem:[#allocation5 + $0x2d8] sm:$0xff]
        %v596 = vld [vmem:[#allocation5 + $0x2e0] sm:$0xff]
        %v597 = vld [vmem:[#allocation5 + $0x2e8] sm:$0xff]
        %v598 = vld [vmem:[#allocation5 + $0x2f0] sm:$0xff]
        %v599 = vld [vmem:[#allocation5 + $0x2f8] sm:$0xff]
        %v600 = vld [vmem:[#allocation5 + $0x300] sm:$0xff]
        %v601 = vld [vmem:[#allocation5 + $0x308] sm:$0xff]
        %v602 = vld [vmem:[#allocation5 + $0x310] sm:$0xff]
        %v603 = vld [vmem:[#allocation5 + $0x318] sm:$0xff]
        %v604 = vld [vmem:[#allocation5 + $0x320] sm:$0xff]
        %v605 = vld [vmem:[#allocation5 + $0x328] sm:$0xff]
        %v606 = vld [vmem:[#allocation5 + $0x330] sm:$0xff]
        %v607 = vld [vmem:[#allocation5 + $0x338] sm:$0xff]
        %v608 = vld [vmem:[#allocation5 + $0x340] sm:$0xff]
        %v609 = vld [vmem:[#allocation5 + $0x348] sm:$0xff]
        %v610 = vld [vmem:[#allocation5 + $0x350] sm:$0xff]
        %v611 = vld [vmem:[#allocation5 + $0x358] sm:$0xff]
        %v612 = vld [vmem:[#allocation5 + $0x360] sm:$0xff]
        %v613 = vld [vmem:[#allocation5 + $0x368] sm:$0xff]
        %v614 = vld [vmem:[#allocation5 + $0x370] sm:$0xff]
        %v615 = vld [vmem:[#allocation5 + $0x378] sm:$0xff]
        %v616 = vld [vmem:[#allocation5 + $0x380] sm:$0xff]
        %v617 = vld [vmem:[#allocation5 + $0x388] sm:$0xff]
        %v618 = vld [vmem:[#allocation5 + $0x390] sm:$0xff]
        %v619 = vld [vmem:[#allocation5 + $0x398] sm:$0xff]
        %v620 = vld [vmem:[#allocation5 + $0x3a0] sm:$0xff]
        %v621 = vld [vmem:[#allocation5 + $0x3a8] sm:$0xff]
        %v622 = vld [vmem:[#allocation5 + $0x3b0] sm:$0xff]
        %v623 = vld [vmem:[#allocation5 + $0x3b8] sm:$0xff]
        %v624 = vld [vmem:[#allocation5 + $0x3c0] sm:$0xff]
        %v625 = vld [vmem:[#allocation5 + $0x3c8] sm:$0xff]
        %v626 = vld [vmem:[#allocation5 + $0x3d0] sm:$0xff]
        %v627 = vld [vmem:[#allocation5 + $0x3d8] sm:$0xff]
        %v628 = vld [vmem:[#allocation5 + $0x3e0] sm:$0xff]
        %v629 = vld [vmem:[#allocation5 + $0x3e8] sm:$0xff]
        %v630 = vld [vmem:[#allocation5 + $0x3f0] sm:$0xff]
        %v631 = vld [vmem:[#allocation5 + $0x3f8] sm:$0xff]
        %v632 = vld [vmem:[#allocation7] sm:$0xff]
        %v634 = vlaneseq
        %v635 = vshrl.u32 %v634, 7
        %v636 = vsub.s32 0, %v635
        %v637 = vrot.slane %v632, %v636
        %v638 = vlaneseq
        %v639 = vshrl.u32 %v638, 7
        %v640 = vsub.s32 1, %v639
        %v641 = vrot.slane %v632, %v640
        %v642 = vlaneseq
        %v643 = vshrl.u32 %v642, 7
        %v644 = vsub.s32 2, %v643
        %v645 = vrot.slane %v632, %v644
        %v646 = vlaneseq
        %v647 = vshrl.u32 %v646, 7
        %v648 = vsub.s32 3, %v647
        %v649 = vrot.slane %v632, %v648
        %v650 = vlaneseq
        %v651 = vshrl.u32 %v650, 7
        %v652 = vsub.s32 4, %v651
        %v653 = vrot.slane %v632, %v652
        %v654 = vlaneseq
        %v655 = vshrl.u32 %v654, 7
        %v656 = vsub.s32 5, %v655
        %v657 = vrot.slane %v632, %v656
        %v658 = vlaneseq
        %v659 = vshrl.u32 %v658, 7
        %v660 = vsub.s32 6, %v659
        %v661 = vrot.slane %v632, %v660
        %v662 = vlaneseq
        %v663 = vshrl.u32 %v662, 7
        %v664 = vsub.s32 7, %v663
        %v665 = vrot.slane %v632, %v664
        %674 = vxpose.xlu0.c.b16.start [1/8] %v424, 128
        %675 = vxpose.xlu0.c.b16.cont [2/8] %v429, 128
        %676 = vxpose.xlu0.c.b16.cont [3/8] %v434, 128
        %677 = vxpose.xlu0.c.b16.cont [4/8] %v439, 128
        %678 = vxpose.xlu0.c.b16.cont [5/8] %v444, 128
        %679 = vxpose.xlu0.c.b16.cont [6/8] %v449, 128
        %680 = vxpose.xlu0.c.b16.cont [7/8] %v454, 128
        %681 = vxpose.xlu0.c.b16.end [8/8] %v459, 128
        %v682 = vpop.trf.xlu0
        %v683 = vpop.trf.xlu0
        %v684 = vpop.trf.xlu0
        %v685 = vpop.trf.xlu0
        %v686 = vpop.trf.xlu0
        %v687 = vpop.trf.xlu0
        %v688 = vpop.trf.xlu0
        %v689 = vpop.trf.xlu0
        %690 = vxpose.xlu0.c.b16.start [1/8] %v425, 128
        %691 = vxpose.xlu0.c.b16.cont [2/8] %v430, 128
        %692 = vxpose.xlu0.c.b16.cont [3/8] %v435, 128
        %693 = vxpose.xlu0.c.b16.cont [4/8] %v440, 128
        %694 = vxpose.xlu0.c.b16.cont [5/8] %v445, 128
        %695 = vxpose.xlu0.c.b16.cont [6/8] %v450, 128
        %696 = vxpose.xlu0.c.b16.cont [7/8] %v455, 128
        %697 = vxpose.xlu0.c.b16.end [8/8] %v460, 128
        %v698 = vpop.trf.xlu0
        %v699 = vpop.trf.xlu0
        %v700 = vpop.trf.xlu0
        %v701 = vpop.trf.xlu0
        %v702 = vpop.trf.xlu0
        %v703 = vpop.trf.xlu0
        %v704 = vpop.trf.xlu0
        %v705 = vpop.trf.xlu0
        %706 = vxpose.xlu0.c.b16.start [1/8] %v426, 128
        %707 = vxpose.xlu0.c.b16.cont [2/8] %v431, 128
        %708 = vxpose.xlu0.c.b16.cont [3/8] %v436, 128
        %709 = vxpose.xlu0.c.b16.cont [4/8] %v441, 128
        %710 = vxpose.xlu0.c.b16.cont [5/8] %v446, 128
        %711 = vxpose.xlu0.c.b16.cont [6/8] %v451, 128
        %712 = vxpose.xlu0.c.b16.cont [7/8] %v456, 128
        %713 = vxpose.xlu0.c.b16.end [8/8] %v461, 128
        %v714 = vpop.trf.xlu0
        %v715 = vpop.trf.xlu0
        %v716 = vpop.trf.xlu0
        %v717 = vpop.trf.xlu0
        %v718 = vpop.trf.xlu0
        %v719 = vpop.trf.xlu0
        %v720 = vpop.trf.xlu0
        %v721 = vpop.trf.xlu0
        %722 = vxpose.xlu0.c.b16.start [1/8] %v427, 128
        %723 = vxpose.xlu0.c.b16.cont [2/8] %v432, 128
        %724 = vxpose.xlu0.c.b16.cont [3/8] %v437, 128
        %725 = vxpose.xlu0.c.b16.cont [4/8] %v442, 128
        %726 = vxpose.xlu0.c.b16.cont [5/8] %v447, 128
        %727 = vxpose.xlu0.c.b16.cont [6/8] %v452, 128
        %728 = vxpose.xlu0.c.b16.cont [7/8] %v457, 128
        %729 = vxpose.xlu0.c.b16.end [8/8] %v462, 128
        %v730 = vpop.trf.xlu0
        %v731 = vpop.trf.xlu0
        %v732 = vpop.trf.xlu0
        %v733 = vpop.trf.xlu0
        %v734 = vpop.trf.xlu0
        %v735 = vpop.trf.xlu0
        %v736 = vpop.trf.xlu0
        %v737 = vpop.trf.xlu0
        %738 = vxpose.xlu0.c.b16.start [1/8] %v428, 128
        %739 = vxpose.xlu0.c.b16.cont [2/8] %v433, 128
        %740 = vxpose.xlu0.c.b16.cont [3/8] %v438, 128
        %741 = vxpose.xlu0.c.b16.cont [4/8] %v443, 128
        %742 = vxpose.xlu0.c.b16.cont [5/8] %v448, 128
        %743 = vxpose.xlu0.c.b16.cont [6/8] %v453, 128
        %744 = vxpose.xlu0.c.b16.cont [7/8] %v458, 128
        %745 = vxpose.xlu0.c.b16.end [8/8] %v463, 128
        %v746 = vpop.trf.xlu0
        %v747 = vpop.trf.xlu0
        %v748 = vpop.trf.xlu0
        %v749 = vpop.trf.xlu0
        %v750 = vpop.trf.xlu0
        %v751 = vpop.trf.xlu0
        %v752 = vpop.trf.xlu0
        %v753 = vpop.trf.xlu0
        %754 = vxpose.xlu0.c.b16.start [1/8] %v464, 128
        %755 = vxpose.xlu0.c.b16.cont [2/8] %v469, 128
        %756 = vxpose.xlu0.c.b16.cont [3/8] %v474, 128
        %757 = vxpose.xlu0.c.b16.cont [4/8] %v479, 128
        %758 = vxpose.xlu0.c.b16.cont [5/8] %v484, 128
        %759 = vxpose.xlu0.c.b16.cont [6/8] %v489, 128
        %760 = vxpose.xlu0.c.b16.cont [7/8] %v494, 128
        %761 = vxpose.xlu0.c.b16.end [8/8] %v499, 128
        %v762 = vpop.trf.xlu0
        %v763 = vpop.trf.xlu0
        %v764 = vpop.trf.xlu0
        %v765 = vpop.trf.xlu0
        %v766 = vpop.trf.xlu0
        %v767 = vpop.trf.xlu0
        %v768 = vpop.trf.xlu0
        %v769 = vpop.trf.xlu0
        %770 = vxpose.xlu0.c.b16.start [1/8] %v465, 128
        %771 = vxpose.xlu0.c.b16.cont [2/8] %v470, 128
        %772 = vxpose.xlu0.c.b16.cont [3/8] %v475, 128
        %773 = vxpose.xlu0.c.b16.cont [4/8] %v480, 128
        %774 = vxpose.xlu0.c.b16.cont [5/8] %v485, 128
        %775 = vxpose.xlu0.c.b16.cont [6/8] %v490, 128
        %776 = vxpose.xlu0.c.b16.cont [7/8] %v495, 128
        %777 = vxpose.xlu0.c.b16.end [8/8] %v500, 128
        %v778 = vpop.trf.xlu0
        %v779 = vpop.trf.xlu0
        %v780 = vpop.trf.xlu0
        %v781 = vpop.trf.xlu0
        %v782 = vpop.trf.xlu0
        %v783 = vpop.trf.xlu0
        %v784 = vpop.trf.xlu0
        %v785 = vpop.trf.xlu0
        %786 = vxpose.xlu0.c.b16.start [1/8] %v466, 128
        %787 = vxpose.xlu0.c.b16.cont [2/8] %v471, 128
        %788 = vxpose.xlu0.c.b16.cont [3/8] %v476, 128
        %789 = vxpose.xlu0.c.b16.cont [4/8] %v481, 128
        %790 = vxpose.xlu0.c.b16.cont [5/8] %v486, 128
        %791 = vxpose.xlu0.c.b16.cont [6/8] %v491, 128
        %792 = vxpose.xlu0.c.b16.cont [7/8] %v496, 128
        %793 = vxpose.xlu0.c.b16.end [8/8] %v501, 128
        %v794 = vpop.trf.xlu0
        %v795 = vpop.trf.xlu0
        %v796 = vpop.trf.xlu0
        %v797 = vpop.trf.xlu0
        %v798 = vpop.trf.xlu0
        %v799 = vpop.trf.xlu0
        %v800 = vpop.trf.xlu0
        %v801 = vpop.trf.xlu0
        %802 = vxpose.xlu0.c.b16.start [1/8] %v467, 128
        %803 = vxpose.xlu0.c.b16.cont [2/8] %v472, 128
        %804 = vxpose.xlu0.c.b16.cont [3/8] %v477, 128
        %805 = vxpose.xlu0.c.b16.cont [4/8] %v482, 128
        %806 = vxpose.xlu0.c.b16.cont [5/8] %v487, 128
        %807 = vxpose.xlu0.c.b16.cont [6/8] %v492, 128
        %808 = vxpose.xlu0.c.b16.cont [7/8] %v497, 128
        %809 = vxpose.xlu0.c.b16.end [8/8] %v502, 128
        %v810 = vpop.trf.xlu0
        %v811 = vpop.trf.xlu0
        %v812 = vpop.trf.xlu0
        %v813 = vpop.trf.xlu0
        %v814 = vpop.trf.xlu0
        %v815 = vpop.trf.xlu0
        %v816 = vpop.trf.xlu0
        %v817 = vpop.trf.xlu0
        %818 = vxpose.xlu0.c.b16.start [1/8] %v468, 128
        %819 = vxpose.xlu0.c.b16.cont [2/8] %v473, 128
        %820 = vxpose.xlu0.c.b16.cont [3/8] %v478, 128
        %821 = vxpose.xlu0.c.b16.cont [4/8] %v483, 128
        %822 = vxpose.xlu0.c.b16.cont [5/8] %v488, 128
        %823 = vxpose.xlu0.c.b16.cont [6/8] %v493, 128
        %824 = vxpose.xlu0.c.b16.cont [7/8] %v498, 128
        %825 = vxpose.xlu0.c.b16.end [8/8] %v503, 128
        %v826 = vpop.trf.xlu0
        %v827 = vpop.trf.xlu0
        %v828 = vpop.trf.xlu0
        %v829 = vpop.trf.xlu0
        %v830 = vpop.trf.xlu0
        %v831 = vpop.trf.xlu0
        %v832 = vpop.trf.xlu0
        %v833 = vpop.trf.xlu0
        %v962 = vunpack.c.l.b16 %v504
        %v963 = vunpack.c.h.b16 %v504
        %v964 = vunpack.c.l.b16 %v505
        %v965 = vunpack.c.h.b16 %v505
        %v966 = vunpack.c.l.b16 %v506
        %v967 = vunpack.c.h.b16 %v506
        %v968 = vunpack.c.l.b16 %v507
        %v969 = vunpack.c.h.b16 %v507
        %v970 = vunpack.c.l.b16 %v508
        %v971 = vunpack.c.h.b16 %v508
        %v972 = vunpack.c.l.b16 %v509
        %v973 = vunpack.c.h.b16 %v509
        %v974 = vunpack.c.l.b16 %v510
        %v975 = vunpack.c.h.b16 %v510
        %v976 = vunpack.c.l.b16 %v511
        %v977 = vunpack.c.h.b16 %v511
        %v978 = vunpack.c.l.b16 %v512
        %v979 = vunpack.c.h.b16 %v512
        %v980 = vunpack.c.l.b16 %v513
        %v981 = vunpack.c.h.b16 %v513
        %v982 = vunpack.c.l.b16 %v514
        %v983 = vunpack.c.h.b16 %v514
        %v984 = vunpack.c.l.b16 %v515
        %v985 = vunpack.c.h.b16 %v515
        %v986 = vunpack.c.l.b16 %v516
        %v987 = vunpack.c.h.b16 %v516
        %v988 = vunpack.c.l.b16 %v517
        %v989 = vunpack.c.h.b16 %v517
        %v990 = vunpack.c.l.b16 %v518
        %v991 = vunpack.c.h.b16 %v518
        %v992 = vunpack.c.l.b16 %v519
        %v993 = vunpack.c.h.b16 %v519
        %v994 = vunpack.c.l.b16 %v520
        %v995 = vunpack.c.h.b16 %v520
        %v996 = vunpack.c.l.b16 %v521
        %v997 = vunpack.c.h.b16 %v521
        %v998 = vunpack.c.l.b16 %v522
        %v999 = vunpack.c.h.b16 %v522
        %v1000 = vunpack.c.l.b16 %v523
        %v1001 = vunpack.c.h.b16 %v523
        %v1002 = vunpack.c.l.b16 %v524
        %v1003 = vunpack.c.h.b16 %v524
        %v1004 = vunpack.c.l.b16 %v525
        %v1005 = vunpack.c.h.b16 %v525
        %v1006 = vunpack.c.l.b16 %v526
        %v1007 = vunpack.c.h.b16 %v526
        %v1008 = vunpack.c.l.b16 %v527
        %v1009 = vunpack.c.h.b16 %v527
        %v1010 = vunpack.c.l.b16 %v528
        %v1011 = vunpack.c.h.b16 %v528
        %v1012 = vunpack.c.l.b16 %v529
        %v1013 = vunpack.c.h.b16 %v529
        %v1014 = vunpack.c.l.b16 %v530
        %v1015 = vunpack.c.h.b16 %v530
        %v1016 = vunpack.c.l.b16 %v531
        %v1017 = vunpack.c.h.b16 %v531
        %v1018 = vunpack.c.l.b16 %v532
        %v1019 = vunpack.c.h.b16 %v532
        %v1020 = vunpack.c.l.b16 %v533
        %v1021 = vunpack.c.h.b16 %v533
        %v1022 = vunpack.c.l.b16 %v534
        %v1023 = vunpack.c.h.b16 %v534
        %v1024 = vunpack.c.l.b16 %v535
        %v1025 = vunpack.c.h.b16 %v535
        %v1026 = vunpack.c.l.b16 %v536
        %v1027 = vunpack.c.h.b16 %v536
        %v1028 = vunpack.c.l.b16 %v537
        %v1029 = vunpack.c.h.b16 %v537
        %v1030 = vunpack.c.l.b16 %v538
        %v1031 = vunpack.c.h.b16 %v538
        %v1032 = vunpack.c.l.b16 %v539
        %v1033 = vunpack.c.h.b16 %v539
        %v1034 = vunpack.c.l.b16 %v540
        %v1035 = vunpack.c.h.b16 %v540
        %v1036 = vunpack.c.l.b16 %v541
        %v1037 = vunpack.c.h.b16 %v541
        %v1038 = vunpack.c.l.b16 %v542
        %v1039 = vunpack.c.h.b16 %v542
        %v1040 = vunpack.c.l.b16 %v543
        %v1041 = vunpack.c.h.b16 %v543
        %v1042 = vunpack.c.l.b16 %v544
        %v1043 = vunpack.c.h.b16 %v544
        %v1044 = vunpack.c.l.b16 %v545
        %v1045 = vunpack.c.h.b16 %v545
        %v1046 = vunpack.c.l.b16 %v546
        %v1047 = vunpack.c.h.b16 %v546
        %v1048 = vunpack.c.l.b16 %v547
        %v1049 = vunpack.c.h.b16 %v547
        %v1050 = vunpack.c.l.b16 %v548
        %v1051 = vunpack.c.h.b16 %v548
        %v1052 = vunpack.c.l.b16 %v549
        %v1053 = vunpack.c.h.b16 %v549
        %v1054 = vunpack.c.l.b16 %v550
        %v1055 = vunpack.c.h.b16 %v550
        %v1056 = vunpack.c.l.b16 %v551
        %v1057 = vunpack.c.h.b16 %v551
        %v1058 = vunpack.c.l.b16 %v552
        %v1059 = vunpack.c.h.b16 %v552
        %v1060 = vunpack.c.l.b16 %v553
        %v1061 = vunpack.c.h.b16 %v553
        %v1062 = vunpack.c.l.b16 %v554
        %v1063 = vunpack.c.h.b16 %v554
        %v1064 = vunpack.c.l.b16 %v555
        %v1065 = vunpack.c.h.b16 %v555
        %v1066 = vunpack.c.l.b16 %v556
        %v1067 = vunpack.c.h.b16 %v556
        %v1068 = vunpack.c.l.b16 %v557
        %v1069 = vunpack.c.h.b16 %v557
        %v1070 = vunpack.c.l.b16 %v558
        %v1071 = vunpack.c.h.b16 %v558
        %v1072 = vunpack.c.l.b16 %v559
        %v1073 = vunpack.c.h.b16 %v559
        %v1074 = vunpack.c.l.b16 %v560
        %v1075 = vunpack.c.h.b16 %v560
        %v1076 = vunpack.c.l.b16 %v561
        %v1077 = vunpack.c.h.b16 %v561
        %v1078 = vunpack.c.l.b16 %v562
        %v1079 = vunpack.c.h.b16 %v562
        %v1080 = vunpack.c.l.b16 %v563
        %v1081 = vunpack.c.h.b16 %v563
        %v1082 = vunpack.c.l.b16 %v564
        %v1083 = vunpack.c.h.b16 %v564
        %v1084 = vunpack.c.l.b16 %v565
        %v1085 = vunpack.c.h.b16 %v565
        %v1086 = vunpack.c.l.b16 %v566
        %v1087 = vunpack.c.h.b16 %v566
        %v1088 = vunpack.c.l.b16 %v567
        %v1089 = vunpack.c.h.b16 %v567
        %v1090 = vunpack.c.l.b16 %v568
        %v1091 = vunpack.c.h.b16 %v568
        %v1092 = vunpack.c.l.b16 %v569
        %v1093 = vunpack.c.h.b16 %v569
        %v1094 = vunpack.c.l.b16 %v570
        %v1095 = vunpack.c.h.b16 %v570
        %v1096 = vunpack.c.l.b16 %v571
        %v1097 = vunpack.c.h.b16 %v571
        %v1098 = vunpack.c.l.b16 %v572
        %v1099 = vunpack.c.h.b16 %v572
        %v1100 = vunpack.c.l.b16 %v573
        %v1101 = vunpack.c.h.b16 %v573
        %v1102 = vunpack.c.l.b16 %v574
        %v1103 = vunpack.c.h.b16 %v574
        %v1104 = vunpack.c.l.b16 %v575
        %v1105 = vunpack.c.h.b16 %v575
        %v1106 = vunpack.c.l.b16 %v576
        %v1107 = vunpack.c.h.b16 %v576
        %v1108 = vunpack.c.l.b16 %v577
        %v1109 = vunpack.c.h.b16 %v577
        %v1110 = vunpack.c.l.b16 %v578
        %v1111 = vunpack.c.h.b16 %v578
        %v1112 = vunpack.c.l.b16 %v579
        %v1113 = vunpack.c.h.b16 %v579
        %v1114 = vunpack.c.l.b16 %v580
        %v1115 = vunpack.c.h.b16 %v580
        %v1116 = vunpack.c.l.b16 %v581
        %v1117 = vunpack.c.h.b16 %v581
        %v1118 = vunpack.c.l.b16 %v582
        %v1119 = vunpack.c.h.b16 %v582
        %v1120 = vunpack.c.l.b16 %v583
        %v1121 = vunpack.c.h.b16 %v583
        %v1122 = vunpack.c.l.b16 %v584
        %v1123 = vunpack.c.h.b16 %v584
        %v1124 = vunpack.c.l.b16 %v585
        %v1125 = vunpack.c.h.b16 %v585
        %v1126 = vunpack.c.l.b16 %v586
        %v1127 = vunpack.c.h.b16 %v586
        %v1128 = vunpack.c.l.b16 %v587
        %v1129 = vunpack.c.h.b16 %v587
        %v1130 = vunpack.c.l.b16 %v588
        %v1131 = vunpack.c.h.b16 %v588
        %v1132 = vunpack.c.l.b16 %v589
        %v1133 = vunpack.c.h.b16 %v589
        %v1134 = vunpack.c.l.b16 %v590
        %v1135 = vunpack.c.h.b16 %v590
        %v1136 = vunpack.c.l.b16 %v591
        %v1137 = vunpack.c.h.b16 %v591
        %v1138 = vunpack.c.l.b16 %v592
        %v1139 = vunpack.c.h.b16 %v592
        %v1140 = vunpack.c.l.b16 %v593
        %v1141 = vunpack.c.h.b16 %v593
        %v1142 = vunpack.c.l.b16 %v594
        %v1143 = vunpack.c.h.b16 %v594
        %v1144 = vunpack.c.l.b16 %v595
        %v1145 = vunpack.c.h.b16 %v595
        %v1146 = vunpack.c.l.b16 %v596
        %v1147 = vunpack.c.h.b16 %v596
        %v1148 = vunpack.c.l.b16 %v597
        %v1149 = vunpack.c.h.b16 %v597
        %v1150 = vunpack.c.l.b16 %v598
        %v1151 = vunpack.c.h.b16 %v598
        %v1152 = vunpack.c.l.b16 %v599
        %v1153 = vunpack.c.h.b16 %v599
        %v1154 = vunpack.c.l.b16 %v600
        %v1155 = vunpack.c.h.b16 %v600
        %v1156 = vunpack.c.l.b16 %v601
        %v1157 = vunpack.c.h.b16 %v601
        %v1158 = vunpack.c.l.b16 %v602
        %v1159 = vunpack.c.h.b16 %v602
        %v1160 = vunpack.c.l.b16 %v603
        %v1161 = vunpack.c.h.b16 %v603
        %v1162 = vunpack.c.l.b16 %v604
        %v1163 = vunpack.c.h.b16 %v604
        %v1164 = vunpack.c.l.b16 %v605
        %v1165 = vunpack.c.h.b16 %v605
        %v1166 = vunpack.c.l.b16 %v606
        %v1167 = vunpack.c.h.b16 %v606
        %v1168 = vunpack.c.l.b16 %v607
        %v1169 = vunpack.c.h.b16 %v607
        %v1170 = vunpack.c.l.b16 %v608
        %v1171 = vunpack.c.h.b16 %v608
        %v1172 = vunpack.c.l.b16 %v609
        %v1173 = vunpack.c.h.b16 %v609
        %v1174 = vunpack.c.l.b16 %v610
        %v1175 = vunpack.c.h.b16 %v610
        %v1176 = vunpack.c.l.b16 %v611
        %v1177 = vunpack.c.h.b16 %v611
        %v1178 = vunpack.c.l.b16 %v612
        %v1179 = vunpack.c.h.b16 %v612
        %v1180 = vunpack.c.l.b16 %v613
        %v1181 = vunpack.c.h.b16 %v613
        %v1182 = vunpack.c.l.b16 %v614
        %v1183 = vunpack.c.h.b16 %v614
        %v1184 = vunpack.c.l.b16 %v615
        %v1185 = vunpack.c.h.b16 %v615
        %v1186 = vunpack.c.l.b16 %v616
        %v1187 = vunpack.c.h.b16 %v616
        %v1188 = vunpack.c.l.b16 %v617
        %v1189 = vunpack.c.h.b16 %v617
        %v1190 = vunpack.c.l.b16 %v618
        %v1191 = vunpack.c.h.b16 %v618
        %v1192 = vunpack.c.l.b16 %v619
        %v1193 = vunpack.c.h.b16 %v619
        %v1194 = vunpack.c.l.b16 %v620
        %v1195 = vunpack.c.h.b16 %v620
        %v1196 = vunpack.c.l.b16 %v621
        %v1197 = vunpack.c.h.b16 %v621
        %v1198 = vunpack.c.l.b16 %v622
        %v1199 = vunpack.c.h.b16 %v622
        %v1200 = vunpack.c.l.b16 %v623
        %v1201 = vunpack.c.h.b16 %v623
        %v1202 = vunpack.c.l.b16 %v624
        %v1203 = vunpack.c.h.b16 %v624
        %v1204 = vunpack.c.l.b16 %v625
        %v1205 = vunpack.c.h.b16 %v625
        %v1206 = vunpack.c.l.b16 %v626
        %v1207 = vunpack.c.h.b16 %v626
        %v1208 = vunpack.c.l.b16 %v627
        %v1209 = vunpack.c.h.b16 %v627
        %v1210 = vunpack.c.l.b16 %v628
        %v1211 = vunpack.c.h.b16 %v628
        %v1212 = vunpack.c.l.b16 %v629
        %v1213 = vunpack.c.h.b16 %v629
        %v1214 = vunpack.c.l.b16 %v630
        %v1215 = vunpack.c.h.b16 %v630
        %v1216 = vunpack.c.l.b16 %v631
        %v1217 = vunpack.c.h.b16 %v631
        %v1218 = vpack.c.b16 %v970, %v962
        %v1219 = vpack.c.b16 %v971, %v963
        %v1220 = vpack.c.b16 %v972, %v964
        %v1221 = vpack.c.b16 %v973, %v965
        %v1222 = vpack.c.b16 %v974, %v966
        %v1223 = vpack.c.b16 %v975, %v967
        %v1224 = vpack.c.b16 %v976, %v968
        %v1225 = vpack.c.b16 %v977, %v969
        %v1226 = vpack.c.b16 %v986, %v978
        %v1227 = vpack.c.b16 %v987, %v979
        %v1228 = vpack.c.b16 %v988, %v980
        %v1229 = vpack.c.b16 %v989, %v981
        %v1230 = vpack.c.b16 %v990, %v982
        %v1231 = vpack.c.b16 %v991, %v983
        %v1232 = vpack.c.b16 %v992, %v984
        %v1233 = vpack.c.b16 %v993, %v985
        %v1234 = vpack.c.b16 %v1002, %v994
        %v1235 = vpack.c.b16 %v1003, %v995
        %v1236 = vpack.c.b16 %v1004, %v996
        %v1237 = vpack.c.b16 %v1005, %v997
        %v1238 = vpack.c.b16 %v1006, %v998
        %v1239 = vpack.c.b16 %v1007, %v999
        %v1240 = vpack.c.b16 %v1008, %v1000
        %v1241 = vpack.c.b16 %v1009, %v1001
        %v1242 = vpack.c.b16 %v1018, %v1010
        %v1243 = vpack.c.b16 %v1019, %v1011
        %v1244 = vpack.c.b16 %v1020, %v1012
        %v1245 = vpack.c.b16 %v1021, %v1013
        %v1246 = vpack.c.b16 %v1022, %v1014
        %v1247 = vpack.c.b16 %v1023, %v1015
        %v1248 = vpack.c.b16 %v1024, %v1016
        %v1249 = vpack.c.b16 %v1025, %v1017
        %v1250 = vpack.c.b16 %v1034, %v1026
        %v1251 = vpack.c.b16 %v1035, %v1027
        %v1252 = vpack.c.b16 %v1036, %v1028
        %v1253 = vpack.c.b16 %v1037, %v1029
        %v1254 = vpack.c.b16 %v1038, %v1030
        %v1255 = vpack.c.b16 %v1039, %v1031
        %v1256 = vpack.c.b16 %v1040, %v1032
        %v1257 = vpack.c.b16 %v1041, %v1033
        %v1258 = vpack.c.b16 %v1050, %v1042
        %v1259 = vpack.c.b16 %v1051, %v1043
        %v1260 = vpack.c.b16 %v1052, %v1044
        %v1261 = vpack.c.b16 %v1053, %v1045
        %v1262 = vpack.c.b16 %v1054, %v1046
        %v1263 = vpack.c.b16 %v1055, %v1047
        %v1264 = vpack.c.b16 %v1056, %v1048
        %v1265 = vpack.c.b16 %v1057, %v1049
        %v1266 = vpack.c.b16 %v1066, %v1058
        %v1267 = vpack.c.b16 %v1067, %v1059
        %v1268 = vpack.c.b16 %v1068, %v1060
        %v1269 = vpack.c.b16 %v1069, %v1061
        %v1270 = vpack.c.b16 %v1070, %v1062
        %v1271 = vpack.c.b16 %v1071, %v1063
        %v1272 = vpack.c.b16 %v1072, %v1064
        %v1273 = vpack.c.b16 %v1073, %v1065
        %v1274 = vpack.c.b16 %v1082, %v1074
        %v1275 = vpack.c.b16 %v1083, %v1075
        %v1276 = vpack.c.b16 %v1084, %v1076
        %v1277 = vpack.c.b16 %v1085, %v1077
        %v1278 = vpack.c.b16 %v1086, %v1078
        %v1279 = vpack.c.b16 %v1087, %v1079
        %v1280 = vpack.c.b16 %v1088, %v1080
        %v1281 = vpack.c.b16 %v1089, %v1081
        %v1282 = vpack.c.b16 %v1098, %v1090
        %v1283 = vpack.c.b16 %v1099, %v1091
        %v1284 = vpack.c.b16 %v1100, %v1092
        %v1285 = vpack.c.b16 %v1101, %v1093
        %v1286 = vpack.c.b16 %v1102, %v1094
        %v1287 = vpack.c.b16 %v1103, %v1095
        %v1288 = vpack.c.b16 %v1104, %v1096
        %v1289 = vpack.c.b16 %v1105, %v1097
        %v1290 = vpack.c.b16 %v1114, %v1106
        %v1291 = vpack.c.b16 %v1115, %v1107
        %v1292 = vpack.c.b16 %v1116, %v1108
        %v1293 = vpack.c.b16 %v1117, %v1109
        %v1294 = vpack.c.b16 %v1118, %v1110
        %v1295 = vpack.c.b16 %v1119, %v1111
        %v1296 = vpack.c.b16 %v1120, %v1112
        %v1297 = vpack.c.b16 %v1121, %v1113
        %v1298 = vpack.c.b16 %v1130, %v1122
        %v1299 = vpack.c.b16 %v1131, %v1123
        %v1300 = vpack.c.b16 %v1132, %v1124
        %v1301 = vpack.c.b16 %v1133, %v1125
        %v1302 = vpack.c.b16 %v1134, %v1126
        %v1303 = vpack.c.b16 %v1135, %v1127
        %v1304 = vpack.c.b16 %v1136, %v1128
        %v1305 = vpack.c.b16 %v1137, %v1129
        %v1306 = vpack.c.b16 %v1146, %v1138
        %v1307 = vpack.c.b16 %v1147, %v1139
        %v1308 = vpack.c.b16 %v1148, %v1140
        %v1309 = vpack.c.b16 %v1149, %v1141
        %v1310 = vpack.c.b16 %v1150, %v1142
        %v1311 = vpack.c.b16 %v1151, %v1143
        %v1312 = vpack.c.b16 %v1152, %v1144
        %v1313 = vpack.c.b16 %v1153, %v1145
        %v1314 = vpack.c.b16 %v1162, %v1154
        %v1315 = vpack.c.b16 %v1163, %v1155
        %v1316 = vpack.c.b16 %v1164, %v1156
        %v1317 = vpack.c.b16 %v1165, %v1157
        %v1318 = vpack.c.b16 %v1166, %v1158
        %v1319 = vpack.c.b16 %v1167, %v1159
        %v1320 = vpack.c.b16 %v1168, %v1160
        %v1321 = vpack.c.b16 %v1169, %v1161
        %v1322 = vpack.c.b16 %v1178, %v1170
        %v1323 = vpack.c.b16 %v1179, %v1171
        %v1324 = vpack.c.b16 %v1180, %v1172
        %v1325 = vpack.c.b16 %v1181, %v1173
        %v1326 = vpack.c.b16 %v1182, %v1174
        %v1327 = vpack.c.b16 %v1183, %v1175
        %v1328 = vpack.c.b16 %v1184, %v1176
        %v1329 = vpack.c.b16 %v1185, %v1177
        %v1330 = vpack.c.b16 %v1194, %v1186
        %v1331 = vpack.c.b16 %v1195, %v1187
        %v1332 = vpack.c.b16 %v1196, %v1188
        %v1333 = vpack.c.b16 %v1197, %v1189
        %v1334 = vpack.c.b16 %v1198, %v1190
        %v1335 = vpack.c.b16 %v1199, %v1191
        %v1336 = vpack.c.b16 %v1200, %v1192
        %v1337 = vpack.c.b16 %v1201, %v1193
        %v1338 = vpack.c.b16 %v1210, %v1202
        %v1339 = vpack.c.b16 %v1211, %v1203
        %v1340 = vpack.c.b16 %v1212, %v1204
        %v1341 = vpack.c.b16 %v1213, %v1205
        %v1342 = vpack.c.b16 %v1214, %v1206
        %v1343 = vpack.c.b16 %v1215, %v1207
        %v1344 = vpack.c.b16 %v1216, %v1208
        %v1345 = vpack.c.b16 %v1217, %v1209
        %1474 = vmatprep.subr.bf16.mxu0 %v1219
        %1475 = vmatpush1.bf16.msra.mxu0 %v1218
        %1476 = vmatprep.subr.bf16.mxu0 %v1227
        %1477 = vmatpush1.bf16.msra.mxu0 %v1226
        %1478 = vmatprep.subr.bf16.mxu0 %v1235
        %1479 = vmatpush1.bf16.msra.mxu0 %v1234
        %1480 = vmatprep.subr.bf16.mxu0 %v1243
        %1481 = vmatpush1.bf16.msra.mxu0 %v1242
        %1482 = vmatprep.subr.bf16.mxu0 %v1251
        %1483 = vmatpush1.bf16.msra.mxu0 %v1250
        %1484 = vmatprep.subr.bf16.mxu0 %v1259
        %1485 = vmatpush1.bf16.msra.mxu0 %v1258
        %1486 = vmatprep.subr.bf16.mxu0 %v1267
        %1487 = vmatpush1.bf16.msra.mxu0 %v1266
        %1488 = vmatprep.subr.bf16.mxu0 %v1275
        %1489 = vmatpush1.bf16.msra.mxu0 %v1274
        %1490 = vmatprep.subr.bf16.mxu0 %v1283
        %1491 = vmatpush1.bf16.msra.mxu0 %v1282
        %1492 = vmatprep.subr.bf16.mxu0 %v1291
        %1493 = vmatpush1.bf16.msra.mxu0 %v1290
        %1494 = vmatprep.subr.bf16.mxu0 %v1299
        %1495 = vmatpush1.bf16.msra.mxu0 %v1298
        %1496 = vmatprep.subr.bf16.mxu0 %v1307
        %1497 = vmatpush1.bf16.msra.mxu0 %v1306
        %1498 = vmatprep.subr.bf16.mxu0 %v1315
        %1499 = vmatpush1.bf16.msra.mxu0 %v1314
        %1500 = vmatprep.subr.bf16.mxu0 %v1323
        %1501 = vmatpush1.bf16.msra.mxu0 %v1322
        %1502 = vmatprep.subr.bf16.mxu0 %v1331
        %1503 = vmatpush1.bf16.msra.mxu0 %v1330
        %1504 = vmatprep.subr.bf16.mxu0 %v1339
        %1505 = vmatpush1.bf16.msra.mxu0 %v1338
        %1506 = vmatprep.mubr.bf16.mxu0 %v762
        %1507 = vmatmul.mubr.bf16.gmra.mrb[0].mxu0 %v682
        %v1508 = vpop.f32.mrb[0].mxu0
        %v1509 = vadd.f32 %v637, %v1508
        %v1510 = vpop.f32.mrb[0].mxu0
        %v1511 = vadd.f32 %v641, %v1510
        %v1512 = vpop.f32.mrb[0].mxu0
        %v1513 = vadd.f32 %v637, %v1512
        %v1514 = vpop.f32.mrb[0].mxu0
        %v1515 = vadd.f32 %v641, %v1514
        %1516 = vmatprep.mubr.bf16.mxu0 %v763
        %1517 = vmatmul.mubr.bf16.gmra.mrb[0].mxu0 %v683
        %v1518 = vpop.f32.mrb[0].mxu0
        %v1519 = vadd.f32 %v637, %v1518
        %v1520 = vpop.f32.mrb[0].mxu0
        %v1521 = vadd.f32 %v641, %v1520
        %v1522 = vpop.f32.mrb[0].mxu0
        %v1523 = vadd.f32 %v637, %v1522
        %v1524 = vpop.f32.mrb[0].mxu0
        %v1525 = vadd.f32 %v641, %v1524
        %1526 = vmatprep.mubr.bf16.mxu0 %v764
        %1527 = vmatmul.mubr.bf16.gmra.mrb[0].mxu0 %v684
        %v1528 = vpop.f32.mrb[0].mxu0
        %v1529 = vadd.f32 %v637, %v1528
        %v1530 = vpop.f32.mrb[0].mxu0
        %v1531 = vadd.f32 %v641, %v1530
        %v1532 = vpop.f32.mrb[0].mxu0
        %v1533 = vadd.f32 %v637, %v1532
        %v1534 = vpop.f32.mrb[0].mxu0
        %v1535 = vadd.f32 %v641, %v1534
        %1536 = vmatprep.mubr.bf16.mxu0 %v765
        %1537 = vmatmul.mubr.bf16.gmra.mrb[0].mxu0 %v685
        %v1538 = vpop.f32.mrb[0].mxu0
        %v1539 = vadd.f32 %v637, %v1538
        %v1540 = vpop.f32.mrb[0].mxu0
        %v1541 = vadd.f32 %v641, %v1540
        %v1542 = vpop.f32.mrb[0].mxu0
        %v1543 = vadd.f32 %v637, %v1542
        %v1544 = vpop.f32.mrb[0].mxu0
        %v1545 = vadd.f32 %v641, %v1544
        %1546 = vmatprep.mubr.bf16.mxu0 %v766
        %1547 = vmatmul.mubr.bf16.gmra.mrb[0].mxu0 %v686
        %v1548 = vpop.f32.mrb[0].mxu0
        %v1549 = vadd.f32 %v637, %v1548
        %v1550 = vpop.f32.mrb[0].mxu0
        %v1551 = vadd.f32 %v641, %v1550
        %v1552 = vpop.f32.mrb[0].mxu0
        %v1553 = vadd.f32 %v637, %v1552
        %v1554 = vpop.f32.mrb[0].mxu0
        %v1555 = vadd.f32 %v641, %v1554
        %1556 = vmatprep.mubr.bf16.mxu0 %v767
        %1557 = vmatmul.mubr.bf16.gmra.mrb[0].mxu0 %v687
        %v1558 = vpop.f32.mrb[0].mxu0
        %v1559 = vadd.f32 %v637, %v1558
        %v1560 = vpop.f32.mrb[0].mxu0
        %v1561 = vadd.f32 %v641, %v1560
        %v1562 = vpop.f32.mrb[0].mxu0
        %v1563 = vadd.f32 %v637, %v1562
        %v1564 = vpop.f32.mrb[0].mxu0
        %v1565 = vadd.f32 %v641, %v1564
        %1566 = vmatprep.mubr.bf16.mxu0 %v768
        %1567 = vmatmul.mubr.bf16.gmra.mrb[0].mxu0 %v688
        %v1568 = vpop.f32.mrb[0].mxu0
        %v1569 = vadd.f32 %v637, %v1568
        %v1570 = vpop.f32.mrb[0].mxu0
        %v1571 = vadd.f32 %v641, %v1570
        %v1572 = vpop.f32.mrb[0].mxu0
        %v1573 = vadd.f32 %v637, %v1572
        %v1574 = vpop.f32.mrb[0].mxu0
        %v1575 = vadd.f32 %v641, %v1574
        %1576 = vmatprep.mubr.bf16.mxu0 %v769
        %1577 = vmatmul.mubr.bf16.gmra.mrb[0].mxu0 %v689
        %v1578 = vpop.f32.mrb[0].mxu0
        %v1579 = vadd.f32 %v637, %v1578
        %v1580 = vpop.f32.mrb[0].mxu0
        %v1581 = vadd.f32 %v641, %v1580
        %v1582 = vpop.f32.mrb[0].mxu0
        %v1583 = vadd.f32 %v637, %v1582
        %v1584 = vpop.f32.mrb[0].mxu0
        %v1585 = vadd.f32 %v641, %v1584
        %1586 = vmatprep.mubr.bf16.mxu0 %v778
        %1587 = vmatmul.mubr.bf16.gmra.mrb[0].mxu0 %v698
        %v1588 = vpop.f32.mrb[0].mxu0
        %v1589 = vadd.f32 %v637, %v1588
        %v1590 = vpop.f32.mrb[0].mxu0
        %v1591 = vadd.f32 %v641, %v1590
        %v1592 = vpop.f32.mrb[0].mxu0
        %v1593 = vadd.f32 %v637, %v1592
        %v1594 = vpop.f32.mrb[0].mxu0
        %v1595 = vadd.f32 %v641, %v1594
        %1596 = vmatprep.mubr.bf16.mxu0 %v779
        %1597 = vmatmul.mubr.bf16.gmra.mrb[0].mxu0 %v699
        %v1598 = vpop.f32.mrb[0].mxu0
        %v1599 = vadd.f32 %v637, %v1598
        %v1600 = vpop.f32.mrb[0].mxu0
        %v1601 = vadd.f32 %v641, %v1600
        %v1602 = vpop.f32.mrb[0].mxu0
        %v1603 = vadd.f32 %v637, %v1602
        %v1604 = vpop.f32.mrb[0].mxu0
        %v1605 = vadd.f32 %v641, %v1604
        %1606 = vmatprep.mubr.bf16.mxu0 %v780
        %1607 = vmatmul.mubr.bf16.gmra.mrb[0].mxu0 %v700
        %v1608 = vpop.f32.mrb[0].mxu0
        %v1609 = vadd.f32 %v637, %v1608
        %v1610 = vpop.f32.mrb[0].mxu0
        %v1611 = vadd.f32 %v641, %v1610
        %v1612 = vpop.f32.mrb[0].mxu0
        %v1613 = vadd.f32 %v637, %v1612
        %v1614 = vpop.f32.mrb[0].mxu0
        %v1615 = vadd.f32 %v641, %v1614
        %1616 = vmatprep.mubr.bf16.mxu0 %v781
        %1617 = vmatmul.mubr.bf16.gmra.mrb[0].mxu0 %v701
        %v1618 = vpop.f32.mrb[0].mxu0
        %v1619 = vadd.f32 %v637, %v1618
        %v1620 = vpop.f32.mrb[0].mxu0
        %v1621 = vadd.f32 %v641, %v1620
        %v1622 = vpop.f32.mrb[0].mxu0
        %v1623 = vadd.f32 %v637, %v1622
        %v1624 = vpop.f32.mrb[0].mxu0
        %v1625 = vadd.f32 %v641, %v1624
        %1626 = vmatprep.mubr.bf16.mxu0 %v782
        %1627 = vmatmul.mubr.bf16.gmra.mrb[0].mxu0 %v702
        %v1628 = vpop.f32.mrb[0].mxu0
        %v1629 = vadd.f32 %v637, %v1628
        %v1630 = vpop.f32.mrb[0].mxu0
        %v1631 = vadd.f32 %v641, %v1630
        %v1632 = vpop.f32.mrb[0].mxu0
        %v1633 = vadd.f32 %v637, %v1632
        %v1634 = vpop.f32.mrb[0].mxu0
        %v1635 = vadd.f32 %v641, %v1634
        %1636 = vmatprep.mubr.bf16.mxu0 %v783
        %1637 = vmatmul.mubr.bf16.gmra.mrb[0].mxu0 %v703
        %v1638 = vpop.f32.mrb[0].mxu0
        %v1639 = vadd.f32 %v637, %v1638
        %v1640 = vpop.f32.mrb[0].mxu0
        %v1641 = vadd.f32 %v641, %v1640
        %v1642 = vpop.f32.mrb[0].mxu0
        %v1643 = vadd.f32 %v637, %v1642
        %v1644 = vpop.f32.mrb[0].mxu0
        %v1645 = vadd.f32 %v641, %v1644
        %1646 = vmatprep.mubr.bf16.mxu0 %v784
        %1647 = vmatmul.mubr.bf16.gmra.mrb[0].mxu0 %v704
        %v1648 = vpop.f32.mrb[0].mxu0
        %v1649 = vadd.f32 %v637, %v1648
        %v1650 = vpop.f32.mrb[0].mxu0
        %v1651 = vadd.f32 %v641, %v1650
        %v1652 = vpop.f32.mrb[0].mxu0
        %v1653 = vadd.f32 %v637, %v1652
        %v1654 = vpop.f32.mrb[0].mxu0
        %v1655 = vadd.f32 %v641, %v1654
        %1656 = vmatprep.mubr.bf16.mxu0 %v785
        %1657 = vmatmul.mubr.bf16.gmra.mrb[0].mxu0 %v705
        %v1658 = vpop.f32.mrb[0].mxu0
        %v1659 = vadd.f32 %v637, %v1658
        %v1660 = vpop.f32.mrb[0].mxu0
        %v1661 = vadd.f32 %v641, %v1660
        %v1662 = vpop.f32.mrb[0].mxu0
        %v1663 = vadd.f32 %v637, %v1662
        %v1664 = vpop.f32.mrb[0].mxu0
        %v1665 = vadd.f32 %v641, %v1664
        %1666 = vmatprep.mubr.bf16.mxu0 %v794
        %1667 = vmatmul.mubr.bf16.gmra.mrb[0].mxu0 %v714
        %v1668 = vpop.f32.mrb[0].mxu0
        %v1669 = vadd.f32 %v637, %v1668
        %v1670 = vpop.f32.mrb[0].mxu0
        %v1671 = vadd.f32 %v641, %v1670
        %v1672 = vpop.f32.mrb[0].mxu0
        %v1673 = vadd.f32 %v637, %v1672
        %v1674 = vpop.f32.mrb[0].mxu0
        %v1675 = vadd.f32 %v641, %v1674
        %1676 = vmatprep.mubr.bf16.mxu0 %v795
        %1677 = vmatmul.mubr.bf16.gmra.mrb[0].mxu0 %v715
        %v1678 = vpop.f32.mrb[0].mxu0
        %v1679 = vadd.f32 %v637, %v1678
        %v1680 = vpop.f32.mrb[0].mxu0
        %v1681 = vadd.f32 %v641, %v1680
        %v1682 = vpop.f32.mrb[0].mxu0
        %v1683 = vadd.f32 %v637, %v1682
        %v1684 = vpop.f32.mrb[0].mxu0
        %v1685 = vadd.f32 %v641, %v1684
        %1686 = vmatprep.mubr.bf16.mxu0 %v796
        %1687 = vmatmul.mubr.bf16.gmra.mrb[0].mxu0 %v716
        %v1688 = vpop.f32.mrb[0].mxu0
        %v1689 = vadd.f32 %v637, %v1688
        %v1690 = vpop.f32.mrb[0].mxu0
        %v1691 = vadd.f32 %v641, %v1690
        %v1692 = vpop.f32.mrb[0].mxu0
        %v1693 = vadd.f32 %v637, %v1692
        %v1694 = vpop.f32.mrb[0].mxu0
        %v1695 = vadd.f32 %v641, %v1694
        %1696 = vmatprep.mubr.bf16.mxu0 %v797
        %1697 = vmatmul.mubr.bf16.gmra.mrb[0].mxu0 %v717
        %v1698 = vpop.f32.mrb[0].mxu0
        %v1699 = vadd.f32 %v637, %v1698
        %v1700 = vpop.f32.mrb[0].mxu0
        %v1701 = vadd.f32 %v641, %v1700
        %v1702 = vpop.f32.mrb[0].mxu0
        %v1703 = vadd.f32 %v637, %v1702
        %v1704 = vpop.f32.mrb[0].mxu0
        %v1705 = vadd.f32 %v641, %v1704
        %1706 = vmatprep.mubr.bf16.mxu0 %v798
        %1707 = vmatmul.mubr.bf16.gmra.mrb[0].mxu0 %v718
        %v1708 = vpop.f32.mrb[0].mxu0
        %v1709 = vadd.f32 %v637, %v1708
        %v1710 = vpop.f32.mrb[0].mxu0
        %v1711 = vadd.f32 %v641, %v1710
        %v1712 = vpop.f32.mrb[0].mxu0
        %v1713 = vadd.f32 %v637, %v1712
        %v1714 = vpop.f32.mrb[0].mxu0
        %v1715 = vadd.f32 %v641, %v1714
        %1716 = vmatprep.mubr.bf16.mxu0 %v799
        %1717 = vmatmul.mubr.bf16.gmra.mrb[0].mxu0 %v719
        %v1718 = vpop.f32.mrb[0].mxu0
        %v1719 = vadd.f32 %v637, %v1718
        %v1720 = vpop.f32.mrb[0].mxu0
        %v1721 = vadd.f32 %v641, %v1720
        %v1722 = vpop.f32.mrb[0].mxu0
        %v1723 = vadd.f32 %v637, %v1722
        %v1724 = vpop.f32.mrb[0].mxu0
        %v1725 = vadd.f32 %v641, %v1724
        %1726 = vmatprep.mubr.bf16.mxu0 %v800
        %1727 = vmatmul.mubr.bf16.gmra.mrb[0].mxu0 %v720
        %v1728 = vpop.f32.mrb[0].mxu0
        %v1729 = vadd.f32 %v637, %v1728
        %v1730 = vpop.f32.mrb[0].mxu0
        %v1731 = vadd.f32 %v641, %v1730
        %v1732 = vpop.f32.mrb[0].mxu0
        %v1733 = vadd.f32 %v637, %v1732
        %v1734 = vpop.f32.mrb[0].mxu0
        %v1735 = vadd.f32 %v641, %v1734
        %1736 = vmatprep.mubr.bf16.mxu0 %v801
        %1737 = vmatmul.mubr.bf16.gmra.mrb[0].mxu0 %v721
        %v1738 = vpop.f32.mrb[0].mxu0
        %v1739 = vadd.f32 %v637, %v1738
        %v1740 = vpop.f32.mrb[0].mxu0
        %v1741 = vadd.f32 %v641, %v1740
        %v1742 = vpop.f32.mrb[0].mxu0
        %v1743 = vadd.f32 %v637, %v1742
        %v1744 = vpop.f32.mrb[0].mxu0
        %v1745 = vadd.f32 %v641, %v1744
        %1746 = vmatprep.mubr.bf16.mxu0 %v810
        %1747 = vmatmul.mubr.bf16.gmra.mrb[0].mxu0 %v730
        %v1748 = vpop.f32.mrb[0].mxu0
        %v1749 = vadd.f32 %v637, %v1748
        %v1750 = vpop.f32.mrb[0].mxu0
        %v1751 = vadd.f32 %v641, %v1750
        %v1752 = vpop.f32.mrb[0].mxu0
        %v1753 = vadd.f32 %v637, %v1752
        %v1754 = vpop.f32.mrb[0].mxu0
        %v1755 = vadd.f32 %v641, %v1754
        %1756 = vmatprep.mubr.bf16.mxu0 %v811
        %1757 = vmatmul.mubr.bf16.gmra.mrb[0].mxu0 %v731
        %v1758 = vpop.f32.mrb[0].mxu0
        %v1759 = vadd.f32 %v637, %v1758
        %v1760 = vpop.f32.mrb[0].mxu0
        %v1761 = vadd.f32 %v641, %v1760
        %v1762 = vpop.f32.mrb[0].mxu0
        %v1763 = vadd.f32 %v637, %v1762
        %v1764 = vpop.f32.mrb[0].mxu0
        %v1765 = vadd.f32 %v641, %v1764
        %1766 = vmatprep.mubr.bf16.mxu0 %v812
        %1767 = vmatmul.mubr.bf16.gmra.mrb[0].mxu0 %v732
        %v1768 = vpop.f32.mrb[0].mxu0
        %v1769 = vadd.f32 %v637, %v1768
        %v1770 = vpop.f32.mrb[0].mxu0
        %v1771 = vadd.f32 %v641, %v1770
        %v1772 = vpop.f32.mrb[0].mxu0
        %v1773 = vadd.f32 %v637, %v1772
        %v1774 = vpop.f32.mrb[0].mxu0
        %v1775 = vadd.f32 %v641, %v1774
        %1776 = vmatprep.mubr.bf16.mxu0 %v813
        %1777 = vmatmul.mubr.bf16.gmra.mrb[0].mxu0 %v733
        %v1778 = vpop.f32.mrb[0].mxu0
        %v1779 = vadd.f32 %v637, %v1778
        %v1780 = vpop.f32.mrb[0].mxu0
        %v1781 = vadd.f32 %v641, %v1780
        %v1782 = vpop.f32.mrb[0].mxu0
        %v1783 = vadd.f32 %v637, %v1782
        %v1784 = vpop.f32.mrb[0].mxu0
        %v1785 = vadd.f32 %v641, %v1784
        %1786 = vmatprep.mubr.bf16.mxu0 %v814
        %1787 = vmatmul.mubr.bf16.gmra.mrb[0].mxu0 %v734
        %v1788 = vpop.f32.mrb[0].mxu0
        %v1789 = vadd.f32 %v637, %v1788
        %v1790 = vpop.f32.mrb[0].mxu0
        %v1791 = vadd.f32 %v641, %v1790
        %v1792 = vpop.f32.mrb[0].mxu0
        %v1793 = vadd.f32 %v637, %v1792
        %v1794 = vpop.f32.mrb[0].mxu0
        %v1795 = vadd.f32 %v641, %v1794
        %1796 = vmatprep.mubr.bf16.mxu0 %v815
        %1797 = vmatmul.mubr.bf16.gmra.mrb[0].mxu0 %v735
        %v1798 = vpop.f32.mrb[0].mxu0
        %v1799 = vadd.f32 %v637, %v1798
        %v1800 = vpop.f32.mrb[0].mxu0
        %v1801 = vadd.f32 %v641, %v1800
        %v1802 = vpop.f32.mrb[0].mxu0
        %v1803 = vadd.f32 %v637, %v1802
        %v1804 = vpop.f32.mrb[0].mxu0
        %v1805 = vadd.f32 %v641, %v1804
        %1806 = vmatprep.mubr.bf16.mxu0 %v816
        %1807 = vmatmul.mubr.bf16.gmra.mrb[0].mxu0 %v736
        %v1808 = vpop.f32.mrb[0].mxu0
        %v1809 = vadd.f32 %v637, %v1808
        %v1810 = vpop.f32.mrb[0].mxu0
        %v1811 = vadd.f32 %v641, %v1810
        %v1812 = vpop.f32.mrb[0].mxu0
        %v1813 = vadd.f32 %v637, %v1812
        %v1814 = vpop.f32.mrb[0].mxu0
        %v1815 = vadd.f32 %v641, %v1814
        %1816 = vmatprep.mubr.bf16.mxu0 %v817
        %1817 = vmatmul.mubr.bf16.gmra.mrb[0].mxu0 %v737
        %v1818 = vpop.f32.mrb[0].mxu0
        %v1819 = vadd.f32 %v637, %v1818
        %v1820 = vpop.f32.mrb[0].mxu0
        %v1821 = vadd.f32 %v641, %v1820
        %v1822 = vpop.f32.mrb[0].mxu0
        %v1823 = vadd.f32 %v637, %v1822
        %v1824 = vpop.f32.mrb[0].mxu0
        %v1825 = vadd.f32 %v641, %v1824
        %1826 = vmatprep.mubr.bf16.mxu0 %v826
        %1827 = vmatmul.mubr.bf16.gmra.mrb[0].mxu0 %v746
        %v1828 = vpop.f32.mrb[0].mxu0
        %v1829 = vadd.f32 %v637, %v1828
        %v1830 = vpop.f32.mrb[0].mxu0
        %v1831 = vadd.f32 %v641, %v1830
        %v1832 = vpop.f32.mrb[0].mxu0
        %v1833 = vadd.f32 %v637, %v1832
        %v1834 = vpop.f32.mrb[0].mxu0
        %v1835 = vadd.f32 %v641, %v1834
        %1836 = vmatprep.mubr.bf16.mxu0 %v827
        %1837 = vmatmul.mubr.bf16.gmra.mrb[0].mxu0 %v747
        %v1838 = vpop.f32.mrb[0].mxu0
        %v1839 = vadd.f32 %v637, %v1838
        %v1840 = vpop.f32.mrb[0].mxu0
        %v1841 = vadd.f32 %v641, %v1840
        %v1842 = vpop.f32.mrb[0].mxu0
        %v1843 = vadd.f32 %v637, %v1842
        %v1844 = vpop.f32.mrb[0].mxu0
        %v1845 = vadd.f32 %v641, %v1844
        %1846 = vmatprep.mubr.bf16.mxu0 %v828
        %1847 = vmatmul.mubr.bf16.gmra.mrb[0].mxu0 %v748
        %v1848 = vpop.f32.mrb[0].mxu0
        %v1849 = vadd.f32 %v637, %v1848
        %v1850 = vpop.f32.mrb[0].mxu0
        %v1851 = vadd.f32 %v641, %v1850
        %v1852 = vpop.f32.mrb[0].mxu0
        %v1853 = vadd.f32 %v637, %v1852
        %v1854 = vpop.f32.mrb[0].mxu0
        %v1855 = vadd.f32 %v641, %v1854
        %1856 = vmatprep.mubr.bf16.mxu0 %v829
        %1857 = vmatmul.mubr.bf16.gmra.mrb[0].mxu0 %v749
        %v1858 = vpop.f32.mrb[0].mxu0
        %v1859 = vadd.f32 %v637, %v1858
        %v1860 = vpop.f32.mrb[0].mxu0
        %v1861 = vadd.f32 %v641, %v1860
        %v1862 = vpop.f32.mrb[0].mxu0
        %v1863 = vadd.f32 %v637, %v1862
        %v1864 = vpop.f32.mrb[0].mxu0
        %v1865 = vadd.f32 %v641, %v1864
        %1866 = vmatprep.mubr.bf16.mxu0 %v830
        %1867 = vmatmul.mubr.bf16.gmra.mrb[0].mxu0 %v750
        %v1868 = vpop.f32.mrb[0].mxu0
        %v1869 = vadd.f32 %v637, %v1868
        %v1870 = vpop.f32.mrb[0].mxu0
        %v1871 = vadd.f32 %v641, %v1870
        %v1872 = vpop.f32.mrb[0].mxu0
        %v1873 = vadd.f32 %v637, %v1872
        %v1874 = vpop.f32.mrb[0].mxu0
        %v1875 = vadd.f32 %v641, %v1874
        %1876 = vmatprep.mubr.bf16.mxu0 %v831
        %1877 = vmatmul.mubr.bf16.gmra.mrb[0].mxu0 %v751
        %v1878 = vpop.f32.mrb[0].mxu0
        %v1879 = vadd.f32 %v637, %v1878
        %v1880 = vpop.f32.mrb[0].mxu0
        %v1881 = vadd.f32 %v641, %v1880
        %v1882 = vpop.f32.mrb[0].mxu0
        %v1883 = vadd.f32 %v637, %v1882
        %v1884 = vpop.f32.mrb[0].mxu0
        %v1885 = vadd.f32 %v641, %v1884
        %1886 = vmatprep.mubr.bf16.mxu0 %v832
        %1887 = vmatmul.mubr.bf16.gmra.mrb[0].mxu0 %v752
        %v1888 = vpop.f32.mrb[0].mxu0
        %v1889 = vadd.f32 %v637, %v1888
        %v1890 = vpop.f32.mrb[0].mxu0
        %v1891 = vadd.f32 %v641, %v1890
        %v1892 = vpop.f32.mrb[0].mxu0
        %v1893 = vadd.f32 %v637, %v1892
        %v1894 = vpop.f32.mrb[0].mxu0
        %v1895 = vadd.f32 %v641, %v1894
        %1896 = vmatprep.mubr.bf16.mxu0 %v833
        %1897 = vmatmul.mubr.bf16.gmra.mrb[0].mxu0 %v753
        %v1898 = vpop.f32.mrb[0].mxu0
        %v1899 = vadd.f32 %v637, %v1898
        %v1900 = vpop.f32.mrb[0].mxu0
        %v1901 = vadd.f32 %v641, %v1900
        %v1902 = vpop.f32.mrb[0].mxu0
        %v1903 = vadd.f32 %v637, %v1902
        %v1904 = vpop.f32.mrb[0].mxu0
        %v1905 = vadd.f32 %v641, %v1904
        %1906 = vdwg.mxu0
        %1907 = vmatprep.subr.bf16.mxu0 %v1221
        %1908 = vmatpush1.bf16.msra.mxu0 %v1220
        %1909 = vmatprep.subr.bf16.mxu0 %v1229
        %1910 = vmatpush1.bf16.msra.mxu0 %v1228
        %1911 = vmatprep.subr.bf16.mxu0 %v1237
        %1912 = vmatpush1.bf16.msra.mxu0 %v1236
        %1913 = vmatprep.subr.bf16.mxu0 %v1245
        %1914 = vmatpush1.bf16.msra.mxu0 %v1244
        %1915 = vmatprep.subr.bf16.mxu0 %v1253
        %1916 = vmatpush1.bf16.msra.mxu0 %v1252
        %1917 = vmatprep.subr.bf16.mxu0 %v1261
        %1918 = vmatpush1.bf16.msra.mxu0 %v1260
        %1919 = vmatprep.subr.bf16.mxu0 %v1269
        %1920 = vmatpush1.bf16.msra.mxu0 %v1268
        %1921 = vmatprep.subr.bf16.mxu0 %v1277
        %1922 = vmatpush1.bf16.msra.mxu0 %v1276
        %1923 = vmatprep.subr.bf16.mxu0 %v1285
        %1924 = vmatpush1.bf16.msra.mxu0 %v1284
        %1925 = vmatprep.subr.bf16.mxu0 %v1293
        %1926 = vmatpush1.bf16.msra.mxu0 %v1292
        %1927 = vmatprep.subr.bf16.mxu0 %v1301
        %1928 = vmatpush1.bf16.msra.mxu0 %v1300
        %1929 = vmatprep.subr.bf16.mxu0 %v1309
        %1930 = vmatpush1.bf16.msra.mxu0 %v1308
        %1931 = vmatprep.subr.bf16.mxu0 %v1317
        %1932 = vmatpush1.bf16.msra.mxu0 %v1316
        %1933 = vmatprep.subr.bf16.mxu0 %v1325
        %1934 = vmatpush1.bf16.msra.mxu0 %v1324
        %1935 = vmatprep.subr.bf16.mxu0 %v1333
        %1936 = vmatpush1.bf16.msra.mxu0 %v1332
        %1937 = vmatprep.subr.bf16.mxu0 %v1341
        %1938 = vmatpush1.bf16.msra.mxu0 %v1340
        %1939 = vmatprep.mubr.bf16.mxu0 %v762
        %1940 = vmatmul.mubr.bf16.gmra.mrb[0].mxu0 %v682
        %v1941 = vpop.f32.mrb[0].mxu0
        %v1942 = vadd.f32 %v645, %v1941
        %v1943 = vpop.f32.mrb[0].mxu0
        %v1944 = vadd.f32 %v649, %v1943
        %v1945 = vpop.f32.mrb[0].mxu0
        %v1946 = vadd.f32 %v645, %v1945
        %v1947 = vpop.f32.mrb[0].mxu0
        %v1948 = vadd.f32 %v649, %v1947
        %1949 = vmatprep.mubr.bf16.mxu0 %v763
        %1950 = vmatmul.mubr.bf16.gmra.mrb[0].mxu0 %v683
        %v1951 = vpop.f32.mrb[0].mxu0
        %v1952 = vadd.f32 %v645, %v1951
        %v1953 = vpop.f32.mrb[0].mxu0
        %v1954 = vadd.f32 %v649, %v1953
        %v1955 = vpop.f32.mrb[0].mxu0
        %v1956 = vadd.f32 %v645, %v1955
        %v1957 = vpop.f32.mrb[0].mxu0
        %v1958 = vadd.f32 %v649, %v1957
        %1959 = vmatprep.mubr.bf16.mxu0 %v764
        %1960 = vmatmul.mubr.bf16.gmra.mrb[0].mxu0 %v684
        %v1961 = vpop.f32.mrb[0].mxu0
        %v1962 = vadd.f32 %v645, %v1961
        %v1963 = vpop.f32.mrb[0].mxu0
        %v1964 = vadd.f32 %v649, %v1963
        %v1965 = vpop.f32.mrb[0].mxu0
        %v1966 = vadd.f32 %v645, %v1965
        %v1967 = vpop.f32.mrb[0].mxu0
        %v1968 = vadd.f32 %v649, %v1967
        %1969 = vmatprep.mubr.bf16.mxu0 %v765
        %1970 = vmatmul.mubr.bf16.gmra.mrb[0].mxu0 %v685
        %v1971 = vpop.f32.mrb[0].mxu0
        %v1972 = vadd.f32 %v645, %v1971
        %v1973 = vpop.f32.mrb[0].mxu0
        %v1974 = vadd.f32 %v649, %v1973
        %v1975 = vpop.f32.mrb[0].mxu0
        %v1976 = vadd.f32 %v645, %v1975
        %v1977 = vpop.f32.mrb[0].mxu0
        %v1978 = vadd.f32 %v649, %v1977
        %1979 = vmatprep.mubr.bf16.mxu0 %v766
        %1980 = vmatmul.mubr.bf16.gmra.mrb[0].mxu0 %v686
        %v1981 = vpop.f32.mrb[0].mxu0
        %v1982 = vadd.f32 %v645, %v1981
        %v1983 = vpop.f32.mrb[0].mxu0
        %v1984 = vadd.f32 %v649, %v1983
        %v1985 = vpop.f32.mrb[0].mxu0
        %v1986 = vadd.f32 %v645, %v1985
        %v1987 = vpop.f32.mrb[0].mxu0
        %v1988 = vadd.f32 %v649, %v1987
        %1989 = vmatprep.mubr.bf16.mxu0 %v767
        %1990 = vmatmul.mubr.bf16.gmra.mrb[0].mxu0 %v687
        %v1991 = vpop.f32.mrb[0].mxu0
        %v1992 = vadd.f32 %v645, %v1991
        %v1993 = vpop.f32.mrb[0].mxu0
        %v1994 = vadd.f32 %v649, %v1993
        %v1995 = vpop.f32.mrb[0].mxu0
        %v1996 = vadd.f32 %v645, %v1995
        %v1997 = vpop.f32.mrb[0].mxu0
        %v1998 = vadd.f32 %v649, %v1997
        %1999 = vmatprep.mubr.bf16.mxu0 %v768
        %2000 = vmatmul.mubr.bf16.gmra.mrb[0].mxu0 %v688
        %v2001 = vpop.f32.mrb[0].mxu0
        %v2002 = vadd.f32 %v645, %v2001
        %v2003 = vpop.f32.mrb[0].mxu0
        %v2004 = vadd.f32 %v649, %v2003
        %v2005 = vpop.f32.mrb[0].mxu0
        %v2006 = vadd.f32 %v645, %v2005
        %v2007 = vpop.f32.mrb[0].mxu0
        %v2008 = vadd.f32 %v649, %v2007
        %2009 = vmatprep.mubr.bf16.mxu0 %v769
        %2010 = vmatmul.mubr.bf16.gmra.mrb[0].mxu0 %v689
        %v2011 = vpop.f32.mrb[0].mxu0
        %v2012 = vadd.f32 %v645, %v2011
        %v2013 = vpop.f32.mrb[0].mxu0
        %v2014 = vadd.f32 %v649, %v2013
        %v2015 = vpop.f32.mrb[0].mxu0
        %v2016 = vadd.f32 %v645, %v2015
        %v2017 = vpop.f32.mrb[0].mxu0
        %v2018 = vadd.f32 %v649, %v2017
        %2019 = vmatprep.mubr.bf16.mxu0 %v778
        %2020 = vmatmul.mubr.bf16.gmra.mrb[0].mxu0 %v698
        %v2021 = vpop.f32.mrb[0].mxu0
        %v2022 = vadd.f32 %v645, %v2021
        %v2023 = vpop.f32.mrb[0].mxu0
        %v2024 = vadd.f32 %v649, %v2023
        %v2025 = vpop.f32.mrb[0].mxu0
        %v2026 = vadd.f32 %v645, %v2025
        %v2027 = vpop.f32.mrb[0].mxu0
        %v2028 = vadd.f32 %v649, %v2027
        %2029 = vmatprep.mubr.bf16.mxu0 %v779
        %2030 = vmatmul.mubr.bf16.gmra.mrb[0].mxu0 %v699
        %v2031 = vpop.f32.mrb[0].mxu0
        %v2032 = vadd.f32 %v645, %v2031
        %v2033 = vpop.f32.mrb[0].mxu0
        %v2034 = vadd.f32 %v649, %v2033
        %v2035 = vpop.f32.mrb[0].mxu0
        %v2036 = vadd.f32 %v645, %v2035
        %v2037 = vpop.f32.mrb[0].mxu0
        %v2038 = vadd.f32 %v649, %v2037
        %2039 = vmatprep.mubr.bf16.mxu0 %v780
        %2040 = vmatmul.mubr.bf16.gmra.mrb[0].mxu0 %v700
        %v2041 = vpop.f32.mrb[0].mxu0
        %v2042 = vadd.f32 %v645, %v2041
        %v2043 = vpop.f32.mrb[0].mxu0
        %v2044 = vadd.f32 %v649, %v2043
        %v2045 = vpop.f32.mrb[0].mxu0
        %v2046 = vadd.f32 %v645, %v2045
        %v2047 = vpop.f32.mrb[0].mxu0
        %v2048 = vadd.f32 %v649, %v2047
        %2049 = vmatprep.mubr.bf16.mxu0 %v781
        %2050 = vmatmul.mubr.bf16.gmra.mrb[0].mxu0 %v701
        %v2051 = vpop.f32.mrb[0].mxu0
        %v2052 = vadd.f32 %v645, %v2051
        %v2053 = vpop.f32.mrb[0].mxu0
        %v2054 = vadd.f32 %v649, %v2053
        %v2055 = vpop.f32.mrb[0].mxu0
        %v2056 = vadd.f32 %v645, %v2055
        %v2057 = vpop.f32.mrb[0].mxu0
        %v2058 = vadd.f32 %v649, %v2057
        %2059 = vmatprep.mubr.bf16.mxu0 %v782
        %2060 = vmatmul.mubr.bf16.gmra.mrb[0].mxu0 %v702
        %v2061 = vpop.f32.mrb[0].mxu0
        %v2062 = vadd.f32 %v645, %v2061
        %v2063 = vpop.f32.mrb[0].mxu0
        %v2064 = vadd.f32 %v649, %v2063
        %v2065 = vpop.f32.mrb[0].mxu0
        %v2066 = vadd.f32 %v645, %v2065
        %v2067 = vpop.f32.mrb[0].mxu0
        %v2068 = vadd.f32 %v649, %v2067
        %2069 = vmatprep.mubr.bf16.mxu0 %v783
        %2070 = vmatmul.mubr.bf16.gmra.mrb[0].mxu0 %v703
        %v2071 = vpop.f32.mrb[0].mxu0
        %v2072 = vadd.f32 %v645, %v2071
        %v2073 = vpop.f32.mrb[0].mxu0
        %v2074 = vadd.f32 %v649, %v2073
        %v2075 = vpop.f32.mrb[0].mxu0
        %v2076 = vadd.f32 %v645, %v2075
        %v2077 = vpop.f32.mrb[0].mxu0
        %v2078 = vadd.f32 %v649, %v2077
        %2079 = vmatprep.mubr.bf16.mxu0 %v784
        %2080 = vmatmul.mubr.bf16.gmra.mrb[0].mxu0 %v704
        %v2081 = vpop.f32.mrb[0].mxu0
        %v2082 = vadd.f32 %v645, %v2081
        %v2083 = vpop.f32.mrb[0].mxu0
        %v2084 = vadd.f32 %v649, %v2083
        %v2085 = vpop.f32.mrb[0].mxu0
        %v2086 = vadd.f32 %v645, %v2085
        %v2087 = vpop.f32.mrb[0].mxu0
        %v2088 = vadd.f32 %v649, %v2087
        %2089 = vmatprep.mubr.bf16.mxu0 %v785
        %2090 = vmatmul.mubr.bf16.gmra.mrb[0].mxu0 %v705
        %v2091 = vpop.f32.mrb[0].mxu0
        %v2092 = vadd.f32 %v645, %v2091
        %v2093 = vpop.f32.mrb[0].mxu0
        %v2094 = vadd.f32 %v649, %v2093
        %v2095 = vpop.f32.mrb[0].mxu0
        %v2096 = vadd.f32 %v645, %v2095
        %v2097 = vpop.f32.mrb[0].mxu0
        %v2098 = vadd.f32 %v649, %v2097
        %2099 = vmatprep.mubr.bf16.mxu0 %v794
        %2100 = vmatmul.mubr.bf16.gmra.mrb[0].mxu0 %v714
        %v2101 = vpop.f32.mrb[0].mxu0
        %v2102 = vadd.f32 %v645, %v2101
        %v2103 = vpop.f32.mrb[0].mxu0
        %v2104 = vadd.f32 %v649, %v2103
        %v2105 = vpop.f32.mrb[0].mxu0
        %v2106 = vadd.f32 %v645, %v2105
        %v2107 = vpop.f32.mrb[0].mxu0
        %v2108 = vadd.f32 %v649, %v2107
        %2109 = vmatprep.mubr.bf16.mxu0 %v795
        %2110 = vmatmul.mubr.bf16.gmra.mrb[0].mxu0 %v715
        %v2111 = vpop.f32.mrb[0].mxu0
        %v2112 = vadd.f32 %v645, %v2111
        %v2113 = vpop.f32.mrb[0].mxu0
        %v2114 = vadd.f32 %v649, %v2113
        %v2115 = vpop.f32.mrb[0].mxu0
        %v2116 = vadd.f32 %v645, %v2115
        %v2117 = vpop.f32.mrb[0].mxu0
        %v2118 = vadd.f32 %v649, %v2117
        %2119 = vmatprep.mubr.bf16.mxu0 %v796
        %2120 = vmatmul.mubr.bf16.gmra.mrb[0].mxu0 %v716
        %v2121 = vpop.f32.mrb[0].mxu0
        %v2122 = vadd.f32 %v645, %v2121
        %v2123 = vpop.f32.mrb[0].mxu0
        %v2124 = vadd.f32 %v649, %v2123
        %v2125 = vpop.f32.mrb[0].mxu0
        %v2126 = vadd.f32 %v645, %v2125
        %v2127 = vpop.f32.mrb[0].mxu0
        %v2128 = vadd.f32 %v649, %v2127
        %2129 = vmatprep.mubr.bf16.mxu0 %v797
        %2130 = vmatmul.mubr.bf16.gmra.mrb[0].mxu0 %v717
        %v2131 = vpop.f32.mrb[0].mxu0
        %v2132 = vadd.f32 %v645, %v2131
        %v2133 = vpop.f32.mrb[0].mxu0
        %v2134 = vadd.f32 %v649, %v2133
        %v2135 = vpop.f32.mrb[0].mxu0
        %v2136 = vadd.f32 %v645, %v2135
        %v2137 = vpop.f32.mrb[0].mxu0
        %v2138 = vadd.f32 %v649, %v2137
        %2139 = vmatprep.mubr.bf16.mxu0 %v798
        %2140 = vmatmul.mubr.bf16.gmra.mrb[0].mxu0 %v718
        %v2141 = vpop.f32.mrb[0].mxu0
        %v2142 = vadd.f32 %v645, %v2141
        %v2143 = vpop.f32.mrb[0].mxu0
        %v2144 = vadd.f32 %v649, %v2143
        %v2145 = vpop.f32.mrb[0].mxu0
        %v2146 = vadd.f32 %v645, %v2145
        %v2147 = vpop.f32.mrb[0].mxu0
        %v2148 = vadd.f32 %v649, %v2147
        %2149 = vmatprep.mubr.bf16.mxu0 %v799
        %2150 = vmatmul.mubr.bf16.gmra.mrb[0].mxu0 %v719
        %v2151 = vpop.f32.mrb[0].mxu0
        %v2152 = vadd.f32 %v645, %v2151
        %v2153 = vpop.f32.mrb[0].mxu0
        %v2154 = vadd.f32 %v649, %v2153
        %v2155 = vpop.f32.mrb[0].mxu0
        %v2156 = vadd.f32 %v645, %v2155
        %v2157 = vpop.f32.mrb[0].mxu0
        %v2158 = vadd.f32 %v649, %v2157
        %2159 = vmatprep.mubr.bf16.mxu0 %v800
        %2160 = vmatmul.mubr.bf16.gmra.mrb[0].mxu0 %v720
        %v2161 = vpop.f32.mrb[0].mxu0
        %v2162 = vadd.f32 %v645, %v2161
        %v2163 = vpop.f32.mrb[0].mxu0
        %v2164 = vadd.f32 %v649, %v2163
        %v2165 = vpop.f32.mrb[0].mxu0
        %v2166 = vadd.f32 %v645, %v2165
        %v2167 = vpop.f32.mrb[0].mxu0
        %v2168 = vadd.f32 %v649, %v2167
        %2169 = vmatprep.mubr.bf16.mxu0 %v801
        %2170 = vmatmul.mubr.bf16.gmra.mrb[0].mxu0 %v721
        %v2171 = vpop.f32.mrb[0].mxu0
        %v2172 = vadd.f32 %v645, %v2171
        %v2173 = vpop.f32.mrb[0].mxu0
        %v2174 = vadd.f32 %v649, %v2173
        %v2175 = vpop.f32.mrb[0].mxu0
        %v2176 = vadd.f32 %v645, %v2175
        %v2177 = vpop.f32.mrb[0].mxu0
        %v2178 = vadd.f32 %v649, %v2177
        %2179 = vmatprep.mubr.bf16.mxu0 %v810
        %2180 = vmatmul.mubr.bf16.gmra.mrb[0].mxu0 %v730
        %v2181 = vpop.f32.mrb[0].mxu0
        %v2182 = vadd.f32 %v645, %v2181
        %v2183 = vpop.f32.mrb[0].mxu0
        %v2184 = vadd.f32 %v649, %v2183
        %v2185 = vpop.f32.mrb[0].mxu0
        %v2186 = vadd.f32 %v645, %v2185
        %v2187 = vpop.f32.mrb[0].mxu0
        %v2188 = vadd.f32 %v649, %v2187
        %2189 = vmatprep.mubr.bf16.mxu0 %v811
        %2190 = vmatmul.mubr.bf16.gmra.mrb[0].mxu0 %v731
        %v2191 = vpop.f32.mrb[0].mxu0
        %v2192 = vadd.f32 %v645, %v2191
        %v2193 = vpop.f32.mrb[0].mxu0
        %v2194 = vadd.f32 %v649, %v2193
        %v2195 = vpop.f32.mrb[0].mxu0
        %v2196 = vadd.f32 %v645, %v2195
        %v2197 = vpop.f32.mrb[0].mxu0
        %v2198 = vadd.f32 %v649, %v2197
        %2199 = vmatprep.mubr.bf16.mxu0 %v812
        %2200 = vmatmul.mubr.bf16.gmra.mrb[0].mxu0 %v732
        %v2201 = vpop.f32.mrb[0].mxu0
        %v2202 = vadd.f32 %v645, %v2201
        %v2203 = vpop.f32.mrb[0].mxu0
        %v2204 = vadd.f32 %v649, %v2203
        %v2205 = vpop.f32.mrb[0].mxu0
        %v2206 = vadd.f32 %v645, %v2205
        %v2207 = vpop.f32.mrb[0].mxu0
        %v2208 = vadd.f32 %v649, %v2207
        %2209 = vmatprep.mubr.bf16.mxu0 %v813
        %2210 = vmatmul.mubr.bf16.gmra.mrb[0].mxu0 %v733
        %v2211 = vpop.f32.mrb[0].mxu0
        %v2212 = vadd.f32 %v645, %v2211
        %v2213 = vpop.f32.mrb[0].mxu0
        %v2214 = vadd.f32 %v649, %v2213
        %v2215 = vpop.f32.mrb[0].mxu0
        %v2216 = vadd.f32 %v645, %v2215
        %v2217 = vpop.f32.mrb[0].mxu0
        %v2218 = vadd.f32 %v649, %v2217
        %2219 = vmatprep.mubr.bf16.mxu0 %v814
        %2220 = vmatmul.mubr.bf16.gmra.mrb[0].mxu0 %v734
        %v2221 = vpop.f32.mrb[0].mxu0
        %v2222 = vadd.f32 %v645, %v2221
        %v2223 = vpop.f32.mrb[0].mxu0
        %v2224 = vadd.f32 %v649, %v2223
        %v2225 = vpop.f32.mrb[0].mxu0
        %v2226 = vadd.f32 %v645, %v2225
        %v2227 = vpop.f32.mrb[0].mxu0
        %v2228 = vadd.f32 %v649, %v2227
        %2229 = vmatprep.mubr.bf16.mxu0 %v815
        %2230 = vmatmul.mubr.bf16.gmra.mrb[0].mxu0 %v735
        %v2231 = vpop.f32.mrb[0].mxu0
        %v2232 = vadd.f32 %v645, %v2231
        %v2233 = vpop.f32.mrb[0].mxu0
        %v2234 = vadd.f32 %v649, %v2233
        %v2235 = vpop.f32.mrb[0].mxu0
        %v2236 = vadd.f32 %v645, %v2235
        %v2237 = vpop.f32.mrb[0].mxu0
        %v2238 = vadd.f32 %v649, %v2237
        %2239 = vmatprep.mubr.bf16.mxu0 %v816
        %2240 = vmatmul.mubr.bf16.gmra.mrb[0].mxu0 %v736
        %v2241 = vpop.f32.mrb[0].mxu0
        %v2242 = vadd.f32 %v645, %v2241
        %v2243 = vpop.f32.mrb[0].mxu0
        %v2244 = vadd.f32 %v649, %v2243
        %v2245 = vpop.f32.mrb[0].mxu0
        %v2246 = vadd.f32 %v645, %v2245
        %v2247 = vpop.f32.mrb[0].mxu0
        %v2248 = vadd.f32 %v649, %v2247
        %2249 = vmatprep.mubr.bf16.mxu0 %v817
        %2250 = vmatmul.mubr.bf16.gmra.mrb[0].mxu0 %v737
        %v2251 = vpop.f32.mrb[0].mxu0
        %v2252 = vadd.f32 %v645, %v2251
        %v2253 = vpop.f32.mrb[0].mxu0
        %v2254 = vadd.f32 %v649, %v2253
        %v2255 = vpop.f32.mrb[0].mxu0
        %v2256 = vadd.f32 %v645, %v2255
        %v2257 = vpop.f32.mrb[0].mxu0
        %v2258 = vadd.f32 %v649, %v2257
        %2259 = vmatprep.mubr.bf16.mxu0 %v826
        %2260 = vmatmul.mubr.bf16.gmra.mrb[0].mxu0 %v746
        %v2261 = vpop.f32.mrb[0].mxu0
        %v2262 = vadd.f32 %v645, %v2261
        %v2263 = vpop.f32.mrb[0].mxu0
        %v2264 = vadd.f32 %v649, %v2263
        %v2265 = vpop.f32.mrb[0].mxu0
        %v2266 = vadd.f32 %v645, %v2265
        %v2267 = vpop.f32.mrb[0].mxu0
        %v2268 = vadd.f32 %v649, %v2267
        %2269 = vmatprep.mubr.bf16.mxu0 %v827
        %2270 = vmatmul.mubr.bf16.gmra.mrb[0].mxu0 %v747
        %v2271 = vpop.f32.mrb[0].mxu0
        %v2272 = vadd.f32 %v645, %v2271
        %v2273 = vpop.f32.mrb[0].mxu0
        %v2274 = vadd.f32 %v649, %v2273
        %v2275 = vpop.f32.mrb[0].mxu0
        %v2276 = vadd.f32 %v645, %v2275
        %v2277 = vpop.f32.mrb[0].mxu0
        %v2278 = vadd.f32 %v649, %v2277
        %2279 = vmatprep.mubr.bf16.mxu0 %v828
        %2280 = vmatmul.mubr.bf16.gmra.mrb[0].mxu0 %v748
        %v2281 = vpop.f32.mrb[0].mxu0
        %v2282 = vadd.f32 %v645, %v2281
        %v2283 = vpop.f32.mrb[0].mxu0
        %v2284 = vadd.f32 %v649, %v2283
        %v2285 = vpop.f32.mrb[0].mxu0
        %v2286 = vadd.f32 %v645, %v2285
        %v2287 = vpop.f32.mrb[0].mxu0
        %v2288 = vadd.f32 %v649, %v2287
        %2289 = vmatprep.mubr.bf16.mxu0 %v829
        %2290 = vmatmul.mubr.bf16.gmra.mrb[0].mxu0 %v749
        %v2291 = vpop.f32.mrb[0].mxu0
        %v2292 = vadd.f32 %v645, %v2291
        %v2293 = vpop.f32.mrb[0].mxu0
        %v2294 = vadd.f32 %v649, %v2293
        %v2295 = vpop.f32.mrb[0].mxu0
        %v2296 = vadd.f32 %v645, %v2295
        %v2297 = vpop.f32.mrb[0].mxu0
        %v2298 = vadd.f32 %v649, %v2297
        %2299 = vmatprep.mubr.bf16.mxu0 %v830
        %2300 = vmatmul.mubr.bf16.gmra.mrb[0].mxu0 %v750
        %v2301 = vpop.f32.mrb[0].mxu0
        %v2302 = vadd.f32 %v645, %v2301
        %v2303 = vpop.f32.mrb[0].mxu0
        %v2304 = vadd.f32 %v649, %v2303
        %v2305 = vpop.f32.mrb[0].mxu0
        %v2306 = vadd.f32 %v645, %v2305
        %v2307 = vpop.f32.mrb[0].mxu0
        %v2308 = vadd.f32 %v649, %v2307
        %2309 = vmatprep.mubr.bf16.mxu0 %v831
        %2310 = vmatmul.mubr.bf16.gmra.mrb[0].mxu0 %v751
        %v2311 = vpop.f32.mrb[0].mxu0
        %v2312 = vadd.f32 %v645, %v2311
        %v2313 = vpop.f32.mrb[0].mxu0
        %v2314 = vadd.f32 %v649, %v2313
        %v2315 = vpop.f32.mrb[0].mxu0
        %v2316 = vadd.f32 %v645, %v2315
        %v2317 = vpop.f32.mrb[0].mxu0
        %v2318 = vadd.f32 %v649, %v2317
        %2319 = vmatprep.mubr.bf16.mxu0 %v832
        %2320 = vmatmul.mubr.bf16.gmra.mrb[0].mxu0 %v752
        %v2321 = vpop.f32.mrb[0].mxu0
        %v2322 = vadd.f32 %v645, %v2321
        %v2323 = vpop.f32.mrb[0].mxu0
        %v2324 = vadd.f32 %v649, %v2323
        %v2325 = vpop.f32.mrb[0].mxu0
        %v2326 = vadd.f32 %v645, %v2325
        %v2327 = vpop.f32.mrb[0].mxu0
        %v2328 = vadd.f32 %v649, %v2327
        %2329 = vmatprep.mubr.bf16.mxu0 %v833
        %2330 = vmatmul.mubr.bf16.gmra.mrb[0].mxu0 %v753
        %v2331 = vpop.f32.mrb[0].mxu0
        %v2332 = vadd.f32 %v645, %v2331
        %v2333 = vpop.f32.mrb[0].mxu0
        %v2334 = vadd.f32 %v649, %v2333
        %v2335 = vpop.f32.mrb[0].mxu0
        %v2336 = vadd.f32 %v645, %v2335
        %v2337 = vpop.f32.mrb[0].mxu0
        %v2338 = vadd.f32 %v649, %v2337
        %2339 = vdwg.mxu0
        %2340 = vmatprep.subr.bf16.mxu0 %v1223
        %2341 = vmatpush1.bf16.msra.mxu0 %v1222
        %2342 = vmatprep.subr.bf16.mxu0 %v1231
        %2343 = vmatpush1.bf16.msra.mxu0 %v1230
        %2344 = vmatprep.subr.bf16.mxu0 %v1239
        %2345 = vmatpush1.bf16.msra.mxu0 %v1238
        %2346 = vmatprep.subr.bf16.mxu0 %v1247
        %2347 = vmatpush1.bf16.msra.mxu0 %v1246
        %2348 = vmatprep.subr.bf16.mxu0 %v1255
        %2349 = vmatpush1.bf16.msra.mxu0 %v1254
        %2350 = vmatprep.subr.bf16.mxu0 %v1263
        %2351 = vmatpush1.bf16.msra.mxu0 %v1262
        %2352 = vmatprep.subr.bf16.mxu0 %v1271
        %2353 = vmatpush1.bf16.msra.mxu0 %v1270
        %2354 = vmatprep.subr.bf16.mxu0 %v1279
        %2355 = vmatpush1.bf16.msra.mxu0 %v1278
        %2356 = vmatprep.subr.bf16.mxu0 %v1287
        %2357 = vmatpush1.bf16.msra.mxu0 %v1286
        %2358 = vmatprep.subr.bf16.mxu0 %v1295
        %2359 = vmatpush1.bf16.msra.mxu0 %v1294
        %2360 = vmatprep.subr.bf16.mxu0 %v1303
        %2361 = vmatpush1.bf16.msra.mxu0 %v1302
        %2362 = vmatprep.subr.bf16.mxu0 %v1311
        %2363 = vmatpush1.bf16.msra.mxu0 %v1310
        %2364 = vmatprep.subr.bf16.mxu0 %v1319
        %2365 = vmatpush1.bf16.msra.mxu0 %v1318
        %2366 = vmatprep.subr.bf16.mxu0 %v1327
        %2367 = vmatpush1.bf16.msra.mxu0 %v1326
        %2368 = vmatprep.subr.bf16.mxu0 %v1335
        %2369 = vmatpush1.bf16.msra.mxu0 %v1334
        %2370 = vmatprep.subr.bf16.mxu0 %v1343
        %2371 = vmatpush1.bf16.msra.mxu0 %v1342
        %2372 = vmatprep.mubr.bf16.mxu0 %v762
        %2373 = vmatmul.mubr.bf16.gmra.mrb[0].mxu0 %v682
        %v2374 = vpop.f32.mrb[0].mxu0
        %v2375 = vadd.f32 %v653, %v2374
        %v2376 = vpop.f32.mrb[0].mxu0
        %v2377 = vadd.f32 %v657, %v2376
        %v2378 = vpop.f32.mrb[0].mxu0
        %v2379 = vadd.f32 %v653, %v2378
        %v2380 = vpop.f32.mrb[0].mxu0
        %v2381 = vadd.f32 %v657, %v2380
        %2382 = vmatprep.mubr.bf16.mxu0 %v763
        %2383 = vmatmul.mubr.bf16.gmra.mrb[0].mxu0 %v683
        %v2384 = vpop.f32.mrb[0].mxu0
        %v2385 = vadd.f32 %v653, %v2384
        %v2386 = vpop.f32.mrb[0].mxu0
        %v2387 = vadd.f32 %v657, %v2386
        %v2388 = vpop.f32.mrb[0].mxu0
        %v2389 = vadd.f32 %v653, %v2388
        %v2390 = vpop.f32.mrb[0].mxu0
        %v2391 = vadd.f32 %v657, %v2390
        %2392 = vmatprep.mubr.bf16.mxu0 %v764
        %2393 = vmatmul.mubr.bf16.gmra.mrb[0].mxu0 %v684
        %v2394 = vpop.f32.mrb[0].mxu0
        %v2395 = vadd.f32 %v653, %v2394
        %v2396 = vpop.f32.mrb[0].mxu0
        %v2397 = vadd.f32 %v657, %v2396
        %v2398 = vpop.f32.mrb[0].mxu0
        %v2399 = vadd.f32 %v653, %v2398
        %v2400 = vpop.f32.mrb[0].mxu0
        %v2401 = vadd.f32 %v657, %v2400
        %2402 = vmatprep.mubr.bf16.mxu0 %v765
        %2403 = vmatmul.mubr.bf16.gmra.mrb[0].mxu0 %v685
        %v2404 = vpop.f32.mrb[0].mxu0
        %v2405 = vadd.f32 %v653, %v2404
        %v2406 = vpop.f32.mrb[0].mxu0
        %v2407 = vadd.f32 %v657, %v2406
        %v2408 = vpop.f32.mrb[0].mxu0
        %v2409 = vadd.f32 %v653, %v2408
        %v2410 = vpop.f32.mrb[0].mxu0
        %v2411 = vadd.f32 %v657, %v2410
        %2412 = vmatprep.mubr.bf16.mxu0 %v766
        %2413 = vmatmul.mubr.bf16.gmra.mrb[0].mxu0 %v686
        %v2414 = vpop.f32.mrb[0].mxu0
        %v2415 = vadd.f32 %v653, %v2414
        %v2416 = vpop.f32.mrb[0].mxu0
        %v2417 = vadd.f32 %v657, %v2416
        %v2418 = vpop.f32.mrb[0].mxu0
        %v2419 = vadd.f32 %v653, %v2418
        %v2420 = vpop.f32.mrb[0].mxu0
        %v2421 = vadd.f32 %v657, %v2420
        %2422 = vmatprep.mubr.bf16.mxu0 %v767
        %2423 = vmatmul.mubr.bf16.gmra.mrb[0].mxu0 %v687
        %v2424 = vpop.f32.mrb[0].mxu0
        %v2425 = vadd.f32 %v653, %v2424
        %v2426 = vpop.f32.mrb[0].mxu0
        %v2427 = vadd.f32 %v657, %v2426
        %v2428 = vpop.f32.mrb[0].mxu0
        %v2429 = vadd.f32 %v653, %v2428
        %v2430 = vpop.f32.mrb[0].mxu0
        %v2431 = vadd.f32 %v657, %v2430
        %2432 = vmatprep.mubr.bf16.mxu0 %v768
        %2433 = vmatmul.mubr.bf16.gmra.mrb[0].mxu0 %v688
        %v2434 = vpop.f32.mrb[0].mxu0
        %v2435 = vadd.f32 %v653, %v2434
        %v2436 = vpop.f32.mrb[0].mxu0
        %v2437 = vadd.f32 %v657, %v2436
        %v2438 = vpop.f32.mrb[0].mxu0
        %v2439 = vadd.f32 %v653, %v2438
        %v2440 = vpop.f32.mrb[0].mxu0
        %v2441 = vadd.f32 %v657, %v2440
        %2442 = vmatprep.mubr.bf16.mxu0 %v769
        %2443 = vmatmul.mubr.bf16.gmra.mrb[0].mxu0 %v689
        %v2444 = vpop.f32.mrb[0].mxu0
        %v2445 = vadd.f32 %v653, %v2444
        %v2446 = vpop.f32.mrb[0].mxu0
        %v2447 = vadd.f32 %v657, %v2446
        %v2448 = vpop.f32.mrb[0].mxu0
        %v2449 = vadd.f32 %v653, %v2448
        %v2450 = vpop.f32.mrb[0].mxu0
        %v2451 = vadd.f32 %v657, %v2450
        %2452 = vmatprep.mubr.bf16.mxu0 %v778
        %2453 = vmatmul.mubr.bf16.gmra.mrb[0].mxu0 %v698
        %v2454 = vpop.f32.mrb[0].mxu0
        %v2455 = vadd.f32 %v653, %v2454
        %v2456 = vpop.f32.mrb[0].mxu0
        %v2457 = vadd.f32 %v657, %v2456
        %v2458 = vpop.f32.mrb[0].mxu0
        %v2459 = vadd.f32 %v653, %v2458
        %v2460 = vpop.f32.mrb[0].mxu0
        %v2461 = vadd.f32 %v657, %v2460
        %2462 = vmatprep.mubr.bf16.mxu0 %v779
        %2463 = vmatmul.mubr.bf16.gmra.mrb[0].mxu0 %v699
        %v2464 = vpop.f32.mrb[0].mxu0
        %v2465 = vadd.f32 %v653, %v2464
        %v2466 = vpop.f32.mrb[0].mxu0
        %v2467 = vadd.f32 %v657, %v2466
        %v2468 = vpop.f32.mrb[0].mxu0
        %v2469 = vadd.f32 %v653, %v2468
        %v2470 = vpop.f32.mrb[0].mxu0
        %v2471 = vadd.f32 %v657, %v2470
        %2472 = vmatprep.mubr.bf16.mxu0 %v780
        %2473 = vmatmul.mubr.bf16.gmra.mrb[0].mxu0 %v700
        %v2474 = vpop.f32.mrb[0].mxu0
        %v2475 = vadd.f32 %v653, %v2474
        %v2476 = vpop.f32.mrb[0].mxu0
        %v2477 = vadd.f32 %v657, %v2476
        %v2478 = vpop.f32.mrb[0].mxu0
        %v2479 = vadd.f32 %v653, %v2478
        %v2480 = vpop.f32.mrb[0].mxu0
        %v2481 = vadd.f32 %v657, %v2480
        %2482 = vmatprep.mubr.bf16.mxu0 %v781
        %2483 = vmatmul.mubr.bf16.gmra.mrb[0].mxu0 %v701
        %v2484 = vpop.f32.mrb[0].mxu0
        %v2485 = vadd.f32 %v653, %v2484
        %v2486 = vpop.f32.mrb[0].mxu0
        %v2487 = vadd.f32 %v657, %v2486
        %v2488 = vpop.f32.mrb[0].mxu0
        %v2489 = vadd.f32 %v653, %v2488
        %v2490 = vpop.f32.mrb[0].mxu0
        %v2491 = vadd.f32 %v657, %v2490
        %2492 = vmatprep.mubr.bf16.mxu0 %v782
        %2493 = vmatmul.mubr.bf16.gmra.mrb[0].mxu0 %v702
        %v2494 = vpop.f32.mrb[0].mxu0
        %v2495 = vadd.f32 %v653, %v2494
        %v2496 = vpop.f32.mrb[0].mxu0
        %v2497 = vadd.f32 %v657, %v2496
        %v2498 = vpop.f32.mrb[0].mxu0
        %v2499 = vadd.f32 %v653, %v2498
        %v2500 = vpop.f32.mrb[0].mxu0
        %v2501 = vadd.f32 %v657, %v2500
        %2502 = vmatprep.mubr.bf16.mxu0 %v783
        %2503 = vmatmul.mubr.bf16.gmra.mrb[0].mxu0 %v703
        %v2504 = vpop.f32.mrb[0].mxu0
        %v2505 = vadd.f32 %v653, %v2504
        %v2506 = vpop.f32.mrb[0].mxu0
        %v2507 = vadd.f32 %v657, %v2506
        %v2508 = vpop.f32.mrb[0].mxu0
        %v2509 = vadd.f32 %v653, %v2508
        %v2510 = vpop.f32.mrb[0].mxu0
        %v2511 = vadd.f32 %v657, %v2510
        %2512 = vmatprep.mubr.bf16.mxu0 %v784
        %2513 = vmatmul.mubr.bf16.gmra.mrb[0].mxu0 %v704
        %v2514 = vpop.f32.mrb[0].mxu0
        %v2515 = vadd.f32 %v653, %v2514
        %v2516 = vpop.f32.mrb[0].mxu0
        %v2517 = vadd.f32 %v657, %v2516
        %v2518 = vpop.f32.mrb[0].mxu0
        %v2519 = vadd.f32 %v653, %v2518
        %v2520 = vpop.f32.mrb[0].mxu0
        %v2521 = vadd.f32 %v657, %v2520
        %2522 = vmatprep.mubr.bf16.mxu0 %v785
        %2523 = vmatmul.mubr.bf16.gmra.mrb[0].mxu0 %v705
        %v2524 = vpop.f32.mrb[0].mxu0
        %v2525 = vadd.f32 %v653, %v2524
        %v2526 = vpop.f32.mrb[0].mxu0
        %v2527 = vadd.f32 %v657, %v2526
        %v2528 = vpop.f32.mrb[0].mxu0
        %v2529 = vadd.f32 %v653, %v2528
        %v2530 = vpop.f32.mrb[0].mxu0
        %v2531 = vadd.f32 %v657, %v2530
        %2532 = vmatprep.mubr.bf16.mxu0 %v794
        %2533 = vmatmul.mubr.bf16.gmra.mrb[0].mxu0 %v714
        %v2534 = vpop.f32.mrb[0].mxu0
        %v2535 = vadd.f32 %v653, %v2534
        %v2536 = vpop.f32.mrb[0].mxu0
        %v2537 = vadd.f32 %v657, %v2536
        %v2538 = vpop.f32.mrb[0].mxu0
        %v2539 = vadd.f32 %v653, %v2538
        %v2540 = vpop.f32.mrb[0].mxu0
        %v2541 = vadd.f32 %v657, %v2540
        %2542 = vmatprep.mubr.bf16.mxu0 %v795
        %2543 = vmatmul.mubr.bf16.gmra.mrb[0].mxu0 %v715
        %v2544 = vpop.f32.mrb[0].mxu0
        %v2545 = vadd.f32 %v653, %v2544
        %v2546 = vpop.f32.mrb[0].mxu0
        %v2547 = vadd.f32 %v657, %v2546
        %v2548 = vpop.f32.mrb[0].mxu0
        %v2549 = vadd.f32 %v653, %v2548
        %v2550 = vpop.f32.mrb[0].mxu0
        %v2551 = vadd.f32 %v657, %v2550
        %2552 = vmatprep.mubr.bf16.mxu0 %v796
        %2553 = vmatmul.mubr.bf16.gmra.mrb[0].mxu0 %v716
        %v2554 = vpop.f32.mrb[0].mxu0
        %v2555 = vadd.f32 %v653, %v2554
        %v2556 = vpop.f32.mrb[0].mxu0
        %v2557 = vadd.f32 %v657, %v2556
        %v2558 = vpop.f32.mrb[0].mxu0
        %v2559 = vadd.f32 %v653, %v2558
        %v2560 = vpop.f32.mrb[0].mxu0
        %v2561 = vadd.f32 %v657, %v2560
        %2562 = vmatprep.mubr.bf16.mxu0 %v797
        %2563 = vmatmul.mubr.bf16.gmra.mrb[0].mxu0 %v717
        %v2564 = vpop.f32.mrb[0].mxu0
        %v2565 = vadd.f32 %v653, %v2564
        %v2566 = vpop.f32.mrb[0].mxu0
        %v2567 = vadd.f32 %v657, %v2566
        %v2568 = vpop.f32.mrb[0].mxu0
        %v2569 = vadd.f32 %v653, %v2568
        %v2570 = vpop.f32.mrb[0].mxu0
        %v2571 = vadd.f32 %v657, %v2570
        %2572 = vmatprep.mubr.bf16.mxu0 %v798
        %2573 = vmatmul.mubr.bf16.gmra.mrb[0].mxu0 %v718
        %v2574 = vpop.f32.mrb[0].mxu0
        %v2575 = vadd.f32 %v653, %v2574
        %v2576 = vpop.f32.mrb[0].mxu0
        %v2577 = vadd.f32 %v657, %v2576
        %v2578 = vpop.f32.mrb[0].mxu0
        %v2579 = vadd.f32 %v653, %v2578
        %v2580 = vpop.f32.mrb[0].mxu0
        %v2581 = vadd.f32 %v657, %v2580
        %2582 = vmatprep.mubr.bf16.mxu0 %v799
        %2583 = vmatmul.mubr.bf16.gmra.mrb[0].mxu0 %v719
        %v2584 = vpop.f32.mrb[0].mxu0
        %v2585 = vadd.f32 %v653, %v2584
        %v2586 = vpop.f32.mrb[0].mxu0
        %v2587 = vadd.f32 %v657, %v2586
        %v2588 = vpop.f32.mrb[0].mxu0
        %v2589 = vadd.f32 %v653, %v2588
        %v2590 = vpop.f32.mrb[0].mxu0
        %v2591 = vadd.f32 %v657, %v2590
        %2592 = vmatprep.mubr.bf16.mxu0 %v800
        %2593 = vmatmul.mubr.bf16.gmra.mrb[0].mxu0 %v720
        %v2594 = vpop.f32.mrb[0].mxu0
        %v2595 = vadd.f32 %v653, %v2594
        %v2596 = vpop.f32.mrb[0].mxu0
        %v2597 = vadd.f32 %v657, %v2596
        %v2598 = vpop.f32.mrb[0].mxu0
        %v2599 = vadd.f32 %v653, %v2598
        %v2600 = vpop.f32.mrb[0].mxu0
        %v2601 = vadd.f32 %v657, %v2600
        %2602 = vmatprep.mubr.bf16.mxu0 %v801
        %2603 = vmatmul.mubr.bf16.gmra.mrb[0].mxu0 %v721
        %v2604 = vpop.f32.mrb[0].mxu0
        %v2605 = vadd.f32 %v653, %v2604
        %v2606 = vpop.f32.mrb[0].mxu0
        %v2607 = vadd.f32 %v657, %v2606
        %v2608 = vpop.f32.mrb[0].mxu0
        %v2609 = vadd.f32 %v653, %v2608
        %v2610 = vpop.f32.mrb[0].mxu0
        %v2611 = vadd.f32 %v657, %v2610
        %2612 = vmatprep.mubr.bf16.mxu0 %v810
        %2613 = vmatmul.mubr.bf16.gmra.mrb[0].mxu0 %v730
        %v2614 = vpop.f32.mrb[0].mxu0
        %v2615 = vadd.f32 %v653, %v2614
        %v2616 = vpop.f32.mrb[0].mxu0
        %v2617 = vadd.f32 %v657, %v2616
        %v2618 = vpop.f32.mrb[0].mxu0
        %v2619 = vadd.f32 %v653, %v2618
        %v2620 = vpop.f32.mrb[0].mxu0
        %v2621 = vadd.f32 %v657, %v2620
        %2622 = vmatprep.mubr.bf16.mxu0 %v811
        %2623 = vmatmul.mubr.bf16.gmra.mrb[0].mxu0 %v731
        %v2624 = vpop.f32.mrb[0].mxu0
        %v2625 = vadd.f32 %v653, %v2624
        %v2626 = vpop.f32.mrb[0].mxu0
        %v2627 = vadd.f32 %v657, %v2626
        %v2628 = vpop.f32.mrb[0].mxu0
        %v2629 = vadd.f32 %v653, %v2628
        %v2630 = vpop.f32.mrb[0].mxu0
        %v2631 = vadd.f32 %v657, %v2630
        %2632 = vmatprep.mubr.bf16.mxu0 %v812
        %2633 = vmatmul.mubr.bf16.gmra.mrb[0].mxu0 %v732
        %v2634 = vpop.f32.mrb[0].mxu0
        %v2635 = vadd.f32 %v653, %v2634
        %v2636 = vpop.f32.mrb[0].mxu0
        %v2637 = vadd.f32 %v657, %v2636
        %v2638 = vpop.f32.mrb[0].mxu0
        %v2639 = vadd.f32 %v653, %v2638
        %v2640 = vpop.f32.mrb[0].mxu0
        %v2641 = vadd.f32 %v657, %v2640
        %2642 = vmatprep.mubr.bf16.mxu0 %v813
        %2643 = vmatmul.mubr.bf16.gmra.mrb[0].mxu0 %v733
        %v2644 = vpop.f32.mrb[0].mxu0
        %v2645 = vadd.f32 %v653, %v2644
        %v2646 = vpop.f32.mrb[0].mxu0
        %v2647 = vadd.f32 %v657, %v2646
        %v2648 = vpop.f32.mrb[0].mxu0
        %v2649 = vadd.f32 %v653, %v2648
        %v2650 = vpop.f32.mrb[0].mxu0
        %v2651 = vadd.f32 %v657, %v2650
        %2652 = vmatprep.mubr.bf16.mxu0 %v814
        %2653 = vmatmul.mubr.bf16.gmra.mrb[0].mxu0 %v734
        %v2654 = vpop.f32.mrb[0].mxu0
        %v2655 = vadd.f32 %v653, %v2654
        %v2656 = vpop.f32.mrb[0].mxu0
        %v2657 = vadd.f32 %v657, %v2656
        %v2658 = vpop.f32.mrb[0].mxu0
        %v2659 = vadd.f32 %v653, %v2658
        %v2660 = vpop.f32.mrb[0].mxu0
        %v2661 = vadd.f32 %v657, %v2660
        %2662 = vmatprep.mubr.bf16.mxu0 %v815
        %2663 = vmatmul.mubr.bf16.gmra.mrb[0].mxu0 %v735
        %v2664 = vpop.f32.mrb[0].mxu0
        %v2665 = vadd.f32 %v653, %v2664
        %v2666 = vpop.f32.mrb[0].mxu0
        %v2667 = vadd.f32 %v657, %v2666
        %v2668 = vpop.f32.mrb[0].mxu0
        %v2669 = vadd.f32 %v653, %v2668
        %v2670 = vpop.f32.mrb[0].mxu0
        %v2671 = vadd.f32 %v657, %v2670
        %2672 = vmatprep.mubr.bf16.mxu0 %v816
        %2673 = vmatmul.mubr.bf16.gmra.mrb[0].mxu0 %v736
        %v2674 = vpop.f32.mrb[0].mxu0
        %v2675 = vadd.f32 %v653, %v2674
        %v2676 = vpop.f32.mrb[0].mxu0
        %v2677 = vadd.f32 %v657, %v2676
        %v2678 = vpop.f32.mrb[0].mxu0
        %v2679 = vadd.f32 %v653, %v2678
        %v2680 = vpop.f32.mrb[0].mxu0
        %v2681 = vadd.f32 %v657, %v2680
        %2682 = vmatprep.mubr.bf16.mxu0 %v817
        %2683 = vmatmul.mubr.bf16.gmra.mrb[0].mxu0 %v737
        %v2684 = vpop.f32.mrb[0].mxu0
        %v2685 = vadd.f32 %v653, %v2684
        %v2686 = vpop.f32.mrb[0].mxu0
        %v2687 = vadd.f32 %v657, %v2686
        %v2688 = vpop.f32.mrb[0].mxu0
        %v2689 = vadd.f32 %v653, %v2688
        %v2690 = vpop.f32.mrb[0].mxu0
        %v2691 = vadd.f32 %v657, %v2690
        %2692 = vmatprep.mubr.bf16.mxu0 %v826
        %2693 = vmatmul.mubr.bf16.gmra.mrb[0].mxu0 %v746
        %v2694 = vpop.f32.mrb[0].mxu0
        %v2695 = vadd.f32 %v653, %v2694
        %v2696 = vpop.f32.mrb[0].mxu0
        %v2697 = vadd.f32 %v657, %v2696
        %v2698 = vpop.f32.mrb[0].mxu0
        %v2699 = vadd.f32 %v653, %v2698
        %v2700 = vpop.f32.mrb[0].mxu0
        %v2701 = vadd.f32 %v657, %v2700
        %2702 = vmatprep.mubr.bf16.mxu0 %v827
        %2703 = vmatmul.mubr.bf16.gmra.mrb[0].mxu0 %v747
        %v2704 = vpop.f32.mrb[0].mxu0
        %v2705 = vadd.f32 %v653, %v2704
        %v2706 = vpop.f32.mrb[0].mxu0
        %v2707 = vadd.f32 %v657, %v2706
        %v2708 = vpop.f32.mrb[0].mxu0
        %v2709 = vadd.f32 %v653, %v2708
        %v2710 = vpop.f32.mrb[0].mxu0
        %v2711 = vadd.f32 %v657, %v2710
        %2712 = vmatprep.mubr.bf16.mxu0 %v828
        %2713 = vmatmul.mubr.bf16.gmra.mrb[0].mxu0 %v748
        %v2714 = vpop.f32.mrb[0].mxu0
        %v2715 = vadd.f32 %v653, %v2714
        %v2716 = vpop.f32.mrb[0].mxu0
        %v2717 = vadd.f32 %v657, %v2716
        %v2718 = vpop.f32.mrb[0].mxu0
        %v2719 = vadd.f32 %v653, %v2718
        %v2720 = vpop.f32.mrb[0].mxu0
        %v2721 = vadd.f32 %v657, %v2720
        %2722 = vmatprep.mubr.bf16.mxu0 %v829
        %2723 = vmatmul.mubr.bf16.gmra.mrb[0].mxu0 %v749
        %v2724 = vpop.f32.mrb[0].mxu0
        %v2725 = vadd.f32 %v653, %v2724
        %v2726 = vpop.f32.mrb[0].mxu0
        %v2727 = vadd.f32 %v657, %v2726
        %v2728 = vpop.f32.mrb[0].mxu0
        %v2729 = vadd.f32 %v653, %v2728
        %v2730 = vpop.f32.mrb[0].mxu0
        %v2731 = vadd.f32 %v657, %v2730
        %2732 = vmatprep.mubr.bf16.mxu0 %v830
        %2733 = vmatmul.mubr.bf16.gmra.mrb[0].mxu0 %v750
        %v2734 = vpop.f32.mrb[0].mxu0
        %v2735 = vadd.f32 %v653, %v2734
        %v2736 = vpop.f32.mrb[0].mxu0
        %v2737 = vadd.f32 %v657, %v2736
        %v2738 = vpop.f32.mrb[0].mxu0
        %v2739 = vadd.f32 %v653, %v2738
        %v2740 = vpop.f32.mrb[0].mxu0
        %v2741 = vadd.f32 %v657, %v2740
        %2742 = vmatprep.mubr.bf16.mxu0 %v831
        %2743 = vmatmul.mubr.bf16.gmra.mrb[0].mxu0 %v751
        %v2744 = vpop.f32.mrb[0].mxu0
        %v2745 = vadd.f32 %v653, %v2744
        %v2746 = vpop.f32.mrb[0].mxu0
        %v2747 = vadd.f32 %v657, %v2746
        %v2748 = vpop.f32.mrb[0].mxu0
        %v2749 = vadd.f32 %v653, %v2748
        %v2750 = vpop.f32.mrb[0].mxu0
        %v2751 = vadd.f32 %v657, %v2750
        %2752 = vmatprep.mubr.bf16.mxu0 %v832
        %2753 = vmatmul.mubr.bf16.gmra.mrb[0].mxu0 %v752
        %v2754 = vpop.f32.mrb[0].mxu0
        %v2755 = vadd.f32 %v653, %v2754
        %v2756 = vpop.f32.mrb[0].mxu0
        %v2757 = vadd.f32 %v657, %v2756
        %v2758 = vpop.f32.mrb[0].mxu0
        %v2759 = vadd.f32 %v653, %v2758
        %v2760 = vpop.f32.mrb[0].mxu0
        %v2761 = vadd.f32 %v657, %v2760
        %2762 = vmatprep.mubr.bf16.mxu0 %v833
        %2763 = vmatmul.mubr.bf16.gmra.mrb[0].mxu0 %v753
        %v2764 = vpop.f32.mrb[0].mxu0
        %v2765 = vadd.f32 %v653, %v2764
        %v2766 = vpop.f32.mrb[0].mxu0
        %v2767 = vadd.f32 %v657, %v2766
        %v2768 = vpop.f32.mrb[0].mxu0
        %v2769 = vadd.f32 %v653, %v2768
        %v2770 = vpop.f32.mrb[0].mxu0
        %v2771 = vadd.f32 %v657, %v2770
        %2772 = vdwg.mxu0
        %2773 = vmatprep.subr.bf16.mxu0 %v1225
        %2774 = vmatpush1.bf16.msra.mxu0 %v1224
        %2775 = vmatprep.subr.bf16.mxu0 %v1233
        %2776 = vmatpush1.bf16.msra.mxu0 %v1232
        %2777 = vmatprep.subr.bf16.mxu0 %v1241
        %2778 = vmatpush1.bf16.msra.mxu0 %v1240
        %2779 = vmatprep.subr.bf16.mxu0 %v1249
        %2780 = vmatpush1.bf16.msra.mxu0 %v1248
        %2781 = vmatprep.subr.bf16.mxu0 %v1257
        %2782 = vmatpush1.bf16.msra.mxu0 %v1256
        %2783 = vmatprep.subr.bf16.mxu0 %v1265
        %2784 = vmatpush1.bf16.msra.mxu0 %v1264
        %2785 = vmatprep.subr.bf16.mxu0 %v1273
        %2786 = vmatpush1.bf16.msra.mxu0 %v1272
        %2787 = vmatprep.subr.bf16.mxu0 %v1281
        %2788 = vmatpush1.bf16.msra.mxu0 %v1280
        %2789 = vmatprep.subr.bf16.mxu0 %v1289
        %2790 = vmatpush1.bf16.msra.mxu0 %v1288
        %2791 = vmatprep.subr.bf16.mxu0 %v1297
        %2792 = vmatpush1.bf16.msra.mxu0 %v1296
        %2793 = vmatprep.subr.bf16.mxu0 %v1305
        %2794 = vmatpush1.bf16.msra.mxu0 %v1304
        %2795 = vmatprep.subr.bf16.mxu0 %v1313
        %2796 = vmatpush1.bf16.msra.mxu0 %v1312
        %2797 = vmatprep.subr.bf16.mxu0 %v1321
        %2798 = vmatpush1.bf16.msra.mxu0 %v1320
        %2799 = vmatprep.subr.bf16.mxu0 %v1329
        %2800 = vmatpush1.bf16.msra.mxu0 %v1328
        %2801 = vmatprep.subr.bf16.mxu0 %v1337
        %2802 = vmatpush1.bf16.msra.mxu0 %v1336
        %2803 = vmatprep.subr.bf16.mxu0 %v1345
        %2804 = vmatpush1.bf16.msra.mxu0 %v1344
        %2805 = vmatprep.mubr.bf16.mxu0 %v762
        %2806 = vmatmul.mubr.bf16.gmra.mrb[0].mxu0 %v682
        %v2807 = vpop.f32.mrb[0].mxu0
        %v2808 = vadd.f32 %v661, %v2807
        %v2809 = vpop.f32.mrb[0].mxu0
        %v2810 = vadd.f32 %v665, %v2809
        %v2811 = vpop.f32.mrb[0].mxu0
        %v2812 = vadd.f32 %v661, %v2811
        %v2813 = vpop.f32.mrb[0].mxu0
        %v2814 = vadd.f32 %v665, %v2813
        %2815 = vmatprep.mubr.bf16.mxu0 %v763
        %2816 = vmatmul.mubr.bf16.gmra.mrb[0].mxu0 %v683
        %v2817 = vpop.f32.mrb[0].mxu0
        %v2818 = vadd.f32 %v661, %v2817
        %v2819 = vpop.f32.mrb[0].mxu0
        %v2820 = vadd.f32 %v665, %v2819
        %v2821 = vpop.f32.mrb[0].mxu0
        %v2822 = vadd.f32 %v661, %v2821
        %v2823 = vpop.f32.mrb[0].mxu0
        %v2824 = vadd.f32 %v665, %v2823
        %2825 = vmatprep.mubr.bf16.mxu0 %v764
        %2826 = vmatmul.mubr.bf16.gmra.mrb[0].mxu0 %v684
        %v2827 = vpop.f32.mrb[0].mxu0
        %v2828 = vadd.f32 %v661, %v2827
        %v2829 = vpop.f32.mrb[0].mxu0
        %v2830 = vadd.f32 %v665, %v2829
        %v2831 = vpop.f32.mrb[0].mxu0
        %v2832 = vadd.f32 %v661, %v2831
        %v2833 = vpop.f32.mrb[0].mxu0
        %v2834 = vadd.f32 %v665, %v2833
        %2835 = vmatprep.mubr.bf16.mxu0 %v765
        %2836 = vmatmul.mubr.bf16.gmra.mrb[0].mxu0 %v685
        %v2837 = vpop.f32.mrb[0].mxu0
        %v2838 = vadd.f32 %v661, %v2837
        %v2839 = vpop.f32.mrb[0].mxu0
        %v2840 = vadd.f32 %v665, %v2839
        %v2841 = vpop.f32.mrb[0].mxu0
        %v2842 = vadd.f32 %v661, %v2841
        %v2843 = vpop.f32.mrb[0].mxu0
        %v2844 = vadd.f32 %v665, %v2843
        %2845 = vmatprep.mubr.bf16.mxu0 %v766
        %2846 = vmatmul.mubr.bf16.gmra.mrb[0].mxu0 %v686
        %v2847 = vpop.f32.mrb[0].mxu0
        %v2848 = vadd.f32 %v661, %v2847
        %v2849 = vpop.f32.mrb[0].mxu0
        %v2850 = vadd.f32 %v665, %v2849
        %v2851 = vpop.f32.mrb[0].mxu0
        %v2852 = vadd.f32 %v661, %v2851
        %v2853 = vpop.f32.mrb[0].mxu0
        %v2854 = vadd.f32 %v665, %v2853
        %2855 = vmatprep.mubr.bf16.mxu0 %v767
        %2856 = vmatmul.mubr.bf16.gmra.mrb[0].mxu0 %v687
        %v2857 = vpop.f32.mrb[0].mxu0
        %v2858 = vadd.f32 %v661, %v2857
        %v2859 = vpop.f32.mrb[0].mxu0
        %v2860 = vadd.f32 %v665, %v2859
        %v2861 = vpop.f32.mrb[0].mxu0
        %v2862 = vadd.f32 %v661, %v2861
        %v2863 = vpop.f32.mrb[0].mxu0
        %v2864 = vadd.f32 %v665, %v2863
        %2865 = vmatprep.mubr.bf16.mxu0 %v768
        %2866 = vmatmul.mubr.bf16.gmra.mrb[0].mxu0 %v688
        %v2867 = vpop.f32.mrb[0].mxu0
        %v2868 = vadd.f32 %v661, %v2867
        %v2869 = vpop.f32.mrb[0].mxu0
        %v2870 = vadd.f32 %v665, %v2869
        %v2871 = vpop.f32.mrb[0].mxu0
        %v2872 = vadd.f32 %v661, %v2871
        %v2873 = vpop.f32.mrb[0].mxu0
        %v2874 = vadd.f32 %v665, %v2873
        %2875 = vmatprep.mubr.bf16.mxu0 %v769
        %2876 = vmatmul.mubr.bf16.gmra.mrb[0].mxu0 %v689
        %v2877 = vpop.f32.mrb[0].mxu0
        %v2878 = vadd.f32 %v661, %v2877
        %v2879 = vpop.f32.mrb[0].mxu0
        %v2880 = vadd.f32 %v665, %v2879
        %v2881 = vpop.f32.mrb[0].mxu0
        %v2882 = vadd.f32 %v661, %v2881
        %v2883 = vpop.f32.mrb[0].mxu0
        %v2884 = vadd.f32 %v665, %v2883
        %2885 = vmatprep.mubr.bf16.mxu0 %v778
        %2886 = vmatmul.mubr.bf16.gmra.mrb[0].mxu0 %v698
        %v2887 = vpop.f32.mrb[0].mxu0
        %v2888 = vadd.f32 %v661, %v2887
        %v2889 = vpop.f32.mrb[0].mxu0
        %v2890 = vadd.f32 %v665, %v2889
        %v2891 = vpop.f32.mrb[0].mxu0
        %v2892 = vadd.f32 %v661, %v2891
        %v2893 = vpop.f32.mrb[0].mxu0
        %v2894 = vadd.f32 %v665, %v2893
        %2895 = vmatprep.mubr.bf16.mxu0 %v779
        %2896 = vmatmul.mubr.bf16.gmra.mrb[0].mxu0 %v699
        %v2897 = vpop.f32.mrb[0].mxu0
        %v2898 = vadd.f32 %v661, %v2897
        %v2899 = vpop.f32.mrb[0].mxu0
        %v2900 = vadd.f32 %v665, %v2899
        %v2901 = vpop.f32.mrb[0].mxu0
        %v2902 = vadd.f32 %v661, %v2901
        %v2903 = vpop.f32.mrb[0].mxu0
        %v2904 = vadd.f32 %v665, %v2903
        %2905 = vmatprep.mubr.bf16.mxu0 %v780
        %2906 = vmatmul.mubr.bf16.gmra.mrb[0].mxu0 %v700
        %v2907 = vpop.f32.mrb[0].mxu0
        %v2908 = vadd.f32 %v661, %v2907
        %v2909 = vpop.f32.mrb[0].mxu0
        %v2910 = vadd.f32 %v665, %v2909
        %v2911 = vpop.f32.mrb[0].mxu0
        %v2912 = vadd.f32 %v661, %v2911
        %v2913 = vpop.f32.mrb[0].mxu0
        %v2914 = vadd.f32 %v665, %v2913
        %2915 = vmatprep.mubr.bf16.mxu0 %v781
        %2916 = vmatmul.mubr.bf16.gmra.mrb[0].mxu0 %v701
        %v2917 = vpop.f32.mrb[0].mxu0
        %v2918 = vadd.f32 %v661, %v2917
        %v2919 = vpop.f32.mrb[0].mxu0
        %v2920 = vadd.f32 %v665, %v2919
        %v2921 = vpop.f32.mrb[0].mxu0
        %v2922 = vadd.f32 %v661, %v2921
        %v2923 = vpop.f32.mrb[0].mxu0
        %v2924 = vadd.f32 %v665, %v2923
        %2925 = vmatprep.mubr.bf16.mxu0 %v782
        %2926 = vmatmul.mubr.bf16.gmra.mrb[0].mxu0 %v702
        %v2927 = vpop.f32.mrb[0].mxu0
        %v2928 = vadd.f32 %v661, %v2927
        %v2929 = vpop.f32.mrb[0].mxu0
        %v2930 = vadd.f32 %v665, %v2929
        %v2931 = vpop.f32.mrb[0].mxu0
        %v2932 = vadd.f32 %v661, %v2931
        %v2933 = vpop.f32.mrb[0].mxu0
        %v2934 = vadd.f32 %v665, %v2933
        %2935 = vmatprep.mubr.bf16.mxu0 %v783
        %2936 = vmatmul.mubr.bf16.gmra.mrb[0].mxu0 %v703
        %v2937 = vpop.f32.mrb[0].mxu0
        %v2938 = vadd.f32 %v661, %v2937
        %v2939 = vpop.f32.mrb[0].mxu0
        %v2940 = vadd.f32 %v665, %v2939
        %v2941 = vpop.f32.mrb[0].mxu0
        %v2942 = vadd.f32 %v661, %v2941
        %v2943 = vpop.f32.mrb[0].mxu0
        %v2944 = vadd.f32 %v665, %v2943
        %2945 = vmatprep.mubr.bf16.mxu0 %v784
        %2946 = vmatmul.mubr.bf16.gmra.mrb[0].mxu0 %v704
        %v2947 = vpop.f32.mrb[0].mxu0
        %v2948 = vadd.f32 %v661, %v2947
        %v2949 = vpop.f32.mrb[0].mxu0
        %v2950 = vadd.f32 %v665, %v2949
        %v2951 = vpop.f32.mrb[0].mxu0
        %v2952 = vadd.f32 %v661, %v2951
        %v2953 = vpop.f32.mrb[0].mxu0
        %v2954 = vadd.f32 %v665, %v2953
        %2955 = vmatprep.mubr.bf16.mxu0 %v785
        %2956 = vmatmul.mubr.bf16.gmra.mrb[0].mxu0 %v705
        %v2957 = vpop.f32.mrb[0].mxu0
        %v2958 = vadd.f32 %v661, %v2957
        %v2959 = vpop.f32.mrb[0].mxu0
        %v2960 = vadd.f32 %v665, %v2959
        %v2961 = vpop.f32.mrb[0].mxu0
        %v2962 = vadd.f32 %v661, %v2961
        %v2963 = vpop.f32.mrb[0].mxu0
        %v2964 = vadd.f32 %v665, %v2963
        %2965 = vmatprep.mubr.bf16.mxu0 %v794
        %2966 = vmatmul.mubr.bf16.gmra.mrb[0].mxu0 %v714
        %v2967 = vpop.f32.mrb[0].mxu0
        %v2968 = vadd.f32 %v661, %v2967
        %v2969 = vpop.f32.mrb[0].mxu0
        %v2970 = vadd.f32 %v665, %v2969
        %v2971 = vpop.f32.mrb[0].mxu0
        %v2972 = vadd.f32 %v661, %v2971
        %v2973 = vpop.f32.mrb[0].mxu0
        %v2974 = vadd.f32 %v665, %v2973
        %2975 = vmatprep.mubr.bf16.mxu0 %v795
        %2976 = vmatmul.mubr.bf16.gmra.mrb[0].mxu0 %v715
        %v2977 = vpop.f32.mrb[0].mxu0
        %v2978 = vadd.f32 %v661, %v2977
        %v2979 = vpop.f32.mrb[0].mxu0
        %v2980 = vadd.f32 %v665, %v2979
        %v2981 = vpop.f32.mrb[0].mxu0
        %v2982 = vadd.f32 %v661, %v2981
        %v2983 = vpop.f32.mrb[0].mxu0
        %v2984 = vadd.f32 %v665, %v2983
        %2985 = vmatprep.mubr.bf16.mxu0 %v796
        %2986 = vmatmul.mubr.bf16.gmra.mrb[0].mxu0 %v716
        %v2987 = vpop.f32.mrb[0].mxu0
        %v2988 = vadd.f32 %v661, %v2987
        %v2989 = vpop.f32.mrb[0].mxu0
        %v2990 = vadd.f32 %v665, %v2989
        %v2991 = vpop.f32.mrb[0].mxu0
        %v2992 = vadd.f32 %v661, %v2991
        %v2993 = vpop.f32.mrb[0].mxu0
        %v2994 = vadd.f32 %v665, %v2993
        %2995 = vmatprep.mubr.bf16.mxu0 %v797
        %2996 = vmatmul.mubr.bf16.gmra.mrb[0].mxu0 %v717
        %v2997 = vpop.f32.mrb[0].mxu0
        %v2998 = vadd.f32 %v661, %v2997
        %v2999 = vpop.f32.mrb[0].mxu0
        %v3000 = vadd.f32 %v665, %v2999
        %v3001 = vpop.f32.mrb[0].mxu0
        %v3002 = vadd.f32 %v661, %v3001
        %v3003 = vpop.f32.mrb[0].mxu0
        %v3004 = vadd.f32 %v665, %v3003
        %3005 = vmatprep.mubr.bf16.mxu0 %v798
        %3006 = vmatmul.mubr.bf16.gmra.mrb[0].mxu0 %v718
        %v3007 = vpop.f32.mrb[0].mxu0
        %v3008 = vadd.f32 %v661, %v3007
        %v3009 = vpop.f32.mrb[0].mxu0
        %v3010 = vadd.f32 %v665, %v3009
        %v3011 = vpop.f32.mrb[0].mxu0
        %v3012 = vadd.f32 %v661, %v3011
        %v3013 = vpop.f32.mrb[0].mxu0
        %v3014 = vadd.f32 %v665, %v3013
        %3015 = vmatprep.mubr.bf16.mxu0 %v799
        %3016 = vmatmul.mubr.bf16.gmra.mrb[0].mxu0 %v719
        %v3017 = vpop.f32.mrb[0].mxu0
        %v3018 = vadd.f32 %v661, %v3017
        %v3019 = vpop.f32.mrb[0].mxu0
        %v3020 = vadd.f32 %v665, %v3019
        %v3021 = vpop.f32.mrb[0].mxu0
        %v3022 = vadd.f32 %v661, %v3021
        %v3023 = vpop.f32.mrb[0].mxu0
        %v3024 = vadd.f32 %v665, %v3023
        %3025 = vmatprep.mubr.bf16.mxu0 %v800
        %3026 = vmatmul.mubr.bf16.gmra.mrb[0].mxu0 %v720
        %v3027 = vpop.f32.mrb[0].mxu0
        %v3028 = vadd.f32 %v661, %v3027
        %v3029 = vpop.f32.mrb[0].mxu0
        %v3030 = vadd.f32 %v665, %v3029
        %v3031 = vpop.f32.mrb[0].mxu0
        %v3032 = vadd.f32 %v661, %v3031
        %v3033 = vpop.f32.mrb[0].mxu0
        %v3034 = vadd.f32 %v665, %v3033
        %3035 = vmatprep.mubr.bf16.mxu0 %v801
        %3036 = vmatmul.mubr.bf16.gmra.mrb[0].mxu0 %v721
        %v3037 = vpop.f32.mrb[0].mxu0
        %v3038 = vadd.f32 %v661, %v3037
        %v3039 = vpop.f32.mrb[0].mxu0
        %v3040 = vadd.f32 %v665, %v3039
        %v3041 = vpop.f32.mrb[0].mxu0
        %v3042 = vadd.f32 %v661, %v3041
        %v3043 = vpop.f32.mrb[0].mxu0
        %v3044 = vadd.f32 %v665, %v3043
        %3045 = vmatprep.mubr.bf16.mxu0 %v810
        %3046 = vmatmul.mubr.bf16.gmra.mrb[0].mxu0 %v730
        %v3047 = vpop.f32.mrb[0].mxu0
        %v3048 = vadd.f32 %v661, %v3047
        %v3049 = vpop.f32.mrb[0].mxu0
        %v3050 = vadd.f32 %v665, %v3049
        %v3051 = vpop.f32.mrb[0].mxu0
        %v3052 = vadd.f32 %v661, %v3051
        %v3053 = vpop.f32.mrb[0].mxu0
        %v3054 = vadd.f32 %v665, %v3053
        %3055 = vmatprep.mubr.bf16.mxu0 %v811
        %3056 = vmatmul.mubr.bf16.gmra.mrb[0].mxu0 %v731
        %v3057 = vpop.f32.mrb[0].mxu0
        %v3058 = vadd.f32 %v661, %v3057
        %v3059 = vpop.f32.mrb[0].mxu0
        %v3060 = vadd.f32 %v665, %v3059
        %v3061 = vpop.f32.mrb[0].mxu0
        %v3062 = vadd.f32 %v661, %v3061
        %v3063 = vpop.f32.mrb[0].mxu0
        %v3064 = vadd.f32 %v665, %v3063
        %3065 = vmatprep.mubr.bf16.mxu0 %v812
        %3066 = vmatmul.mubr.bf16.gmra.mrb[0].mxu0 %v732
        %v3067 = vpop.f32.mrb[0].mxu0
        %v3068 = vadd.f32 %v661, %v3067
        %v3069 = vpop.f32.mrb[0].mxu0
        %v3070 = vadd.f32 %v665, %v3069
        %v3071 = vpop.f32.mrb[0].mxu0
        %v3072 = vadd.f32 %v661, %v3071
        %v3073 = vpop.f32.mrb[0].mxu0
        %v3074 = vadd.f32 %v665, %v3073
        %3075 = vmatprep.mubr.bf16.mxu0 %v813
        %3076 = vmatmul.mubr.bf16.gmra.mrb[0].mxu0 %v733
        %v3077 = vpop.f32.mrb[0].mxu0
        %v3078 = vadd.f32 %v661, %v3077
        %v3079 = vpop.f32.mrb[0].mxu0
        %v3080 = vadd.f32 %v665, %v3079
        %v3081 = vpop.f32.mrb[0].mxu0
        %v3082 = vadd.f32 %v661, %v3081
        %v3083 = vpop.f32.mrb[0].mxu0
        %v3084 = vadd.f32 %v665, %v3083
        %3085 = vmatprep.mubr.bf16.mxu0 %v814
        %3086 = vmatmul.mubr.bf16.gmra.mrb[0].mxu0 %v734
        %v3087 = vpop.f32.mrb[0].mxu0
        %v3088 = vadd.f32 %v661, %v3087
        %v3089 = vpop.f32.mrb[0].mxu0
        %v3090 = vadd.f32 %v665, %v3089
        %v3091 = vpop.f32.mrb[0].mxu0
        %v3092 = vadd.f32 %v661, %v3091
        %v3093 = vpop.f32.mrb[0].mxu0
        %v3094 = vadd.f32 %v665, %v3093
        %3095 = vmatprep.mubr.bf16.mxu0 %v815
        %3096 = vmatmul.mubr.bf16.gmra.mrb[0].mxu0 %v735
        %v3097 = vpop.f32.mrb[0].mxu0
        %v3098 = vadd.f32 %v661, %v3097
        %v3099 = vpop.f32.mrb[0].mxu0
        %v3100 = vadd.f32 %v665, %v3099
        %v3101 = vpop.f32.mrb[0].mxu0
        %v3102 = vadd.f32 %v661, %v3101
        %v3103 = vpop.f32.mrb[0].mxu0
        %v3104 = vadd.f32 %v665, %v3103
        %3105 = vmatprep.mubr.bf16.mxu0 %v816
        %3106 = vmatmul.mubr.bf16.gmra.mrb[0].mxu0 %v736
        %v3107 = vpop.f32.mrb[0].mxu0
        %v3108 = vadd.f32 %v661, %v3107
        %v3109 = vpop.f32.mrb[0].mxu0
        %v3110 = vadd.f32 %v665, %v3109
        %v3111 = vpop.f32.mrb[0].mxu0
        %v3112 = vadd.f32 %v661, %v3111
        %v3113 = vpop.f32.mrb[0].mxu0
        %v3114 = vadd.f32 %v665, %v3113
        %3115 = vmatprep.mubr.bf16.mxu0 %v817
        %3116 = vmatmul.mubr.bf16.gmra.mrb[0].mxu0 %v737
        %v3117 = vpop.f32.mrb[0].mxu0
        %v3118 = vadd.f32 %v661, %v3117
        %v3119 = vpop.f32.mrb[0].mxu0
        %v3120 = vadd.f32 %v665, %v3119
        %v3121 = vpop.f32.mrb[0].mxu0
        %v3122 = vadd.f32 %v661, %v3121
        %v3123 = vpop.f32.mrb[0].mxu0
        %v3124 = vadd.f32 %v665, %v3123
        %3125 = vmatprep.mubr.bf16.mxu0 %v826
        %3126 = vmatmul.mubr.bf16.gmra.mrb[0].mxu0 %v746
        %v3127 = vpop.f32.mrb[0].mxu0
        %v3128 = vadd.f32 %v661, %v3127
        %v3129 = vpop.f32.mrb[0].mxu0
        %v3130 = vadd.f32 %v665, %v3129
        %v3131 = vpop.f32.mrb[0].mxu0
        %v3132 = vadd.f32 %v661, %v3131
        %v3133 = vpop.f32.mrb[0].mxu0
        %v3134 = vadd.f32 %v665, %v3133
        %3135 = vmatprep.mubr.bf16.mxu0 %v827
        %3136 = vmatmul.mubr.bf16.gmra.mrb[0].mxu0 %v747
        %v3137 = vpop.f32.mrb[0].mxu0
        %v3138 = vadd.f32 %v661, %v3137
        %v3139 = vpop.f32.mrb[0].mxu0
        %v3140 = vadd.f32 %v665, %v3139
        %v3141 = vpop.f32.mrb[0].mxu0
        %v3142 = vadd.f32 %v661, %v3141
        %v3143 = vpop.f32.mrb[0].mxu0
        %v3144 = vadd.f32 %v665, %v3143
        %3145 = vmatprep.mubr.bf16.mxu0 %v828
        %3146 = vmatmul.mubr.bf16.gmra.mrb[0].mxu0 %v748
        %v3147 = vpop.f32.mrb[0].mxu0
        %v3148 = vadd.f32 %v661, %v3147
        %v3149 = vpop.f32.mrb[0].mxu0
        %v3150 = vadd.f32 %v665, %v3149
        %v3151 = vpop.f32.mrb[0].mxu0
        %v3152 = vadd.f32 %v661, %v3151
        %v3153 = vpop.f32.mrb[0].mxu0
        %v3154 = vadd.f32 %v665, %v3153
        %3155 = vmatprep.mubr.bf16.mxu0 %v829
        %3156 = vmatmul.mubr.bf16.gmra.mrb[0].mxu0 %v749
        %v3157 = vpop.f32.mrb[0].mxu0
        %v3158 = vadd.f32 %v661, %v3157
        %v3159 = vpop.f32.mrb[0].mxu0
        %v3160 = vadd.f32 %v665, %v3159
        %v3161 = vpop.f32.mrb[0].mxu0
        %v3162 = vadd.f32 %v661, %v3161
        %v3163 = vpop.f32.mrb[0].mxu0
        %v3164 = vadd.f32 %v665, %v3163
        %3165 = vmatprep.mubr.bf16.mxu0 %v830
        %3166 = vmatmul.mubr.bf16.gmra.mrb[0].mxu0 %v750
        %v3167 = vpop.f32.mrb[0].mxu0
        %v3168 = vadd.f32 %v661, %v3167
        %v3169 = vpop.f32.mrb[0].mxu0
        %v3170 = vadd.f32 %v665, %v3169
        %v3171 = vpop.f32.mrb[0].mxu0
        %v3172 = vadd.f32 %v661, %v3171
        %v3173 = vpop.f32.mrb[0].mxu0
        %v3174 = vadd.f32 %v665, %v3173
        %3175 = vmatprep.mubr.bf16.mxu0 %v831
        %3176 = vmatmul.mubr.bf16.gmra.mrb[0].mxu0 %v751
        %v3177 = vpop.f32.mrb[0].mxu0
        %v3178 = vadd.f32 %v661, %v3177
        %v3179 = vpop.f32.mrb[0].mxu0
        %v3180 = vadd.f32 %v665, %v3179
        %v3181 = vpop.f32.mrb[0].mxu0
        %v3182 = vadd.f32 %v661, %v3181
        %v3183 = vpop.f32.mrb[0].mxu0
        %v3184 = vadd.f32 %v665, %v3183
        %3185 = vmatprep.mubr.bf16.mxu0 %v832
        %3186 = vmatmul.mubr.bf16.gmra.mrb[0].mxu0 %v752
        %v3187 = vpop.f32.mrb[0].mxu0
        %v3188 = vadd.f32 %v661, %v3187
        %v3189 = vpop.f32.mrb[0].mxu0
        %v3190 = vadd.f32 %v665, %v3189
        %v3191 = vpop.f32.mrb[0].mxu0
        %v3192 = vadd.f32 %v661, %v3191
        %v3193 = vpop.f32.mrb[0].mxu0
        %v3194 = vadd.f32 %v665, %v3193
        %3195 = vmatprep.mubr.bf16.mxu0 %v833
        %3196 = vmatmul.mubr.bf16.gmra.mrb[0].mxu0 %v753
        %v3197 = vpop.f32.mrb[0].mxu0
        %v3198 = vadd.f32 %v661, %v3197
        %v3199 = vpop.f32.mrb[0].mxu0
        %v3200 = vadd.f32 %v665, %v3199
        %v3201 = vpop.f32.mrb[0].mxu0
        %v3202 = vadd.f32 %v661, %v3201
        %v3203 = vpop.f32.mrb[0].mxu0
        %v3204 = vadd.f32 %v665, %v3203
        %3205 = vdwg.mxu0
        %3206 = vst [vmem:[%s258] sm:$0xff] %v1509
        %3207 = vst [vmem:[%s258 + $0x8] sm:$0xff] %v1511
        %3208 = vst [vmem:[%s258 + $0x10] sm:$0xff] %v1942
        %3209 = vst [vmem:[%s258 + $0x18] sm:$0xff] %v1944
        %3210 = vst [vmem:[%s258 + $0x20] sm:$0xff] %v2375
        %3211 = vst [vmem:[%s258 + $0x28] sm:$0xff] %v2377
        %3212 = vst [vmem:[%s258 + $0x30] sm:$0xff] %v2808
        %3213 = vst [vmem:[%s258 + $0x38] sm:$0xff] %v2810
        %3214 = vst [vmem:[%s258 + $0x40] sm:$0xff] %v1513
        %3215 = vst [vmem:[%s258 + $0x48] sm:$0xff] %v1515
        %3216 = vst [vmem:[%s258 + $0x50] sm:$0xff] %v1946
        %3217 = vst [vmem:[%s258 + $0x58] sm:$0xff] %v1948
        %3218 = vst [vmem:[%s258 + $0x60] sm:$0xff] %v2379
        %3219 = vst [vmem:[%s258 + $0x68] sm:$0xff] %v2381
        %3220 = vst [vmem:[%s258 + $0x70] sm:$0xff] %v2812
        %3221 = vst [vmem:[%s258 + $0x78] sm:$0xff] %v2814
        %3222 = vst [vmem:[%s258 + $0x80] sm:$0xff] %v1519
        %3223 = vst [vmem:[%s258 + $0x88] sm:$0xff] %v1521
        %3224 = vst [vmem:[%s258 + $0x90] sm:$0xff] %v1952
        %3225 = vst [vmem:[%s258 + $0x98] sm:$0xff] %v1954
        %3226 = vst [vmem:[%s258 + $0xa0] sm:$0xff] %v2385
        %3227 = vst [vmem:[%s258 + $0xa8] sm:$0xff] %v2387
        %3228 = vst [vmem:[%s258 + $0xb0] sm:$0xff] %v2818
        %3229 = vst [vmem:[%s258 + $0xb8] sm:$0xff] %v2820
        %3230 = vst [vmem:[%s258 + $0xc0] sm:$0xff] %v1523
        %3231 = vst [vmem:[%s258 + $0xc8] sm:$0xff] %v1525
        %3232 = vst [vmem:[%s258 + $0xd0] sm:$0xff] %v1956
        %3233 = vst [vmem:[%s258 + $0xd8] sm:$0xff] %v1958
        %3234 = vst [vmem:[%s258 + $0xe0] sm:$0xff] %v2389
        %3235 = vst [vmem:[%s258 + $0xe8] sm:$0xff] %v2391
        %3236 = vst [vmem:[%s258 + $0xf0] sm:$0xff] %v2822
        %3237 = vst [vmem:[%s258 + $0xf8] sm:$0xff] %v2824
        %3238 = vst [vmem:[%s258 + $0x100] sm:$0xff] %v1529
        %3239 = vst [vmem:[%s258 + $0x108] sm:$0xff] %v1531
        %3240 = vst [vmem:[%s258 + $0x110] sm:$0xff] %v1962
        %3241 = vst [vmem:[%s258 + $0x118] sm:$0xff] %v1964
        %3242 = vst [vmem:[%s258 + $0x120] sm:$0xff] %v2395
        %3243 = vst [vmem:[%s258 + $0x128] sm:$0xff] %v2397
        %3244 = vst [vmem:[%s258 + $0x130] sm:$0xff] %v2828
        %3245 = vst [vmem:[%s258 + $0x138] sm:$0xff] %v2830
        %3246 = vst [vmem:[%s258 + $0x140] sm:$0xff] %v1533
        %3247 = vst [vmem:[%s258 + $0x148] sm:$0xff] %v1535
        %3248 = vst [vmem:[%s258 + $0x150] sm:$0xff] %v1966
        %3249 = vst [vmem:[%s258 + $0x158] sm:$0xff] %v1968
        %3250 = vst [vmem:[%s258 + $0x160] sm:$0xff] %v2399
        %3251 = vst [vmem:[%s258 + $0x168] sm:$0xff] %v2401
        %3252 = vst [vmem:[%s258 + $0x170] sm:$0xff] %v2832
        %3253 = vst [vmem:[%s258 + $0x178] sm:$0xff] %v2834
        %3254 = vst [vmem:[%s258 + $0x180] sm:$0xff] %v1539
        %3255 = vst [vmem:[%s258 + $0x188] sm:$0xff] %v1541
        %3256 = vst [vmem:[%s258 + $0x190] sm:$0xff] %v1972
        %3257 = vst [vmem:[%s258 + $0x198] sm:$0xff] %v1974
        %3258 = vst [vmem:[%s258 + $0x1a0] sm:$0xff] %v2405
        %3259 = vst [vmem:[%s258 + $0x1a8] sm:$0xff] %v2407
        %3260 = vst [vmem:[%s258 + $0x1b0] sm:$0xff] %v2838
        %3261 = vst [vmem:[%s258 + $0x1b8] sm:$0xff] %v2840
        %3262 = vst [vmem:[%s258 + $0x1c0] sm:$0xff] %v1543
        %3263 = vst [vmem:[%s258 + $0x1c8] sm:$0xff] %v1545
        %3264 = vst [vmem:[%s258 + $0x1d0] sm:$0xff] %v1976
        %3265 = vst [vmem:[%s258 + $0x1d8] sm:$0xff] %v1978
        %3266 = vst [vmem:[%s258 + $0x1e0] sm:$0xff] %v2409
        %3267 = vst [vmem:[%s258 + $0x1e8] sm:$0xff] %v2411
        %3268 = vst [vmem:[%s258 + $0x1f0] sm:$0xff] %v2842
        %3269 = vst [vmem:[%s258 + $0x1f8] sm:$0xff] %v2844
        %3270 = vst [vmem:[%s258 + $0x200] sm:$0xff] %v1549
        %3271 = vst [vmem:[%s258 + $0x208] sm:$0xff] %v1551
        %3272 = vst [vmem:[%s258 + $0x210] sm:$0xff] %v1982
        %3273 = vst [vmem:[%s258 + $0x218] sm:$0xff] %v1984
        %3274 = vst [vmem:[%s258 + $0x220] sm:$0xff] %v2415
        %3275 = vst [vmem:[%s258 + $0x228] sm:$0xff] %v2417
        %3276 = vst [vmem:[%s258 + $0x230] sm:$0xff] %v2848
        %3277 = vst [vmem:[%s258 + $0x238] sm:$0xff] %v2850
        %3278 = vst [vmem:[%s258 + $0x240] sm:$0xff] %v1553
        %3279 = vst [vmem:[%s258 + $0x248] sm:$0xff] %v1555
        %3280 = vst [vmem:[%s258 + $0x250] sm:$0xff] %v1986
        %3281 = vst [vmem:[%s258 + $0x258] sm:$0xff] %v1988
        %3282 = vst [vmem:[%s258 + $0x260] sm:$0xff] %v2419
        %3283 = vst [vmem:[%s258 + $0x268] sm:$0xff] %v2421
        %3284 = vst [vmem:[%s258 + $0x270] sm:$0xff] %v2852
        %3285 = vst [vmem:[%s258 + $0x278] sm:$0xff] %v2854
        %3286 = vst [vmem:[%s258 + $0x280] sm:$0xff] %v1559
        %3287 = vst [vmem:[%s258 + $0x288] sm:$0xff] %v1561
        %3288 = vst [vmem:[%s258 + $0x290] sm:$0xff] %v1992
        %3289 = vst [vmem:[%s258 + $0x298] sm:$0xff] %v1994
        %3290 = vst [vmem:[%s258 + $0x2a0] sm:$0xff] %v2425
        %3291 = vst [vmem:[%s258 + $0x2a8] sm:$0xff] %v2427
        %3292 = vst [vmem:[%s258 + $0x2b0] sm:$0xff] %v2858
        %3293 = vst [vmem:[%s258 + $0x2b8] sm:$0xff] %v2860
        %3294 = vst [vmem:[%s258 + $0x2c0] sm:$0xff] %v1563
        %3295 = vst [vmem:[%s258 + $0x2c8] sm:$0xff] %v1565
        %3296 = vst [vmem:[%s258 + $0x2d0] sm:$0xff] %v1996
        %3297 = vst [vmem:[%s258 + $0x2d8] sm:$0xff] %v1998
        %3298 = vst [vmem:[%s258 + $0x2e0] sm:$0xff] %v2429
        %3299 = vst [vmem:[%s258 + $0x2e8] sm:$0xff] %v2431
        %3300 = vst [vmem:[%s258 + $0x2f0] sm:$0xff] %v2862
        %3301 = vst [vmem:[%s258 + $0x2f8] sm:$0xff] %v2864
        %3302 = vst [vmem:[%s258 + $0x300] sm:$0xff] %v1569
        %3303 = vst [vmem:[%s258 + $0x308] sm:$0xff] %v1571
        %3304 = vst [vmem:[%s258 + $0x310] sm:$0xff] %v2002
        %3305 = vst [vmem:[%s258 + $0x318] sm:$0xff] %v2004
        %3306 = vst [vmem:[%s258 + $0x320] sm:$0xff] %v2435
        %3307 = vst [vmem:[%s258 + $0x328] sm:$0xff] %v2437
        %3308 = vst [vmem:[%s258 + $0x330] sm:$0xff] %v2868
        %3309 = vst [vmem:[%s258 + $0x338] sm:$0xff] %v2870
        %3310 = vst [vmem:[%s258 + $0x340] sm:$0xff] %v1573
        %3311 = vst [vmem:[%s258 + $0x348] sm:$0xff] %v1575
        %3312 = vst [vmem:[%s258 + $0x350] sm:$0xff] %v2006
        %3313 = vst [vmem:[%s258 + $0x358] sm:$0xff] %v2008
        %3314 = vst [vmem:[%s258 + $0x360] sm:$0xff] %v2439
        %3315 = vst [vmem:[%s258 + $0x368] sm:$0xff] %v2441
        %3316 = vst [vmem:[%s258 + $0x370] sm:$0xff] %v2872
        %3317 = vst [vmem:[%s258 + $0x378] sm:$0xff] %v2874
        %3318 = vst [vmem:[%s258 + $0x380] sm:$0xff] %v1579
        %3319 = vst [vmem:[%s258 + $0x388] sm:$0xff] %v1581
        %3320 = vst [vmem:[%s258 + $0x390] sm:$0xff] %v2012
        %3321 = vst [vmem:[%s258 + $0x398] sm:$0xff] %v2014
        %3322 = vst [vmem:[%s258 + $0x3a0] sm:$0xff] %v2445
        %3323 = vst [vmem:[%s258 + $0x3a8] sm:$0xff] %v2447
        %3324 = vst [vmem:[%s258 + $0x3b0] sm:$0xff] %v2878
        %3325 = vst [vmem:[%s258 + $0x3b8] sm:$0xff] %v2880
        %3326 = vst [vmem:[%s258 + $0x3c0] sm:$0xff] %v1583
        %3327 = vst [vmem:[%s258 + $0x3c8] sm:$0xff] %v1585
        %3328 = vst [vmem:[%s258 + $0x3d0] sm:$0xff] %v2016
        %3329 = vst [vmem:[%s258 + $0x3d8] sm:$0xff] %v2018
        %3330 = vst [vmem:[%s258 + $0x3e0] sm:$0xff] %v2449
        %3331 = vst [vmem:[%s258 + $0x3e8] sm:$0xff] %v2451
        %3332 = vst [vmem:[%s258 + $0x3f0] sm:$0xff] %v2882
        %3333 = vst [vmem:[%s258 + $0x3f8] sm:$0xff] %v2884
        %3334 = vst [vmem:[%s258 + $0x400] sm:$0xff] %v1589
        %3335 = vst [vmem:[%s258 + $0x408] sm:$0xff] %v1591
        %3336 = vst [vmem:[%s258 + $0x410] sm:$0xff] %v2022
        %3337 = vst [vmem:[%s258 + $0x418] sm:$0xff] %v2024
        %3338 = vst [vmem:[%s258 + $0x420] sm:$0xff] %v2455
        %3339 = vst [vmem:[%s258 + $0x428] sm:$0xff] %v2457
        %3340 = vst [vmem:[%s258 + $0x430] sm:$0xff] %v2888
        %3341 = vst [vmem:[%s258 + $0x438] sm:$0xff] %v2890
        %3342 = vst [vmem:[%s258 + $0x440] sm:$0xff] %v1593
        %3343 = vst [vmem:[%s258 + $0x448] sm:$0xff] %v1595
        %3344 = vst [vmem:[%s258 + $0x450] sm:$0xff] %v2026
        %3345 = vst [vmem:[%s258 + $0x458] sm:$0xff] %v2028
        %3346 = vst [vmem:[%s258 + $0x460] sm:$0xff] %v2459
        %3347 = vst [vmem:[%s258 + $0x468] sm:$0xff] %v2461
        %3348 = vst [vmem:[%s258 + $0x470] sm:$0xff] %v2892
        %3349 = vst [vmem:[%s258 + $0x478] sm:$0xff] %v2894
        %3350 = vst [vmem:[%s258 + $0x480] sm:$0xff] %v1599
        %3351 = vst [vmem:[%s258 + $0x488] sm:$0xff] %v1601
        %3352 = vst [vmem:[%s258 + $0x490] sm:$0xff] %v2032
        %3353 = vst [vmem:[%s258 + $0x498] sm:$0xff] %v2034
        %3354 = vst [vmem:[%s258 + $0x4a0] sm:$0xff] %v2465
        %3355 = vst [vmem:[%s258 + $0x4a8] sm:$0xff] %v2467
        %3356 = vst [vmem:[%s258 + $0x4b0] sm:$0xff] %v2898
        %3357 = vst [vmem:[%s258 + $0x4b8] sm:$0xff] %v2900
        %3358 = vst [vmem:[%s258 + $0x4c0] sm:$0xff] %v1603
        %3359 = vst [vmem:[%s258 + $0x4c8] sm:$0xff] %v1605
        %3360 = vst [vmem:[%s258 + $0x4d0] sm:$0xff] %v2036
        %3361 = vst [vmem:[%s258 + $0x4d8] sm:$0xff] %v2038
        %3362 = vst [vmem:[%s258 + $0x4e0] sm:$0xff] %v2469
        %3363 = vst [vmem:[%s258 + $0x4e8] sm:$0xff] %v2471
        %3364 = vst [vmem:[%s258 + $0x4f0] sm:$0xff] %v2902
        %3365 = vst [vmem:[%s258 + $0x4f8] sm:$0xff] %v2904
        %3366 = vst [vmem:[%s258 + $0x500] sm:$0xff] %v1609
        %3367 = vst [vmem:[%s258 + $0x508] sm:$0xff] %v1611
        %3368 = vst [vmem:[%s258 + $0x510] sm:$0xff] %v2042
        %3369 = vst [vmem:[%s258 + $0x518] sm:$0xff] %v2044
        %3370 = vst [vmem:[%s258 + $0x520] sm:$0xff] %v2475
        %3371 = vst [vmem:[%s258 + $0x528] sm:$0xff] %v2477
        %3372 = vst [vmem:[%s258 + $0x530] sm:$0xff] %v2908
        %3373 = vst [vmem:[%s258 + $0x538] sm:$0xff] %v2910
        %3374 = vst [vmem:[%s258 + $0x540] sm:$0xff] %v1613
        %3375 = vst [vmem:[%s258 + $0x548] sm:$0xff] %v1615
        %3376 = vst [vmem:[%s258 + $0x550] sm:$0xff] %v2046
        %3377 = vst [vmem:[%s258 + $0x558] sm:$0xff] %v2048
        %3378 = vst [vmem:[%s258 + $0x560] sm:$0xff] %v2479
        %3379 = vst [vmem:[%s258 + $0x568] sm:$0xff] %v2481
        %3380 = vst [vmem:[%s258 + $0x570] sm:$0xff] %v2912
        %3381 = vst [vmem:[%s258 + $0x578] sm:$0xff] %v2914
        %3382 = vst [vmem:[%s258 + $0x580] sm:$0xff] %v1619
        %3383 = vst [vmem:[%s258 + $0x588] sm:$0xff] %v1621
        %3384 = vst [vmem:[%s258 + $0x590] sm:$0xff] %v2052
        %3385 = vst [vmem:[%s258 + $0x598] sm:$0xff] %v2054
        %3386 = vst [vmem:[%s258 + $0x5a0] sm:$0xff] %v2485
        %3387 = vst [vmem:[%s258 + $0x5a8] sm:$0xff] %v2487
        %3388 = vst [vmem:[%s258 + $0x5b0] sm:$0xff] %v2918
        %3389 = vst [vmem:[%s258 + $0x5b8] sm:$0xff] %v2920
        %3390 = vst [vmem:[%s258 + $0x5c0] sm:$0xff] %v1623
        %3391 = vst [vmem:[%s258 + $0x5c8] sm:$0xff] %v1625
        %3392 = vst [vmem:[%s258 + $0x5d0] sm:$0xff] %v2056
        %3393 = vst [vmem:[%s258 + $0x5d8] sm:$0xff] %v2058
        %3394 = vst [vmem:[%s258 + $0x5e0] sm:$0xff] %v2489
        %3395 = vst [vmem:[%s258 + $0x5e8] sm:$0xff] %v2491
        %3396 = vst [vmem:[%s258 + $0x5f0] sm:$0xff] %v2922
        %3397 = vst [vmem:[%s258 + $0x5f8] sm:$0xff] %v2924
        %3398 = vst [vmem:[%s258 + $0x600] sm:$0xff] %v1629
        %3399 = vst [vmem:[%s258 + $0x608] sm:$0xff] %v1631
        %3400 = vst [vmem:[%s258 + $0x610] sm:$0xff] %v2062
        %3401 = vst [vmem:[%s258 + $0x618] sm:$0xff] %v2064
        %3402 = vst [vmem:[%s258 + $0x620] sm:$0xff] %v2495
        %3403 = vst [vmem:[%s258 + $0x628] sm:$0xff] %v2497
        %3404 = vst [vmem:[%s258 + $0x630] sm:$0xff] %v2928
        %3405 = vst [vmem:[%s258 + $0x638] sm:$0xff] %v2930
        %3406 = vst [vmem:[%s258 + $0x640] sm:$0xff] %v1633
        %3407 = vst [vmem:[%s258 + $0x648] sm:$0xff] %v1635
        %3408 = vst [vmem:[%s258 + $0x650] sm:$0xff] %v2066
        %3409 = vst [vmem:[%s258 + $0x658] sm:$0xff] %v2068
        %3410 = vst [vmem:[%s258 + $0x660] sm:$0xff] %v2499
        %3411 = vst [vmem:[%s258 + $0x668] sm:$0xff] %v2501
        %3412 = vst [vmem:[%s258 + $0x670] sm:$0xff] %v2932
        %3413 = vst [vmem:[%s258 + $0x678] sm:$0xff] %v2934
        %3414 = vst [vmem:[%s258 + $0x680] sm:$0xff] %v1639
        %3415 = vst [vmem:[%s258 + $0x688] sm:$0xff] %v1641
        %3416 = vst [vmem:[%s258 + $0x690] sm:$0xff] %v2072
        %3417 = vst [vmem:[%s258 + $0x698] sm:$0xff] %v2074
        %3418 = vst [vmem:[%s258 + $0x6a0] sm:$0xff] %v2505
        %3419 = vst [vmem:[%s258 + $0x6a8] sm:$0xff] %v2507
        %3420 = vst [vmem:[%s258 + $0x6b0] sm:$0xff] %v2938
        %3421 = vst [vmem:[%s258 + $0x6b8] sm:$0xff] %v2940
        %3422 = vst [vmem:[%s258 + $0x6c0] sm:$0xff] %v1643
        %3423 = vst [vmem:[%s258 + $0x6c8] sm:$0xff] %v1645
        %3424 = vst [vmem:[%s258 + $0x6d0] sm:$0xff] %v2076
        %3425 = vst [vmem:[%s258 + $0x6d8] sm:$0xff] %v2078
        %3426 = vst [vmem:[%s258 + $0x6e0] sm:$0xff] %v2509
        %3427 = vst [vmem:[%s258 + $0x6e8] sm:$0xff] %v2511
        %3428 = vst [vmem:[%s258 + $0x6f0] sm:$0xff] %v2942
        %3429 = vst [vmem:[%s258 + $0x6f8] sm:$0xff] %v2944
        %3430 = vst [vmem:[%s258 + $0x700] sm:$0xff] %v1649
        %3431 = vst [vmem:[%s258 + $0x708] sm:$0xff] %v1651
        %3432 = vst [vmem:[%s258 + $0x710] sm:$0xff] %v2082
        %3433 = vst [vmem:[%s258 + $0x718] sm:$0xff] %v2084
        %3434 = vst [vmem:[%s258 + $0x720] sm:$0xff] %v2515
        %3435 = vst [vmem:[%s258 + $0x728] sm:$0xff] %v2517
        %3436 = vst [vmem:[%s258 + $0x730] sm:$0xff] %v2948
        %3437 = vst [vmem:[%s258 + $0x738] sm:$0xff] %v2950
        %3438 = vst [vmem:[%s258 + $0x740] sm:$0xff] %v1653
        %3439 = vst [vmem:[%s258 + $0x748] sm:$0xff] %v1655
        %3440 = vst [vmem:[%s258 + $0x750] sm:$0xff] %v2086
        %3441 = vst [vmem:[%s258 + $0x758] sm:$0xff] %v2088
        %3442 = vst [vmem:[%s258 + $0x760] sm:$0xff] %v2519
        %3443 = vst [vmem:[%s258 + $0x768] sm:$0xff] %v2521
        %3444 = vst [vmem:[%s258 + $0x770] sm:$0xff] %v2952
        %3445 = vst [vmem:[%s258 + $0x778] sm:$0xff] %v2954
        %3446 = vst [vmem:[%s258 + $0x780] sm:$0xff] %v1659
        %3447 = vst [vmem:[%s258 + $0x788] sm:$0xff] %v1661
        %3448 = vst [vmem:[%s258 + $0x790] sm:$0xff] %v2092
        %3449 = vst [vmem:[%s258 + $0x798] sm:$0xff] %v2094
        %3450 = vst [vmem:[%s258 + $0x7a0] sm:$0xff] %v2525
        %3451 = vst [vmem:[%s258 + $0x7a8] sm:$0xff] %v2527
        %3452 = vst [vmem:[%s258 + $0x7b0] sm:$0xff] %v2958
        %3453 = vst [vmem:[%s258 + $0x7b8] sm:$0xff] %v2960
        %3454 = vst [vmem:[%s258 + $0x7c0] sm:$0xff] %v1663
        %3455 = vst [vmem:[%s258 + $0x7c8] sm:$0xff] %v1665
        %3456 = vst [vmem:[%s258 + $0x7d0] sm:$0xff] %v2096
        %3457 = vst [vmem:[%s258 + $0x7d8] sm:$0xff] %v2098
        %3458 = vst [vmem:[%s258 + $0x7e0] sm:$0xff] %v2529
        %3459 = vst [vmem:[%s258 + $0x7e8] sm:$0xff] %v2531
        %3460 = vst [vmem:[%s258 + $0x7f0] sm:$0xff] %v2962
        %3461 = vst [vmem:[%s258 + $0x7f8] sm:$0xff] %v2964
        %3462 = vst [vmem:[%s258 + $0x800] sm:$0xff] %v1669
        %3463 = vst [vmem:[%s258 + $0x808] sm:$0xff] %v1671
        %3464 = vst [vmem:[%s258 + $0x810] sm:$0xff] %v2102
        %3465 = vst [vmem:[%s258 + $0x818] sm:$0xff] %v2104
        %3466 = vst [vmem:[%s258 + $0x820] sm:$0xff] %v2535
        %3467 = vst [vmem:[%s258 + $0x828] sm:$0xff] %v2537
        %3468 = vst [vmem:[%s258 + $0x830] sm:$0xff] %v2968
        %3469 = vst [vmem:[%s258 + $0x838] sm:$0xff] %v2970
        %3470 = vst [vmem:[%s258 + $0x840] sm:$0xff] %v1673
        %3471 = vst [vmem:[%s258 + $0x848] sm:$0xff] %v1675
        %3472 = vst [vmem:[%s258 + $0x850] sm:$0xff] %v2106
        %3473 = vst [vmem:[%s258 + $0x858] sm:$0xff] %v2108
        %3474 = vst [vmem:[%s258 + $0x860] sm:$0xff] %v2539
        %3475 = vst [vmem:[%s258 + $0x868] sm:$0xff] %v2541
        %3476 = vst [vmem:[%s258 + $0x870] sm:$0xff] %v2972
        %3477 = vst [vmem:[%s258 + $0x878] sm:$0xff] %v2974
        %3478 = vst [vmem:[%s258 + $0x880] sm:$0xff] %v1679
        %3479 = vst [vmem:[%s258 + $0x888] sm:$0xff] %v1681
        %3480 = vst [vmem:[%s258 + $0x890] sm:$0xff] %v2112
        %3481 = vst [vmem:[%s258 + $0x898] sm:$0xff] %v2114
        %3482 = vst [vmem:[%s258 + $0x8a0] sm:$0xff] %v2545
        %3483 = vst [vmem:[%s258 + $0x8a8] sm:$0xff] %v2547
        %3484 = vst [vmem:[%s258 + $0x8b0] sm:$0xff] %v2978
        %3485 = vst [vmem:[%s258 + $0x8b8] sm:$0xff] %v2980
        %3486 = vst [vmem:[%s258 + $0x8c0] sm:$0xff] %v1683
        %3487 = vst [vmem:[%s258 + $0x8c8] sm:$0xff] %v1685
        %3488 = vst [vmem:[%s258 + $0x8d0] sm:$0xff] %v2116
        %3489 = vst [vmem:[%s258 + $0x8d8] sm:$0xff] %v2118
        %3490 = vst [vmem:[%s258 + $0x8e0] sm:$0xff] %v2549
        %3491 = vst [vmem:[%s258 + $0x8e8] sm:$0xff] %v2551
        %3492 = vst [vmem:[%s258 + $0x8f0] sm:$0xff] %v2982
        %3493 = vst [vmem:[%s258 + $0x8f8] sm:$0xff] %v2984
        %3494 = vst [vmem:[%s258 + $0x900] sm:$0xff] %v1689
        %3495 = vst [vmem:[%s258 + $0x908] sm:$0xff] %v1691
        %3496 = vst [vmem:[%s258 + $0x910] sm:$0xff] %v2122
        %3497 = vst [vmem:[%s258 + $0x918] sm:$0xff] %v2124
        %3498 = vst [vmem:[%s258 + $0x920] sm:$0xff] %v2555
        %3499 = vst [vmem:[%s258 + $0x928] sm:$0xff] %v2557
        %3500 = vst [vmem:[%s258 + $0x930] sm:$0xff] %v2988
        %3501 = vst [vmem:[%s258 + $0x938] sm:$0xff] %v2990
        %3502 = vst [vmem:[%s258 + $0x940] sm:$0xff] %v1693
        %3503 = vst [vmem:[%s258 + $0x948] sm:$0xff] %v1695
        %3504 = vst [vmem:[%s258 + $0x950] sm:$0xff] %v2126
        %3505 = vst [vmem:[%s258 + $0x958] sm:$0xff] %v2128
        %3506 = vst [vmem:[%s258 + $0x960] sm:$0xff] %v2559
        %3507 = vst [vmem:[%s258 + $0x968] sm:$0xff] %v2561
        %3508 = vst [vmem:[%s258 + $0x970] sm:$0xff] %v2992
        %3509 = vst [vmem:[%s258 + $0x978] sm:$0xff] %v2994
        %3510 = vst [vmem:[%s258 + $0x980] sm:$0xff] %v1699
        %3511 = vst [vmem:[%s258 + $0x988] sm:$0xff] %v1701
        %3512 = vst [vmem:[%s258 + $0x990] sm:$0xff] %v2132
        %3513 = vst [vmem:[%s258 + $0x998] sm:$0xff] %v2134
        %3514 = vst [vmem:[%s258 + $0x9a0] sm:$0xff] %v2565
        %3515 = vst [vmem:[%s258 + $0x9a8] sm:$0xff] %v2567
        %3516 = vst [vmem:[%s258 + $0x9b0] sm:$0xff] %v2998
        %3517 = vst [vmem:[%s258 + $0x9b8] sm:$0xff] %v3000
        %3518 = vst [vmem:[%s258 + $0x9c0] sm:$0xff] %v1703
        %3519 = vst [vmem:[%s258 + $0x9c8] sm:$0xff] %v1705
        %3520 = vst [vmem:[%s258 + $0x9d0] sm:$0xff] %v2136
        %3521 = vst [vmem:[%s258 + $0x9d8] sm:$0xff] %v2138
        %3522 = vst [vmem:[%s258 + $0x9e0] sm:$0xff] %v2569
        %3523 = vst [vmem:[%s258 + $0x9e8] sm:$0xff] %v2571
        %3524 = vst [vmem:[%s258 + $0x9f0] sm:$0xff] %v3002
        %3525 = vst [vmem:[%s258 + $0x9f8] sm:$0xff] %v3004
        %3526 = vst [vmem:[%s258 + $0xa00] sm:$0xff] %v1709
        %3527 = vst [vmem:[%s258 + $0xa08] sm:$0xff] %v1711
        %3528 = vst [vmem:[%s258 + $0xa10] sm:$0xff] %v2142
        %3529 = vst [vmem:[%s258 + $0xa18] sm:$0xff] %v2144
        %3530 = vst [vmem:[%s258 + $0xa20] sm:$0xff] %v2575
        %3531 = vst [vmem:[%s258 + $0xa28] sm:$0xff] %v2577
        %3532 = vst [vmem:[%s258 + $0xa30] sm:$0xff] %v3008
        %3533 = vst [vmem:[%s258 + $0xa38] sm:$0xff] %v3010
        %3534 = vst [vmem:[%s258 + $0xa40] sm:$0xff] %v1713
        %3535 = vst [vmem:[%s258 + $0xa48] sm:$0xff] %v1715
        %3536 = vst [vmem:[%s258 + $0xa50] sm:$0xff] %v2146
        %3537 = vst [vmem:[%s258 + $0xa58] sm:$0xff] %v2148
        %3538 = vst [vmem:[%s258 + $0xa60] sm:$0xff] %v2579
        %3539 = vst [vmem:[%s258 + $0xa68] sm:$0xff] %v2581
        %3540 = vst [vmem:[%s258 + $0xa70] sm:$0xff] %v3012
        %3541 = vst [vmem:[%s258 + $0xa78] sm:$0xff] %v3014
        %3542 = vst [vmem:[%s258 + $0xa80] sm:$0xff] %v1719
        %3543 = vst [vmem:[%s258 + $0xa88] sm:$0xff] %v1721
        %3544 = vst [vmem:[%s258 + $0xa90] sm:$0xff] %v2152
        %3545 = vst [vmem:[%s258 + $0xa98] sm:$0xff] %v2154
        %3546 = vst [vmem:[%s258 + $0xaa0] sm:$0xff] %v2585
        %3547 = vst [vmem:[%s258 + $0xaa8] sm:$0xff] %v2587
        %3548 = vst [vmem:[%s258 + $0xab0] sm:$0xff] %v3018
        %3549 = vst [vmem:[%s258 + $0xab8] sm:$0xff] %v3020
        %3550 = vst [vmem:[%s258 + $0xac0] sm:$0xff] %v1723
        %3551 = vst [vmem:[%s258 + $0xac8] sm:$0xff] %v1725
        %3552 = vst [vmem:[%s258 + $0xad0] sm:$0xff] %v2156
        %3553 = vst [vmem:[%s258 + $0xad8] sm:$0xff] %v2158
        %3554 = vst [vmem:[%s258 + $0xae0] sm:$0xff] %v2589
        %3555 = vst [vmem:[%s258 + $0xae8] sm:$0xff] %v2591
        %3556 = vst [vmem:[%s258 + $0xaf0] sm:$0xff] %v3022
        %3557 = vst [vmem:[%s258 + $0xaf8] sm:$0xff] %v3024
        %3558 = vst [vmem:[%s258 + $0xb00] sm:$0xff] %v1729
        %3559 = vst [vmem:[%s258 + $0xb08] sm:$0xff] %v1731
        %3560 = vst [vmem:[%s258 + $0xb10] sm:$0xff] %v2162
        %3561 = vst [vmem:[%s258 + $0xb18] sm:$0xff] %v2164
        %3562 = vst [vmem:[%s258 + $0xb20] sm:$0xff] %v2595
        %3563 = vst [vmem:[%s258 + $0xb28] sm:$0xff] %v2597
        %3564 = vst [vmem:[%s258 + $0xb30] sm:$0xff] %v3028
        %3565 = vst [vmem:[%s258 + $0xb38] sm:$0xff] %v3030
        %3566 = vst [vmem:[%s258 + $0xb40] sm:$0xff] %v1733
        %3567 = vst [vmem:[%s258 + $0xb48] sm:$0xff] %v1735
        %3568 = vst [vmem:[%s258 + $0xb50] sm:$0xff] %v2166
        %3569 = vst [vmem:[%s258 + $0xb58] sm:$0xff] %v2168
        %3570 = vst [vmem:[%s258 + $0xb60] sm:$0xff] %v2599
        %3571 = vst [vmem:[%s258 + $0xb68] sm:$0xff] %v2601
        %3572 = vst [vmem:[%s258 + $0xb70] sm:$0xff] %v3032
        %3573 = vst [vmem:[%s258 + $0xb78] sm:$0xff] %v3034
        %3574 = vst [vmem:[%s258 + $0xb80] sm:$0xff] %v1739
        %3575 = vst [vmem:[%s258 + $0xb88] sm:$0xff] %v1741
        %3576 = vst [vmem:[%s258 + $0xb90] sm:$0xff] %v2172
        %3577 = vst [vmem:[%s258 + $0xb98] sm:$0xff] %v2174
        %3578 = vst [vmem:[%s258 + $0xba0] sm:$0xff] %v2605
        %3579 = vst [vmem:[%s258 + $0xba8] sm:$0xff] %v2607
        %3580 = vst [vmem:[%s258 + $0xbb0] sm:$0xff] %v3038
        %3581 = vst [vmem:[%s258 + $0xbb8] sm:$0xff] %v3040
        %3582 = vst [vmem:[%s258 + $0xbc0] sm:$0xff] %v1743
        %3583 = vst [vmem:[%s258 + $0xbc8] sm:$0xff] %v1745
        %3584 = vst [vmem:[%s258 + $0xbd0] sm:$0xff] %v2176
        %3585 = vst [vmem:[%s258 + $0xbd8] sm:$0xff] %v2178
        %3586 = vst [vmem:[%s258 + $0xbe0] sm:$0xff] %v2609
        %3587 = vst [vmem:[%s258 + $0xbe8] sm:$0xff] %v2611
        %3588 = vst [vmem:[%s258 + $0xbf0] sm:$0xff] %v3042
        %3589 = vst [vmem:[%s258 + $0xbf8] sm:$0xff] %v3044
        %3590 = vst [vmem:[%s258 + $0xc00] sm:$0xff] %v1749
        %3591 = vst [vmem:[%s258 + $0xc08] sm:$0xff] %v1751
        %3592 = vst [vmem:[%s258 + $0xc10] sm:$0xff] %v2182
        %3593 = vst [vmem:[%s258 + $0xc18] sm:$0xff] %v2184
        %3594 = vst [vmem:[%s258 + $0xc20] sm:$0xff] %v2615
        %3595 = vst [vmem:[%s258 + $0xc28] sm:$0xff] %v2617
        %3596 = vst [vmem:[%s258 + $0xc30] sm:$0xff] %v3048
        %3597 = vst [vmem:[%s258 + $0xc38] sm:$0xff] %v3050
        %3598 = vst [vmem:[%s258 + $0xc40] sm:$0xff] %v1753
        %3599 = vst [vmem:[%s258 + $0xc48] sm:$0xff] %v1755
        %3600 = vst [vmem:[%s258 + $0xc50] sm:$0xff] %v2186
        %3601 = vst [vmem:[%s258 + $0xc58] sm:$0xff] %v2188
        %3602 = vst [vmem:[%s258 + $0xc60] sm:$0xff] %v2619
        %3603 = vst [vmem:[%s258 + $0xc68] sm:$0xff] %v2621
        %3604 = vst [vmem:[%s258 + $0xc70] sm:$0xff] %v3052
        %3605 = vst [vmem:[%s258 + $0xc78] sm:$0xff] %v3054
        %3606 = vst [vmem:[%s258 + $0xc80] sm:$0xff] %v1759
        %3607 = vst [vmem:[%s258 + $0xc88] sm:$0xff] %v1761
        %3608 = vst [vmem:[%s258 + $0xc90] sm:$0xff] %v2192
        %3609 = vst [vmem:[%s258 + $0xc98] sm:$0xff] %v2194
        %3610 = vst [vmem:[%s258 + $0xca0] sm:$0xff] %v2625
        %3611 = vst [vmem:[%s258 + $0xca8] sm:$0xff] %v2627
        %3612 = vst [vmem:[%s258 + $0xcb0] sm:$0xff] %v3058
        %3613 = vst [vmem:[%s258 + $0xcb8] sm:$0xff] %v3060
        %3614 = vst [vmem:[%s258 + $0xcc0] sm:$0xff] %v1763
        %3615 = vst [vmem:[%s258 + $0xcc8] sm:$0xff] %v1765
        %3616 = vst [vmem:[%s258 + $0xcd0] sm:$0xff] %v2196
        %3617 = vst [vmem:[%s258 + $0xcd8] sm:$0xff] %v2198
        %3618 = vst [vmem:[%s258 + $0xce0] sm:$0xff] %v2629
        %3619 = vst [vmem:[%s258 + $0xce8] sm:$0xff] %v2631
        %3620 = vst [vmem:[%s258 + $0xcf0] sm:$0xff] %v3062
        %3621 = vst [vmem:[%s258 + $0xcf8] sm:$0xff] %v3064
        %3622 = vst [vmem:[%s258 + $0xd00] sm:$0xff] %v1769
        %3623 = vst [vmem:[%s258 + $0xd08] sm:$0xff] %v1771
        %3624 = vst [vmem:[%s258 + $0xd10] sm:$0xff] %v2202
        %3625 = vst [vmem:[%s258 + $0xd18] sm:$0xff] %v2204
        %3626 = vst [vmem:[%s258 + $0xd20] sm:$0xff] %v2635
        %3627 = vst [vmem:[%s258 + $0xd28] sm:$0xff] %v2637
        %3628 = vst [vmem:[%s258 + $0xd30] sm:$0xff] %v3068
        %3629 = vst [vmem:[%s258 + $0xd38] sm:$0xff] %v3070
        %3630 = vst [vmem:[%s258 + $0xd40] sm:$0xff] %v1773
        %3631 = vst [vmem:[%s258 + $0xd48] sm:$0xff] %v1775
        %3632 = vst [vmem:[%s258 + $0xd50] sm:$0xff] %v2206
        %3633 = vst [vmem:[%s258 + $0xd58] sm:$0xff] %v2208
        %3634 = vst [vmem:[%s258 + $0xd60] sm:$0xff] %v2639
        %3635 = vst [vmem:[%s258 + $0xd68] sm:$0xff] %v2641
        %3636 = vst [vmem:[%s258 + $0xd70] sm:$0xff] %v3072
        %3637 = vst [vmem:[%s258 + $0xd78] sm:$0xff] %v3074
        %3638 = vst [vmem:[%s258 + $0xd80] sm:$0xff] %v1779
        %3639 = vst [vmem:[%s258 + $0xd88] sm:$0xff] %v1781
        %3640 = vst [vmem:[%s258 + $0xd90] sm:$0xff] %v2212
        %3641 = vst [vmem:[%s258 + $0xd98] sm:$0xff] %v2214
        %3642 = vst [vmem:[%s258 + $0xda0] sm:$0xff] %v2645
        %3643 = vst [vmem:[%s258 + $0xda8] sm:$0xff] %v2647
        %3644 = vst [vmem:[%s258 + $0xdb0] sm:$0xff] %v3078
        %3645 = vst [vmem:[%s258 + $0xdb8] sm:$0xff] %v3080
        %3646 = vst [vmem:[%s258 + $0xdc0] sm:$0xff] %v1783
        %3647 = vst [vmem:[%s258 + $0xdc8] sm:$0xff] %v1785
        %3648 = vst [vmem:[%s258 + $0xdd0] sm:$0xff] %v2216
        %3649 = vst [vmem:[%s258 + $0xdd8] sm:$0xff] %v2218
        %3650 = vst [vmem:[%s258 + $0xde0] sm:$0xff] %v2649
        %3651 = vst [vmem:[%s258 + $0xde8] sm:$0xff] %v2651
        %3652 = vst [vmem:[%s258 + $0xdf0] sm:$0xff] %v3082
        %3653 = vst [vmem:[%s258 + $0xdf8] sm:$0xff] %v3084
        %3654 = vst [vmem:[%s258 + $0xe00] sm:$0xff] %v1789
        %3655 = vst [vmem:[%s258 + $0xe08] sm:$0xff] %v1791
        %3656 = vst [vmem:[%s258 + $0xe10] sm:$0xff] %v2222
        %3657 = vst [vmem:[%s258 + $0xe18] sm:$0xff] %v2224
        %3658 = vst [vmem:[%s258 + $0xe20] sm:$0xff] %v2655
        %3659 = vst [vmem:[%s258 + $0xe28] sm:$0xff] %v2657
        %3660 = vst [vmem:[%s258 + $0xe30] sm:$0xff] %v3088
        %3661 = vst [vmem:[%s258 + $0xe38] sm:$0xff] %v3090
        %3662 = vst [vmem:[%s258 + $0xe40] sm:$0xff] %v1793
        %3663 = vst [vmem:[%s258 + $0xe48] sm:$0xff] %v1795
        %3664 = vst [vmem:[%s258 + $0xe50] sm:$0xff] %v2226
        %3665 = vst [vmem:[%s258 + $0xe58] sm:$0xff] %v2228
        %3666 = vst [vmem:[%s258 + $0xe60] sm:$0xff] %v2659
        %3667 = vst [vmem:[%s258 + $0xe68] sm:$0xff] %v2661
        %3668 = vst [vmem:[%s258 + $0xe70] sm:$0xff] %v3092
        %3669 = vst [vmem:[%s258 + $0xe78] sm:$0xff] %v3094
        %3670 = vst [vmem:[%s258 + $0xe80] sm:$0xff] %v1799
        %3671 = vst [vmem:[%s258 + $0xe88] sm:$0xff] %v1801
        %3672 = vst [vmem:[%s258 + $0xe90] sm:$0xff] %v2232
        %3673 = vst [vmem:[%s258 + $0xe98] sm:$0xff] %v2234
        %3674 = vst [vmem:[%s258 + $0xea0] sm:$0xff] %v2665
        %3675 = vst [vmem:[%s258 + $0xea8] sm:$0xff] %v2667
        %3676 = vst [vmem:[%s258 + $0xeb0] sm:$0xff] %v3098
        %3677 = vst [vmem:[%s258 + $0xeb8] sm:$0xff] %v3100
        %3678 = vst [vmem:[%s258 + $0xec0] sm:$0xff] %v1803
        %3679 = vst [vmem:[%s258 + $0xec8] sm:$0xff] %v1805
        %3680 = vst [vmem:[%s258 + $0xed0] sm:$0xff] %v2236
        %3681 = vst [vmem:[%s258 + $0xed8] sm:$0xff] %v2238
        %3682 = vst [vmem:[%s258 + $0xee0] sm:$0xff] %v2669
        %3683 = vst [vmem:[%s258 + $0xee8] sm:$0xff] %v2671
        %3684 = vst [vmem:[%s258 + $0xef0] sm:$0xff] %v3102
        %3685 = vst [vmem:[%s258 + $0xef8] sm:$0xff] %v3104
        %3686 = vst [vmem:[%s258 + $0xf00] sm:$0xff] %v1809
        %3687 = vst [vmem:[%s258 + $0xf08] sm:$0xff] %v1811
        %3688 = vst [vmem:[%s258 + $0xf10] sm:$0xff] %v2242
        %3689 = vst [vmem:[%s258 + $0xf18] sm:$0xff] %v2244
        %3690 = vst [vmem:[%s258 + $0xf20] sm:$0xff] %v2675
        %3691 = vst [vmem:[%s258 + $0xf28] sm:$0xff] %v2677
        %3692 = vst [vmem:[%s258 + $0xf30] sm:$0xff] %v3108
        %3693 = vst [vmem:[%s258 + $0xf38] sm:$0xff] %v3110
        %3694 = vst [vmem:[%s258 + $0xf40] sm:$0xff] %v1813
        %3695 = vst [vmem:[%s258 + $0xf48] sm:$0xff] %v1815
        %3696 = vst [vmem:[%s258 + $0xf50] sm:$0xff] %v2246
        %3697 = vst [vmem:[%s258 + $0xf58] sm:$0xff] %v2248
        %3698 = vst [vmem:[%s258 + $0xf60] sm:$0xff] %v2679
        %3699 = vst [vmem:[%s258 + $0xf68] sm:$0xff] %v2681
        %3700 = vst [vmem:[%s258 + $0xf70] sm:$0xff] %v3112
        %3701 = vst [vmem:[%s258 + $0xf78] sm:$0xff] %v3114
        %3702 = vst [vmem:[%s258 + $0xf80] sm:$0xff] %v1819
        %3703 = vst [vmem:[%s258 + $0xf88] sm:$0xff] %v1821
        %3704 = vst [vmem:[%s258 + $0xf90] sm:$0xff] %v2252
        %3705 = vst [vmem:[%s258 + $0xf98] sm:$0xff] %v2254
        %3706 = vst [vmem:[%s258 + $0xfa0] sm:$0xff] %v2685
        %3707 = vst [vmem:[%s258 + $0xfa8] sm:$0xff] %v2687
        %3708 = vst [vmem:[%s258 + $0xfb0] sm:$0xff] %v3118
        %3709 = vst [vmem:[%s258 + $0xfb8] sm:$0xff] %v3120
        %3710 = vst [vmem:[%s258 + $0xfc0] sm:$0xff] %v1823
        %3711 = vst [vmem:[%s258 + $0xfc8] sm:$0xff] %v1825
        %3712 = vst [vmem:[%s258 + $0xfd0] sm:$0xff] %v2256
        %3713 = vst [vmem:[%s258 + $0xfd8] sm:$0xff] %v2258
        %3714 = vst [vmem:[%s258 + $0xfe0] sm:$0xff] %v2689
        %3715 = vst [vmem:[%s258 + $0xfe8] sm:$0xff] %v2691
        %3716 = vst [vmem:[%s258 + $0xff0] sm:$0xff] %v3122
        %3717 = vst [vmem:[%s258 + $0xff8] sm:$0xff] %v3124
        %3718 = vst [vmem:[%s258 + $0x1000] sm:$0xff] %v1829
        %3719 = vst [vmem:[%s258 + $0x1008] sm:$0xff] %v1831
        %3720 = vst [vmem:[%s258 + $0x1010] sm:$0xff] %v2262
        %3721 = vst [vmem:[%s258 + $0x1018] sm:$0xff] %v2264
        %3722 = vst [vmem:[%s258 + $0x1020] sm:$0xff] %v2695
        %3723 = vst [vmem:[%s258 + $0x1028] sm:$0xff] %v2697
        %3724 = vst [vmem:[%s258 + $0x1030] sm:$0xff] %v3128
        %3725 = vst [vmem:[%s258 + $0x1038] sm:$0xff] %v3130
        %3726 = vst [vmem:[%s258 + $0x1040] sm:$0xff] %v1833
        %3727 = vst [vmem:[%s258 + $0x1048] sm:$0xff] %v1835
        %3728 = vst [vmem:[%s258 + $0x1050] sm:$0xff] %v2266
        %3729 = vst [vmem:[%s258 + $0x1058] sm:$0xff] %v2268
        %3730 = vst [vmem:[%s258 + $0x1060] sm:$0xff] %v2699
        %3731 = vst [vmem:[%s258 + $0x1068] sm:$0xff] %v2701
        %3732 = vst [vmem:[%s258 + $0x1070] sm:$0xff] %v3132
        %3733 = vst [vmem:[%s258 + $0x1078] sm:$0xff] %v3134
        %3734 = vst [vmem:[%s258 + $0x1080] sm:$0xff] %v1839
        %3735 = vst [vmem:[%s258 + $0x1088] sm:$0xff] %v1841
        %3736 = vst [vmem:[%s258 + $0x1090] sm:$0xff] %v2272
        %3737 = vst [vmem:[%s258 + $0x1098] sm:$0xff] %v2274
        %3738 = vst [vmem:[%s258 + $0x10a0] sm:$0xff] %v2705
        %3739 = vst [vmem:[%s258 + $0x10a8] sm:$0xff] %v2707
        %3740 = vst [vmem:[%s258 + $0x10b0] sm:$0xff] %v3138
        %3741 = vst [vmem:[%s258 + $0x10b8] sm:$0xff] %v3140
        %3742 = vst [vmem:[%s258 + $0x10c0] sm:$0xff] %v1843
        %3743 = vst [vmem:[%s258 + $0x10c8] sm:$0xff] %v1845
        %3744 = vst [vmem:[%s258 + $0x10d0] sm:$0xff] %v2276
        %3745 = vst [vmem:[%s258 + $0x10d8] sm:$0xff] %v2278
        %3746 = vst [vmem:[%s258 + $0x10e0] sm:$0xff] %v2709
        %3747 = vst [vmem:[%s258 + $0x10e8] sm:$0xff] %v2711
        %3748 = vst [vmem:[%s258 + $0x10f0] sm:$0xff] %v3142
        %3749 = vst [vmem:[%s258 + $0x10f8] sm:$0xff] %v3144
        %3750 = vst [vmem:[%s258 + $0x1100] sm:$0xff] %v1849
        %3751 = vst [vmem:[%s258 + $0x1108] sm:$0xff] %v1851
        %3752 = vst [vmem:[%s258 + $0x1110] sm:$0xff] %v2282
        %3753 = vst [vmem:[%s258 + $0x1118] sm:$0xff] %v2284
        %3754 = vst [vmem:[%s258 + $0x1120] sm:$0xff] %v2715
        %3755 = vst [vmem:[%s258 + $0x1128] sm:$0xff] %v2717
        %3756 = vst [vmem:[%s258 + $0x1130] sm:$0xff] %v3148
        %3757 = vst [vmem:[%s258 + $0x1138] sm:$0xff] %v3150
        %3758 = vst [vmem:[%s258 + $0x1140] sm:$0xff] %v1853
        %3759 = vst [vmem:[%s258 + $0x1148] sm:$0xff] %v1855
        %3760 = vst [vmem:[%s258 + $0x1150] sm:$0xff] %v2286
        %3761 = vst [vmem:[%s258 + $0x1158] sm:$0xff] %v2288
        %3762 = vst [vmem:[%s258 + $0x1160] sm:$0xff] %v2719
        %3763 = vst [vmem:[%s258 + $0x1168] sm:$0xff] %v2721
        %3764 = vst [vmem:[%s258 + $0x1170] sm:$0xff] %v3152
        %3765 = vst [vmem:[%s258 + $0x1178] sm:$0xff] %v3154
        %3766 = vst [vmem:[%s258 + $0x1180] sm:$0xff] %v1859
        %3767 = vst [vmem:[%s258 + $0x1188] sm:$0xff] %v1861
        %3768 = vst [vmem:[%s258 + $0x1190] sm:$0xff] %v2292
        %3769 = vst [vmem:[%s258 + $0x1198] sm:$0xff] %v2294
        %3770 = vst [vmem:[%s258 + $0x11a0] sm:$0xff] %v2725
        %3771 = vst [vmem:[%s258 + $0x11a8] sm:$0xff] %v2727
        %3772 = vst [vmem:[%s258 + $0x11b0] sm:$0xff] %v3158
        %3773 = vst [vmem:[%s258 + $0x11b8] sm:$0xff] %v3160
        %3774 = vst [vmem:[%s258 + $0x11c0] sm:$0xff] %v1863
        %3775 = vst [vmem:[%s258 + $0x11c8] sm:$0xff] %v1865
        %3776 = vst [vmem:[%s258 + $0x11d0] sm:$0xff] %v2296
        %3777 = vst [vmem:[%s258 + $0x11d8] sm:$0xff] %v2298
        %3778 = vst [vmem:[%s258 + $0x11e0] sm:$0xff] %v2729
        %3779 = vst [vmem:[%s258 + $0x11e8] sm:$0xff] %v2731
        %3780 = vst [vmem:[%s258 + $0x11f0] sm:$0xff] %v3162
        %3781 = vst [vmem:[%s258 + $0x11f8] sm:$0xff] %v3164
        %3782 = vst [vmem:[%s258 + $0x1200] sm:$0xff] %v1869
        %3783 = vst [vmem:[%s258 + $0x1208] sm:$0xff] %v1871
        %3784 = vst [vmem:[%s258 + $0x1210] sm:$0xff] %v2302
        %3785 = vst [vmem:[%s258 + $0x1218] sm:$0xff] %v2304
        %3786 = vst [vmem:[%s258 + $0x1220] sm:$0xff] %v2735
        %3787 = vst [vmem:[%s258 + $0x1228] sm:$0xff] %v2737
        %3788 = vst [vmem:[%s258 + $0x1230] sm:$0xff] %v3168
        %3789 = vst [vmem:[%s258 + $0x1238] sm:$0xff] %v3170
        %3790 = vst [vmem:[%s258 + $0x1240] sm:$0xff] %v1873
        %3791 = vst [vmem:[%s258 + $0x1248] sm:$0xff] %v1875
        %3792 = vst [vmem:[%s258 + $0x1250] sm:$0xff] %v2306
        %3793 = vst [vmem:[%s258 + $0x1258] sm:$0xff] %v2308
        %3794 = vst [vmem:[%s258 + $0x1260] sm:$0xff] %v2739
        %3795 = vst [vmem:[%s258 + $0x1268] sm:$0xff] %v2741
        %3796 = vst [vmem:[%s258 + $0x1270] sm:$0xff] %v3172
        %3797 = vst [vmem:[%s258 + $0x1278] sm:$0xff] %v3174
        %3798 = vst [vmem:[%s258 + $0x1280] sm:$0xff] %v1879
        %3799 = vst [vmem:[%s258 + $0x1288] sm:$0xff] %v1881
        %3800 = vst [vmem:[%s258 + $0x1290] sm:$0xff] %v2312
        %3801 = vst [vmem:[%s258 + $0x1298] sm:$0xff] %v2314
        %3802 = vst [vmem:[%s258 + $0x12a0] sm:$0xff] %v2745
        %3803 = vst [vmem:[%s258 + $0x12a8] sm:$0xff] %v2747
        %3804 = vst [vmem:[%s258 + $0x12b0] sm:$0xff] %v3178
        %3805 = vst [vmem:[%s258 + $0x12b8] sm:$0xff] %v3180
        %3806 = vst [vmem:[%s258 + $0x12c0] sm:$0xff] %v1883
        %3807 = vst [vmem:[%s258 + $0x12c8] sm:$0xff] %v1885
        %3808 = vst [vmem:[%s258 + $0x12d0] sm:$0xff] %v2316
        %3809 = vst [vmem:[%s258 + $0x12d8] sm:$0xff] %v2318
        %3810 = vst [vmem:[%s258 + $0x12e0] sm:$0xff] %v2749
        %3811 = vst [vmem:[%s258 + $0x12e8] sm:$0xff] %v2751
        %3812 = vst [vmem:[%s258 + $0x12f0] sm:$0xff] %v3182
        %3813 = vst [vmem:[%s258 + $0x12f8] sm:$0xff] %v3184
        %3814 = vst [vmem:[%s258 + $0x1300] sm:$0xff] %v1889
        %3815 = vst [vmem:[%s258 + $0x1308] sm:$0xff] %v1891
        %3816 = vst [vmem:[%s258 + $0x1310] sm:$0xff] %v2322
        %3817 = vst [vmem:[%s258 + $0x1318] sm:$0xff] %v2324
        %3818 = vst [vmem:[%s258 + $0x1320] sm:$0xff] %v2755
        %3819 = vst [vmem:[%s258 + $0x1328] sm:$0xff] %v2757
        %3820 = vst [vmem:[%s258 + $0x1330] sm:$0xff] %v3188
        %3821 = vst [vmem:[%s258 + $0x1338] sm:$0xff] %v3190
        %3822 = vst [vmem:[%s258 + $0x1340] sm:$0xff] %v1893
        %3823 = vst [vmem:[%s258 + $0x1348] sm:$0xff] %v1895
        %3824 = vst [vmem:[%s258 + $0x1350] sm:$0xff] %v2326
        %3825 = vst [vmem:[%s258 + $0x1358] sm:$0xff] %v2328
        %3826 = vst [vmem:[%s258 + $0x1360] sm:$0xff] %v2759
        %3827 = vst [vmem:[%s258 + $0x1368] sm:$0xff] %v2761
        %3828 = vst [vmem:[%s258 + $0x1370] sm:$0xff] %v3192
        %3829 = vst [vmem:[%s258 + $0x1378] sm:$0xff] %v3194
        %3830 = vst [vmem:[%s258 + $0x1380] sm:$0xff] %v1899
        %3831 = vst [vmem:[%s258 + $0x1388] sm:$0xff] %v1901
        %3832 = vst [vmem:[%s258 + $0x1390] sm:$0xff] %v2332
        %3833 = vst [vmem:[%s258 + $0x1398] sm:$0xff] %v2334
        %3834 = vst [vmem:[%s258 + $0x13a0] sm:$0xff] %v2765
        %3835 = vst [vmem:[%s258 + $0x13a8] sm:$0xff] %v2767
        %3836 = vst [vmem:[%s258 + $0x13b0] sm:$0xff] %v3198
        %3837 = vst [vmem:[%s258 + $0x13b8] sm:$0xff] %v3200
        %3838 = vst [vmem:[%s258 + $0x13c0] sm:$0xff] %v1903
        %3839 = vst [vmem:[%s258 + $0x13c8] sm:$0xff] %v1905
        %3840 = vst [vmem:[%s258 + $0x13d0] sm:$0xff] %v2336
        %3841 = vst [vmem:[%s258 + $0x13d8] sm:$0xff] %v2338
        %3842 = vst [vmem:[%s258 + $0x13e0] sm:$0xff] %v2769
        %3843 = vst [vmem:[%s258 + $0x13e8] sm:$0xff] %v2771
        %3844 = vst [vmem:[%s258 + $0x13f0] sm:$0xff] %v3202
        %3845 = vst [vmem:[%s258 + $0x13f8] sm:$0xff] %v3204
        %s3846 = sand.u32 %s132, 1
        %s3847 = scalar_lea.sflag [#allocation4], %s3846
        %s3848 = sand.u32 %s132, 1
        %s3849 = smul.addr %s3848, 5120
        %s3850 = scalar_lea.vmem [#allocation8], %s3849
        // Predicated region
        $region45: #{tpu_custom_call.1} parent=31 // pred_check
          %p3851 = pneg %p142
        $region46: #{tpu_custom_call.1} parent=31 // pred_check_branch
          %3853 = sbr.rel (%p3851) target = $region48
        $region47: #{tpu_custom_call.1} parent=31 // pred_region
          %s3854 = smul.u32 80, %s28
          %s3855 = smul.u32 8, %s26
          %s3857 = ssub.s32 81920, 81920
          %3858 = vsyncadd %s3847, %s3857
          %s3859 = smul.addr %s3854, 8
          %s3860 = sadd.s32 %s3855, %s3859
          %s3861 = smul.addr %s27, 640
          %s3862 = sadd.s32 %s3860, %s3861
          %s3863 = smul.addr %s3862, 128
          %s3864 = scalar_lea.hbm %s3, %s3863
          %s3865 = sshll.u32 %s3850, 4
          %s3866 = int_to_ptr.vmem [resolvable:$true] %s3865
          %3871 = dma.vmem_to_hbm [thread:$0]  %s3866, 81920, %s3864, %s3847, 1024, 1024, 64
        $region48: #{tpu_custom_call.1} parent=31 // pred_fallthru
          _
      $region32: #{tpu_custom_call.1} parent=5 // pred_fallthru
        _
      %p3872 = scmp.le.s32.totalorder 2, %s16
      // Predicated region
      $region49: #{tpu_custom_call.1} parent=5 // pred_check
        %p3873 = pneg %p3872
      $region50: #{tpu_custom_call.1} parent=5 // pred_check_branch
        %3875 = sbr.rel (%p3873) target = $region52
      $region51: #{tpu_custom_call.1} parent=5 // pred_region
        %s3876 = ssub.s32 %s16, 2
        // Predicated region
        $region53: #{tpu_custom_call.1} parent=51 // pred_check
          %p3877 = pneg %p148
        $region54: #{tpu_custom_call.1} parent=51 // pred_check_branch
          %3879 = sbr.rel (%p3877) target = $region56
        $region55: #{tpu_custom_call.1} parent=51 // pred_region
          %s3880 = sand.u32 %s133, 1
          %s3881 = scalar_lea.sflag [#allocation4], %s3880
          %s3882 = sand.u32 %s133, 1
          %s3883 = smul.addr %s3882, 5120
          %s3884 = scalar_lea.vmem [#allocation8], %s3883
          %3885 = dma.done %s3881, 81920
        $region56: #{tpu_custom_call.1} parent=51 // pred_fallthru
          _
      $region52: #{tpu_custom_call.1} parent=5 // pred_fallthru
        _
    $region6: #{tpu_custom_call.1} parent=1 // loop_footer
      %s20 = sadd.s32 1, %s16
    $region7: #{tpu_custom_call.1} parent=1 // loop_footer_branch
      %15 = sbr.rel target = $region3
    $region8: #{tpu_custom_call.1} parent=1 // loop_exit
      _
    %3886 = vsyncpa [#allocation3], 1
    %s3887 = scalar_lea.sflag [#allocation3], 1
    %3888 = vsyncpa %s3887, 1
    %3889 = vsyncpa [#allocation6], 1
    %3890 = vsyncpa [#allocation4], 1
    %s3891 = scalar_lea.sflag [#allocation4], 1
    %3892 = vsyncpa %s3891, 1

</llo_original>
